<compile_context>
chip_gen: v6e
topology: v6e:2x2x1
jax: 0.10.0
libtpu: 0.0.40
codegen_flags: <defaults>
</compile_context>

<pallas_src>
import functools

import jax
import jax.numpy as jnp
from jax.experimental import pallas as pl
from jax.experimental.pallas import tpu as pltpu

_BIG_NEG = -1e30  # effective -inf for the max-pool padding (f32-safe)


# ----------------------------------------------------------------------------
# In-kernel helpers
# ----------------------------------------------------------------------------
def _conv_taps_matmul(x_bf16, w_ref, row_stride, n_out):
    """sum_k  W_k @ x[:, off_k : off_k + n_out]   ->  (Cout, n_out) float32.

    x_bf16:  (Cin, Lpad) bf16, flattened zero-padded image (row stride = W+2).
    w_ref:   (9, Cout, Cin) bf16 ref (tap-major).
    """
    acc = None
    for kh in range(3):
        for kw in range(3):
            k = kh * 3 + kw
            off = kh * row_stride + kw
            tap = x_bf16[:, off:off + n_out]                 # (Cin, n_out)
            term = jnp.dot(w_ref[k], tap,
                           preferred_element_type=jnp.float32)
            acc = term if acc is None else acc + term
    return acc


# ----------------------------------------------------------------------------
# Pallas kernels
# ----------------------------------------------------------------------------
def _conv_pool_kernel(mask_ref, x_ref, w_ref, b_ref, o_ref, *, width):
    """3x3 conv (pad=1) + fused 3x3 window-max (pool max taps, stride handled
    outside).  Shapes (per grid step / block):
      mask_ref (1, L)  f32   1.0 at valid flat positions, 0.0 at wrap garbage
      x_ref    (1, Cin, LP)  f32   zero-padded-flat input, LP=(H+3)*(W+2)
      w_ref    (9, Cout, Cin) bf16
      b_ref    (Cout, 1) f32
      o_ref    (1, Cout, L)  f32   window-max at every top-left position,
                                   L = H*(W+2)
    """
    s = width + 2                          # flat row stride
    c_out = o_ref.shape[1]
    l_out = o_ref.shape[-1]

    x = x_ref[0].astype(jnp.bfloat16)                        # (Cin, LP)
    conv = _conv_taps_matmul(x, w_ref, s, l_out) + b_ref[...]  # (Cout, L) f32

    m = mask_ref[...]                                        # (1, L)
    # valid positions keep conv value, wrap-garbage columns become -BIG
    interior = conv * m + (1.0 - m) * _BIG_NEG

    # Re-embed into a -BIG padded flat map (1 top / 2 bottom pad rows,
    # 1 left / 1 right pad col) so pool windows can read the border.
    head = jnp.full((c_out, width + 3), _BIG_NEG, jnp.float32)
    tail = jnp.full((c_out, 2 * width + 3), _BIG_NEG, jnp.float32)
    padded = jnp.concatenate([head, interior, tail], axis=1)  # (Cout, LP)

    # 3x3 window max at every top-left position (VPU, 8 maxes).
    pm = padded[:, 0:l_out]
    for kh in range(3):
        for kw in range(3):
            if kh == 0 and kw == 0:
                continue
            off = kh * s + kw
            pm = jnp.maximum(pm, padded[:, off:off + l_out])
    o_ref[0] = pm


def _res_block_kernel(mask_ref, x_ref, w0_ref, b0_ref, w1_ref, b1_ref, o_ref,
                      *, width):
    """Fused residual block:  y = conv1(relu(conv0(relu(x)))) + x.
    Input and output are both in zero-padded-flat layout (C, LP) so blocks
    chain with no XLA glue; the intermediate never touches HBM."""
    s = width + 2
    c = o_ref.shape[1]
    lp = o_ref.shape[-1]
    l = mask_ref.shape[-1]

    x = x_ref[0]                                             # (C, LP) f32
    m = mask_ref[...]                                        # (1, L)

    def embed_padded(v):                                     # (C, L) -> (C, LP)
        head = jnp.zeros((c, width + 3), jnp.float32)
        tail = jnp.zeros((c, 2 * width + 3), jnp.float32)
        return jnp.concatenate([head, v, tail], axis=1)

    # conv0(relu(x)) ; relu applied once to the whole padded tile.
    xr = jnp.maximum(x, 0.0).astype(jnp.bfloat16)
    h = _conv_taps_matmul(xr, w0_ref, s, l) + b0_ref[...]    # (C, L) f32
    h = h * m                                                # zero wrap garbage
    hp = embed_padded(h)                                     # zero-padded-flat

    # conv1(relu(h)) + residual (all epilogue math in f32).
    hr = jnp.maximum(hp, 0.0).astype(jnp.bfloat16)
    y = _conv_taps_matmul(hr, w1_ref, s, l) + b1_ref[...]
    y = y + x[:, width + 3:width + 3 + l]                    # residual add
    y = y * m
    o_ref[0] = embed_padded(y)


# ----------------------------------------------------------------------------
# XLA-side glue + pallas_call wrappers
# ----------------------------------------------------------------------------
def _flat_pad_nchw(x_nchw):
    """(N, C, H, W) -> (N, C, (H+3)*(W+2)) zero-padded-flat (free reshape)."""
    n, c, h, w = x_nchw.shape
    xp = jnp.pad(x_nchw, ((0, 0), (0, 0), (1, 2), (1, 1)))
    return xp.reshape(n, c, (h + 3) * (w + 2))


def _valid_mask(h, w):
    """(1, H*(W+2)) float mask: 1.0 at real output columns, 0.0 at the two
    wrap-around garbage columns of each flattened row."""
    q = jnp.arange(h * (w + 2), dtype=jnp.int32)
    return ((q % (w + 2)) < w).astype(jnp.float32)[None, :]


def _tap_major_weights(w_hwio):
    """(3,3,Cin,Cout) HWIO -> (9, Cout, Cin) bf16 (tap-major, lhs of the dot)."""
    kh, kw, cin, cout = w_hwio.shape
    return jnp.transpose(w_hwio, (0, 1, 3, 2)).reshape(kh * kw, cout,
                                                       cin).astype(jnp.bfloat16)


def conv3x3_maxpool_pallas(x_nchw, w_hwio, b):
    """conv(3x3, pad=1) -> max_pool2d(3, stride=2, pad=1), NCHW in/out."""
    n, cin, h, w = x_nchw.shape
    cout = w_hwio.shape[-1]
    l = h * (w + 2)
    lp = (h + 3) * (w + 2)
    ho, wo = (h + 1) // 2, (w + 1) // 2

    xf = _flat_pad_nchw(x_nchw)
    mask = _valid_mask(h, w)
    wk = _tap_major_weights(w_hwio)
    b2 = b.reshape(cout, 1).astype(jnp.float32)

    kernel = functools.partial(_conv_pool_kernel, width=w)
    pm = pl.pallas_call(
        kernel,
        out_shape=jax.ShapeDtypeStruct((n, cout, l), jnp.float32),
        grid=(n,),
        in_specs=[
            pl.BlockSpec((1, l), lambda i: (0, 0)),            # mask (resident)
            pl.BlockSpec((1, cin, lp), lambda i: (i, 0, 0)),   # input image
            pl.BlockSpec((9, cout, cin), lambda i: (0, 0, 0)),  # weights (resident)
            pl.BlockSpec((cout, 1), lambda i: (0, 0)),         # bias (resident)
        ],
        out_specs=pl.BlockSpec((1, cout, l), lambda i: (i, 0, 0)),
        compiler_params=pltpu.CompilerParams(
            dimension_semantics=("parallel",)),
    )(mask, xf, wk, b2)

    # Window max was computed at every top-left position inside the kernel;
    # the stride-2 subsample is a trivial XLA strided slice.
    pm4 = pm.reshape(n, cout, h, w + 2)
    pooled = pm4[:, :, 0:2 * ho:2, 0:2 * wo:2]                 # (N, Cout, Ho, Wo)
    return pooled


def residual_block_pallas(xf, mask, w0, b0, w1, b1, *, height, width):
    """One fused residual block on padded-flat activations (N, C, LP)."""
    n, c, lp = xf.shape
    l = height * (width + 2)
    w0k, w1k = _tap_major_weights(w0), _tap_major_weights(w1)
    b0r = b0.reshape(c, 1).astype(jnp.float32)
    b1r = b1.reshape(c, 1).astype(jnp.float32)

    kernel = functools.partial(_res_block_kernel, width=width)
    return pl.pallas_call(
        kernel,
        out_shape=jax.ShapeDtypeStruct((n, c, lp), jnp.float32),
        grid=(n,),
        in_specs=[
            pl.BlockSpec((1, l), lambda i: (0, 0)),
            pl.BlockSpec((1, c, lp), lambda i: (i, 0, 0)),
            pl.BlockSpec((9, c, c), lambda i: (0, 0, 0)),
            pl.BlockSpec((c, 1), lambda i: (0, 0)),
            pl.BlockSpec((9, c, c), lambda i: (0, 0, 0)),
            pl.BlockSpec((c, 1), lambda i: (0, 0)),
        ],
        out_specs=pl.BlockSpec((1, c, lp), lambda i: (i, 0, 0)),
        compiler_params=pltpu.CompilerParams(
            dimension_semantics=("parallel",)),
    )(mask, xf, w0k, b0r, w1k, b1r)


# ----------------------------------------------------------------------------
# ConvSequence forward (Pallas) and pure-JAX reference
# ----------------------------------------------------------------------------
def conv_sequence_forward(x_nchw, params):
    n, _cin, h, w = x_nchw.shape
    cout = params["conv_b"].shape[0]

    # conv -> maxpool (window max fused in-kernel, subsample in XLA)
    pooled = conv3x3_maxpool_pallas(x_nchw, params["conv_w"], params["conv_b"])
    ho, wo = pooled.shape[-2], pooled.shape[-1]

    # residual blocks: chained in padded-flat layout, one kernel per block
    xf = _flat_pad_nchw(pooled)
    mask = _valid_mask(ho, wo)
    for blk in ("res0", "res1"):
        xf = residual_block_pallas(
            xf, mask,
            params[f"{blk}_c0_w"], params[f"{blk}_c0_b"],
            params[f"{blk}_c1_w"], params[f"{blk}_c1_b"],
            height=ho, width=wo)

    # extract the interior of the padded-flat representation -> NCHW
    out = xf.reshape(n, cout, ho + 3, wo + 2)[:, :, 1:ho + 1, 1:wo + 1]
    return out


def conv_sequence_ref(x_nchw, params):
    def conv(x, w, b):
        y = jax.lax.conv_general_dilated(
            x, w, window_strides=(1, 1), padding=((1, 1), (1, 1)),
            dimension_numbers=("NCHW", "HWIO", "NCHW"))
        return y + b.reshape(1, -1, 1, 1)

    def maxpool(x):
        return jax.lax.reduce_window(
            x, -jnp.inf, jax.lax.max, (1, 1, 3, 3), (1, 1, 2, 2),
            padding=((0, 0), (0, 0), (1, 1), (1, 1)))

    x = conv(x_nchw, params["conv_w"], params["conv_b"])
    x = maxpool(x)
    for blk in ("res0", "res1"):
        inputs = x
        h = conv(jax.nn.relu(x), params[f"{blk}_c0_w"], params[f"{blk}_c0_b"])
        x = conv(jax.nn.relu(h), params[f"{blk}_c1_w"], params[f"{blk}_c1_b"]) + inputs
    return x


def init_params(key, in_channels, out_channels):
    """Deterministic Conv2d-style init. Weights kept in HWIO layout (f32)."""
    names_cin = [("conv", in_channels),
                 ("res0_c0", out_channels), ("res0_c1", out_channels),
                 ("res1_c0", out_channels), ("res1_c1", out_channels)]
    params = {}
    for name, cin in names_cin:
        key, kw, kb = jax.random.split(key, 3)
        bound = 1.0 / jnp.sqrt(cin * 9.0)
        params[f"{name}_w"] = jax.random.uniform(
            kw, (3, 3, cin, out_channels), jnp.float32, -bound, bound)
        params[f"{name}_b"] = jax.random.uniform(
            kb, (out_channels,), jnp.float32, -bound, bound)
    return params


if __name__ == "__main__":
    key = jax.random.PRNGKey(0)
    k_x, k_p = jax.random.split(key)

    N, C_IN, H, W = 2, 4, 16, 16
    OUT_CHANNELS = 8

    x = jax.random.normal(k_x, (N, C_IN, H, W), dtype=jnp.float32)
    params = init_params(k_p, C_IN, OUT_CHANNELS)

    fwd = jax.jit(conv_sequence_forward)
    out = jax.block_until_ready(fwd(x, params))

    # shape check: matches ConvSequence.get_output_shape()
    expected_shape = (N, OUT_CHANNELS, (H + 1) // 2, (W + 1) // 2)
    assert out.shape == expected_shape, (out.shape, expected_shape)

    # numerical check vs f32 XLA reference (kernels use bf16 MXU inputs with
    # f32 accumulation, so a bf16-level tolerance is used).
    ref = jax.block_until_ready(conv_sequence_ref(x, params))
    max_err = float(jnp.max(jnp.abs(out - ref)))
    assert jnp.allclose(out, ref, atol=3e-2, rtol=3e-2), max_err

    print("KERNEL_OK")
</pallas_src>

<mosaic_0001>
module attributes {stable_mosaic.version = 11 : i64} {
  func.func @_conv_pool_kernel(%arg0: i32, %arg1: memref<1x288xf32, #tpu.memory_space<vmem>>, %arg2: memref<1x4x342xf32, #tpu.memory_space<vmem>>, %arg3: memref<9x8x4xbf16, #tpu.memory_space<vmem>>, %arg4: memref<8x1xf32, #tpu.memory_space<vmem>>, %arg5: memref<1x8x288xf32, #tpu.memory_space<vmem>>) attributes {dimension_semantics = [#tpu.dimension_semantics<parallel>], iteration_bounds = array<i64: 2>, scalar_prefetch = 0 : i64, scratch_operands = 0 : i64, tpu.core_type = #tpu.core_type<tc>, window_params = [{pipeline_mode = #tpu.pipeline_mode<synchronous>, transform_indices = @transform_0, window_bounds = array<i64: 1, 288>}, {transform_indices = @transform_1, window_bounds = array<i64: 1, 4, 342>}, {pipeline_mode = #tpu.pipeline_mode<synchronous>, transform_indices = @transform_2, window_bounds = array<i64: 9, 8, 4>}, {pipeline_mode = #tpu.pipeline_mode<synchronous>, transform_indices = @transform_3, window_bounds = array<i64: 8, 1>}, {transform_indices = @transform_4, window_bounds = array<i64: 1, 8, 288>}]} {
    %c0 = arith.constant 0 : index
    %c0_0 = arith.constant 0 : index
    %c0_1 = arith.constant 0 : index
    %0 = vector.load %arg2[%c0, %c0_0, %c0_1] : memref<1x4x342xf32, #tpu.memory_space<vmem>>, vector<1x4x342xf32>
    %1 = vector.shape_cast %0 : vector<1x4x342xf32> to vector<4x342xf32>
    %2 = arith.truncf %1 : vector<4x342xf32> to vector<4x342xbf16>
    %3 = vector.extract_strided_slice %2 {offsets = [0, 0], sizes = [4, 288], strides = [1, 1]} : vector<4x342xbf16> to vector<4x288xbf16>
    %c0_2 = arith.constant 0 : index
    %c0_3 = arith.constant 0 : index
    %c0_4 = arith.constant 0 : index
    %4 = vector.load %arg3[%c0_2, %c0_3, %c0_4] : memref<9x8x4xbf16, #tpu.memory_space<vmem>>, vector<1x8x4xbf16>
    %5 = vector.shape_cast %4 : vector<1x8x4xbf16> to vector<8x4xbf16>
    %cst = arith.constant dense<0.000000e+00> : vector<8x288xf32>
    %6 = tpu.matmul %5, %3, %cst {dimension_numbers = #tpu.dot_dimension_numbers<[1], [0], [0], [1], [0, 0, 1, 1], [], []>} : vector<8x4xbf16>, vector<4x288xbf16>, vector<8x288xf32> -> vector<8x288xf32>
    %7 = vector.extract_strided_slice %2 {offsets = [0, 1], sizes = [4, 288], strides = [1, 1]} : vector<4x342xbf16> to vector<4x288xbf16>
    %c1 = arith.constant 1 : index
    %c0_5 = arith.constant 0 : index
    %c0_6 = arith.constant 0 : index
    %8 = vector.load %arg3[%c1, %c0_5, %c0_6] : memref<9x8x4xbf16, #tpu.memory_space<vmem>>, vector<1x8x4xbf16>
    %9 = vector.shape_cast %8 : vector<1x8x4xbf16> to vector<8x4xbf16>
    %cst_7 = arith.constant dense<0.000000e+00> : vector<8x288xf32>
    %10 = tpu.matmul %9, %7, %cst_7 {dimension_numbers = #tpu.dot_dimension_numbers<[1], [0], [0], [1], [0, 0, 1, 1], [], []>} : vector<8x4xbf16>, vector<4x288xbf16>, vector<8x288xf32> -> vector<8x288xf32>
    %11 = arith.addf %6, %10 : vector<8x288xf32>
    %12 = vector.extract_strided_slice %2 {offsets = [0, 2], sizes = [4, 288], strides = [1, 1]} : vector<4x342xbf16> to vector<4x288xbf16>
    %c2 = arith.constant 2 : index
    %c0_8 = arith.constant 0 : index
    %c0_9 = arith.constant 0 : index
    %13 = vector.load %arg3[%c2, %c0_8, %c0_9] : memref<9x8x4xbf16, #tpu.memory_space<vmem>>, vector<1x8x4xbf16>
    %14 = vector.shape_cast %13 : vector<1x8x4xbf16> to vector<8x4xbf16>
    %cst_10 = arith.constant dense<0.000000e+00> : vector<8x288xf32>
    %15 = tpu.matmul %14, %12, %cst_10 {dimension_numbers = #tpu.dot_dimension_numbers<[1], [0], [0], [1], [0, 0, 1, 1], [], []>} : vector<8x4xbf16>, vector<4x288xbf16>, vector<8x288xf32> -> vector<8x288xf32>
    %16 = arith.addf %11, %15 : vector<8x288xf32>
    %17 = vector.extract_strided_slice %2 {offsets = [0, 18], sizes = [4, 288], strides = [1, 1]} : vector<4x342xbf16> to vector<4x288xbf16>
    %c3 = arith.constant 3 : index
    %c0_11 = arith.constant 0 : index
    %c0_12 = arith.constant 0 : index
    %18 = vector.load %arg3[%c3, %c0_11, %c0_12] : memref<9x8x4xbf16, #tpu.memory_space<vmem>>, vector<1x8x4xbf16>
    %19 = vector.shape_cast %18 : vector<1x8x4xbf16> to vector<8x4xbf16>
    %cst_13 = arith.constant dense<0.000000e+00> : vector<8x288xf32>
    %20 = tpu.matmul %19, %17, %cst_13 {dimension_numbers = #tpu.dot_dimension_numbers<[1], [0], [0], [1], [0, 0, 1, 1], [], []>} : vector<8x4xbf16>, vector<4x288xbf16>, vector<8x288xf32> -> vector<8x288xf32>
    %21 = arith.addf %16, %20 : vector<8x288xf32>
    %22 = vector.extract_strided_slice %2 {offsets = [0, 19], sizes = [4, 288], strides = [1, 1]} : vector<4x342xbf16> to vector<4x288xbf16>
    %c4 = arith.constant 4 : index
    %c0_14 = arith.constant 0 : index
    %c0_15 = arith.constant 0 : index
    %23 = vector.load %arg3[%c4, %c0_14, %c0_15] : memref<9x8x4xbf16, #tpu.memory_space<vmem>>, vector<1x8x4xbf16>
    %24 = vector.shape_cast %23 : vector<1x8x4xbf16> to vector<8x4xbf16>
    %cst_16 = arith.constant dense<0.000000e+00> : vector<8x288xf32>
    %25 = tpu.matmul %24, %22, %cst_16 {dimension_numbers = #tpu.dot_dimension_numbers<[1], [0], [0], [1], [0, 0, 1, 1], [], []>} : vector<8x4xbf16>, vector<4x288xbf16>, vector<8x288xf32> -> vector<8x288xf32>
    %26 = arith.addf %21, %25 : vector<8x288xf32>
    %27 = vector.extract_strided_slice %2 {offsets = [0, 20], sizes = [4, 288], strides = [1, 1]} : vector<4x342xbf16> to vector<4x288xbf16>
    %c5 = arith.constant 5 : index
    %c0_17 = arith.constant 0 : index
    %c0_18 = arith.constant 0 : index
    %28 = vector.load %arg3[%c5, %c0_17, %c0_18] : memref<9x8x4xbf16, #tpu.memory_space<vmem>>, vector<1x8x4xbf16>
    %29 = vector.shape_cast %28 : vector<1x8x4xbf16> to vector<8x4xbf16>
    %cst_19 = arith.constant dense<0.000000e+00> : vector<8x288xf32>
    %30 = tpu.matmul %29, %27, %cst_19 {dimension_numbers = #tpu.dot_dimension_numbers<[1], [0], [0], [1], [0, 0, 1, 1], [], []>} : vector<8x4xbf16>, vector<4x288xbf16>, vector<8x288xf32> -> vector<8x288xf32>
    %31 = arith.addf %26, %30 : vector<8x288xf32>
    %32 = vector.extract_strided_slice %2 {offsets = [0, 36], sizes = [4, 288], strides = [1, 1]} : vector<4x342xbf16> to vector<4x288xbf16>
    %c6 = arith.constant 6 : index
    %c0_20 = arith.constant 0 : index
    %c0_21 = arith.constant 0 : index
    %33 = vector.load %arg3[%c6, %c0_20, %c0_21] : memref<9x8x4xbf16, #tpu.memory_space<vmem>>, vector<1x8x4xbf16>
    %34 = vector.shape_cast %33 : vector<1x8x4xbf16> to vector<8x4xbf16>
    %cst_22 = arith.constant dense<0.000000e+00> : vector<8x288xf32>
    %35 = tpu.matmul %34, %32, %cst_22 {dimension_numbers = #tpu.dot_dimension_numbers<[1], [0], [0], [1], [0, 0, 1, 1], [], []>} : vector<8x4xbf16>, vector<4x288xbf16>, vector<8x288xf32> -> vector<8x288xf32>
    %36 = arith.addf %31, %35 : vector<8x288xf32>
    %37 = vector.extract_strided_slice %2 {offsets = [0, 37], sizes = [4, 288], strides = [1, 1]} : vector<4x342xbf16> to vector<4x288xbf16>
    %c7 = arith.constant 7 : index
    %c0_23 = arith.constant 0 : index
    %c0_24 = arith.constant 0 : index
    %38 = vector.load %arg3[%c7, %c0_23, %c0_24] : memref<9x8x4xbf16, #tpu.memory_space<vmem>>, vector<1x8x4xbf16>
    %39 = vector.shape_cast %38 : vector<1x8x4xbf16> to vector<8x4xbf16>
    %cst_25 = arith.constant dense<0.000000e+00> : vector<8x288xf32>
    %40 = tpu.matmul %39, %37, %cst_25 {dimension_numbers = #tpu.dot_dimension_numbers<[1], [0], [0], [1], [0, 0, 1, 1], [], []>} : vector<8x4xbf16>, vector<4x288xbf16>, vector<8x288xf32> -> vector<8x288xf32>
    %41 = arith.addf %36, %40 : vector<8x288xf32>
    %42 = vector.extract_strided_slice %2 {offsets = [0, 38], sizes = [4, 288], strides = [1, 1]} : vector<4x342xbf16> to vector<4x288xbf16>
    %c8 = arith.constant 8 : index
    %c0_26 = arith.constant 0 : index
    %c0_27 = arith.constant 0 : index
    %43 = vector.load %arg3[%c8, %c0_26, %c0_27] : memref<9x8x4xbf16, #tpu.memory_space<vmem>>, vector<1x8x4xbf16>
    %44 = vector.shape_cast %43 : vector<1x8x4xbf16> to vector<8x4xbf16>
    %cst_28 = arith.constant dense<0.000000e+00> : vector<8x288xf32>
    %45 = tpu.matmul %44, %42, %cst_28 {dimension_numbers = #tpu.dot_dimension_numbers<[1], [0], [0], [1], [0, 0, 1, 1], [], []>} : vector<8x4xbf16>, vector<4x288xbf16>, vector<8x288xf32> -> vector<8x288xf32>
    %46 = arith.addf %41, %45 : vector<8x288xf32>
    %c0_29 = arith.constant 0 : index
    %c0_30 = arith.constant 0 : index
    %47 = vector.load %arg4[%c0_29, %c0_30] : memref<8x1xf32, #tpu.memory_space<vmem>>, vector<8x1xf32>
    %48 = vector.broadcast %47 : vector<8x1xf32> to vector<8x288xf32>
    %49 = arith.addf %46, %48 : vector<8x288xf32>
    %c0_31 = arith.constant 0 : index
    %c0_32 = arith.constant 0 : index
    %50 = vector.load %arg1[%c0_31, %c0_32] : memref<1x288xf32, #tpu.memory_space<vmem>>, vector<1x288xf32>
    %51 = vector.broadcast %50 : vector<1x288xf32> to vector<8x288xf32>
    %52 = arith.mulf %49, %51 : vector<8x288xf32>
    %cst_33 = arith.constant 1.000000e+00 : f32
    %53 = vector.broadcast %cst_33 : f32 to vector<1x288xf32>
    %54 = arith.subf %53, %50 : vector<1x288xf32>
    %cst_34 = arith.constant -1.000000e+30 : f32
    %55 = vector.broadcast %cst_34 : f32 to vector<1x288xf32>
    %56 = arith.mulf %54, %55 : vector<1x288xf32>
    %57 = vector.broadcast %56 : vector<1x288xf32> to vector<8x288xf32>
    %58 = arith.addf %52, %57 : vector<8x288xf32>
    %cst_35 = arith.constant -1.000000e+30 : f32
    %59 = vector.broadcast %cst_35 : f32 to vector<8x19xf32>
    %cst_36 = arith.constant -1.000000e+30 : f32
    %60 = vector.broadcast %cst_36 : f32 to vector<8x35xf32>
    %61 = tpu.concatenate %59, %58, %60 in 1 : vector<8x19xf32>, vector<8x288xf32>, vector<8x35xf32> -> vector<8x342xf32>
    %62 = vector.extract_strided_slice %61 {offsets = [0, 0], sizes = [8, 288], strides = [1, 1]} : vector<8x342xf32> to vector<8x288xf32>
    %63 = vector.extract_strided_slice %61 {offsets = [0, 1], sizes = [8, 288], strides = [1, 1]} : vector<8x342xf32> to vector<8x288xf32>
    %64 = arith.maximumf %62, %63 : vector<8x288xf32>
    %65 = vector.extract_strided_slice %61 {offsets = [0, 2], sizes = [8, 288], strides = [1, 1]} : vector<8x342xf32> to vector<8x288xf32>
    %66 = arith.maximumf %64, %65 : vector<8x288xf32>
    %67 = vector.extract_strided_slice %61 {offsets = [0, 18], sizes = [8, 288], strides = [1, 1]} : vector<8x342xf32> to vector<8x288xf32>
    %68 = arith.maximumf %66, %67 : vector<8x288xf32>
    %69 = vector.extract_strided_slice %61 {offsets = [0, 19], sizes = [8, 288], strides = [1, 1]} : vector<8x342xf32> to vector<8x288xf32>
    %70 = arith.maximumf %68, %69 : vector<8x288xf32>
    %71 = vector.extract_strided_slice %61 {offsets = [0, 20], sizes = [8, 288], strides = [1, 1]} : vector<8x342xf32> to vector<8x288xf32>
    %72 = arith.maximumf %70, %71 : vector<8x288xf32>
    %73 = vector.extract_strided_slice %61 {offsets = [0, 36], sizes = [8, 288], strides = [1, 1]} : vector<8x342xf32> to vector<8x288xf32>
    %74 = arith.maximumf %72, %73 : vector<8x288xf32>
    %75 = vector.extract_strided_slice %61 {offsets = [0, 37], sizes = [8, 288], strides = [1, 1]} : vector<8x342xf32> to vector<8x288xf32>
    %76 = arith.maximumf %74, %75 : vector<8x288xf32>
    %77 = vector.extract_strided_slice %61 {offsets = [0, 38], sizes = [8, 288], strides = [1, 1]} : vector<8x342xf32> to vector<8x288xf32>
    %78 = arith.maximumf %76, %77 : vector<8x288xf32>
    %c0_37 = arith.constant 0 : index
    %c0_38 = arith.constant 0 : index
    %c0_39 = arith.constant 0 : index
    %79 = vector.load %arg5[%c0_37, %c0_38, %c0_39] : memref<1x8x288xf32, #tpu.memory_space<vmem>>, vector<1x8x288xf32>
    %80 = vector.shape_cast %79 : vector<1x8x288xf32> to vector<8x288xf32>
    %81 = vector.shape_cast %78 : vector<8x288xf32> to vector<1x8x288xf32>
    tpu.vector_store %arg5[%c0_37, %c0_38, %c0_39], %81 {strides = array<i32>} : memref<1x8x288xf32, #tpu.memory_space<vmem>>, vector<1x8x288xf32>,
    return
  }
  func.func @transform_0(%arg0: i32) -> (i32, i32) {
    %c0_i32 = arith.constant 0 : i32
    %c0_i32_0 = arith.constant 0 : i32
    %c0_i32_1 = arith.constant 0 : i32
    return %c0_i32, %c0_i32_0 : i32, i32
  }
  func.func @transform_1(%arg0: i32) -> (i32, i32, i32) {
    %c0_i32 = arith.constant 0 : i32
    %c0_i32_0 = arith.constant 0 : i32
    %c0_i32_1 = arith.constant 0 : i32
    return %arg0, %c0_i32, %c0_i32_0 : i32, i32, i32
  }
  func.func @transform_2(%arg0: i32) -> (i32, i32, i32) {
    %c0_i32 = arith.constant 0 : i32
    %c0_i32_0 = arith.constant 0 : i32
    %c0_i32_1 = arith.constant 0 : i32
    %c0_i32_2 = arith.constant 0 : i32
    return %c0_i32, %c0_i32_0, %c0_i32_1 : i32, i32, i32
  }
  func.func @transform_3(%arg0: i32) -> (i32, i32) {
    %c0_i32 = arith.constant 0 : i32
    %c0_i32_0 = arith.constant 0 : i32
    %c0_i32_1 = arith.constant 0 : i32
    return %c0_i32, %c0_i32_0 : i32, i32
  }
  func.func @transform_4(%arg0: i32) -> (i32, i32, i32) {
    %c0_i32 = arith.constant 0 : i32
    %c0_i32_0 = arith.constant 0 : i32
    %c0_i32_1 = arith.constant 0 : i32
    return %arg0, %c0_i32, %c0_i32_0 : i32, i32, i32
  }
}

module attributes {stable_mosaic.version = 11 : i64} {
  func.func @_res_block_kernel(%arg0: i32, %arg1: memref<1x80xf32, #tpu.memory_space<vmem>>, %arg2: memref<1x8x110xf32, #tpu.memory_space<vmem>>, %arg3: memref<9x8x8xbf16, #tpu.memory_space<vmem>>, %arg4: memref<8x1xf32, #tpu.memory_space<vmem>>, %arg5: memref<9x8x8xbf16, #tpu.memory_space<vmem>>, %arg6: memref<8x1xf32, #tpu.memory_space<vmem>>, %arg7: memref<1x8x110xf32, #tpu.memory_space<vmem>>) attributes {dimension_semantics = [#tpu.dimension_semantics<parallel>], iteration_bounds = array<i64: 2>, scalar_prefetch = 0 : i64, scratch_operands = 0 : i64, tpu.core_type = #tpu.core_type<tc>, window_params = [{pipeline_mode = #tpu.pipeline_mode<synchronous>, transform_indices = @transform_0, window_bounds = array<i64: 1, 80>}, {transform_indices = @transform_1, window_bounds = array<i64: 1, 8, 110>}, {pipeline_mode = #tpu.pipeline_mode<synchronous>, transform_indices = @transform_2, window_bounds = array<i64: 9, 8, 8>}, {pipeline_mode = #tpu.pipeline_mode<synchronous>, transform_indices = @transform_3, window_bounds = array<i64: 8, 1>}, {pipeline_mode = #tpu.pipeline_mode<synchronous>, transform_indices = @transform_4, window_bounds = array<i64: 9, 8, 8>}, {pipeline_mode = #tpu.pipeline_mode<synchronous>, transform_indices = @transform_5, window_bounds = array<i64: 8, 1>}, {transform_indices = @transform_6, window_bounds = array<i64: 1, 8, 110>}]} {
    %c0 = arith.constant 0 : index
    %c0_0 = arith.constant 0 : index
    %c0_1 = arith.constant 0 : index
    %0 = vector.load %arg2[%c0, %c0_0, %c0_1] : memref<1x8x110xf32, #tpu.memory_space<vmem>>, vector<1x8x110xf32>
    %1 = vector.shape_cast %0 : vector<1x8x110xf32> to vector<8x110xf32>
    %c0_2 = arith.constant 0 : index
    %c0_3 = arith.constant 0 : index
    %2 = vector.load %arg1[%c0_2, %c0_3] : memref<1x80xf32, #tpu.memory_space<vmem>>, vector<1x80xf32>
    %cst = arith.constant 0.000000e+00 : f32
    %3 = vector.broadcast %cst : f32 to vector<8x110xf32>
    %4 = arith.maximumf %1, %3 : vector<8x110xf32>
    %5 = arith.truncf %4 : vector<8x110xf32> to vector<8x110xbf16>
    %6 = vector.extract_strided_slice %5 {offsets = [0, 0], sizes = [8, 80], strides = [1, 1]} : vector<8x110xbf16> to vector<8x80xbf16>
    %c0_4 = arith.constant 0 : index
    %c0_5 = arith.constant 0 : index
    %c0_6 = arith.constant 0 : index
    %7 = vector.load %arg3[%c0_4, %c0_5, %c0_6] : memref<9x8x8xbf16, #tpu.memory_space<vmem>>, vector<1x8x8xbf16>
    %8 = vector.shape_cast %7 : vector<1x8x8xbf16> to vector<8x8xbf16>
    %cst_7 = arith.constant dense<0.000000e+00> : vector<8x80xf32>
    %9 = tpu.matmul %8, %6, %cst_7 {dimension_numbers = #tpu.dot_dimension_numbers<[1], [0], [0], [1], [0, 0, 1, 1], [], []>} : vector<8x8xbf16>, vector<8x80xbf16>, vector<8x80xf32> -> vector<8x80xf32>
    %10 = vector.extract_strided_slice %5 {offsets = [0, 1], sizes = [8, 80], strides = [1, 1]} : vector<8x110xbf16> to vector<8x80xbf16>
    %c1 = arith.constant 1 : index
    %c0_8 = arith.constant 0 : index
    %c0_9 = arith.constant 0 : index
    %11 = vector.load %arg3[%c1, %c0_8, %c0_9] : memref<9x8x8xbf16, #tpu.memory_space<vmem>>, vector<1x8x8xbf16>
    %12 = vector.shape_cast %11 : vector<1x8x8xbf16> to vector<8x8xbf16>
    %cst_10 = arith.constant dense<0.000000e+00> : vector<8x80xf32>
    %13 = tpu.matmul %12, %10, %cst_10 {dimension_numbers = #tpu.dot_dimension_numbers<[1], [0], [0], [1], [0, 0, 1, 1], [], []>} : vector<8x8xbf16>, vector<8x80xbf16>, vector<8x80xf32> -> vector<8x80xf32>
    %14 = arith.addf %9, %13 : vector<8x80xf32>
    %15 = vector.extract_strided_slice %5 {offsets = [0, 2], sizes = [8, 80], strides = [1, 1]} : vector<8x110xbf16> to vector<8x80xbf16>
    %c2 = arith.constant 2 : index
    %c0_11 = arith.constant 0 : index
    %c0_12 = arith.constant 0 : index
    %16 = vector.load %arg3[%c2, %c0_11, %c0_12] : memref<9x8x8xbf16, #tpu.memory_space<vmem>>, vector<1x8x8xbf16>
    %17 = vector.shape_cast %16 : vector<1x8x8xbf16> to vector<8x8xbf16>
    %cst_13 = arith.constant dense<0.000000e+00> : vector<8x80xf32>
    %18 = tpu.matmul %17, %15, %cst_13 {dimension_numbers = #tpu.dot_dimension_numbers<[1], [0], [0], [1], [0, 0, 1, 1], [], []>} : vector<8x8xbf16>, vector<8x80xbf16>, vector<8x80xf32> -> vector<8x80xf32>
    %19 = arith.addf %14, %18 : vector<8x80xf32>
    %20 = vector.extract_strided_slice %5 {offsets = [0, 10], sizes = [8, 80], strides = [1, 1]} : vector<8x110xbf16> to vector<8x80xbf16>
    %c3 = arith.constant 3 : index
    %c0_14 = arith.constant 0 : index
    %c0_15 = arith.constant 0 : index
    %21 = vector.load %arg3[%c3, %c0_14, %c0_15] : memref<9x8x8xbf16, #tpu.memory_space<vmem>>, vector<1x8x8xbf16>
    %22 = vector.shape_cast %21 : vector<1x8x8xbf16> to vector<8x8xbf16>
    %cst_16 = arith.constant dense<0.000000e+00> : vector<8x80xf32>
    %23 = tpu.matmul %22, %20, %cst_16 {dimension_numbers = #tpu.dot_dimension_numbers<[1], [0], [0], [1], [0, 0, 1, 1], [], []>} : vector<8x8xbf16>, vector<8x80xbf16>, vector<8x80xf32> -> vector<8x80xf32>
    %24 = arith.addf %19, %23 : vector<8x80xf32>
    %25 = vector.extract_strided_slice %5 {offsets = [0, 11], sizes = [8, 80], strides = [1, 1]} : vector<8x110xbf16> to vector<8x80xbf16>
    %c4 = arith.constant 4 : index
    %c0_17 = arith.constant 0 : index
    %c0_18 = arith.constant 0 : index
    %26 = vector.load %arg3[%c4, %c0_17, %c0_18] : memref<9x8x8xbf16, #tpu.memory_space<vmem>>, vector<1x8x8xbf16>
    %27 = vector.shape_cast %26 : vector<1x8x8xbf16> to vector<8x8xbf16>
    %cst_19 = arith.constant dense<0.000000e+00> : vector<8x80xf32>
    %28 = tpu.matmul %27, %25, %cst_19 {dimension_numbers = #tpu.dot_dimension_numbers<[1], [0], [0], [1], [0, 0, 1, 1], [], []>} : vector<8x8xbf16>, vector<8x80xbf16>, vector<8x80xf32> -> vector<8x80xf32>
    %29 = arith.addf %24, %28 : vector<8x80xf32>
    %30 = vector.extract_strided_slice %5 {offsets = [0, 12], sizes = [8, 80], strides = [1, 1]} : vector<8x110xbf16> to vector<8x80xbf16>
    %c5 = arith.constant 5 : index
    %c0_20 = arith.constant 0 : index
    %c0_21 = arith.constant 0 : index
    %31 = vector.load %arg3[%c5, %c0_20, %c0_21] : memref<9x8x8xbf16, #tpu.memory_space<vmem>>, vector<1x8x8xbf16>
    %32 = vector.shape_cast %31 : vector<1x8x8xbf16> to vector<8x8xbf16>
    %cst_22 = arith.constant dense<0.000000e+00> : vector<8x80xf32>
    %33 = tpu.matmul %32, %30, %cst_22 {dimension_numbers = #tpu.dot_dimension_numbers<[1], [0], [0], [1], [0, 0, 1, 1], [], []>} : vector<8x8xbf16>, vector<8x80xbf16>, vector<8x80xf32> -> vector<8x80xf32>
    %34 = arith.addf %29, %33 : vector<8x80xf32>
    %35 = vector.extract_strided_slice %5 {offsets = [0, 20], sizes = [8, 80], strides = [1, 1]} : vector<8x110xbf16> to vector<8x80xbf16>
    %c6 = arith.constant 6 : index
    %c0_23 = arith.constant 0 : index
    %c0_24 = arith.constant 0 : index
    %36 = vector.load %arg3[%c6, %c0_23, %c0_24] : memref<9x8x8xbf16, #tpu.memory_space<vmem>>, vector<1x8x8xbf16>
    %37 = vector.shape_cast %36 : vector<1x8x8xbf16> to vector<8x8xbf16>
    %cst_25 = arith.constant dense<0.000000e+00> : vector<8x80xf32>
    %38 = tpu.matmul %37, %35, %cst_25 {dimension_numbers = #tpu.dot_dimension_numbers<[1], [0], [0], [1], [0, 0, 1, 1], [], []>} : vector<8x8xbf16>, vector<8x80xbf16>, vector<8x80xf32> -> vector<8x80xf32>
    %39 = arith.addf %34, %38 : vector<8x80xf32>
    %40 = vector.extract_strided_slice %5 {offsets = [0, 21], sizes = [8, 80], strides = [1, 1]} : vector<8x110xbf16> to vector<8x80xbf16>
    %c7 = arith.constant 7 : index
    %c0_26 = arith.constant 0 : index
    %c0_27 = arith.constant 0 : index
    %41 = vector.load %arg3[%c7, %c0_26, %c0_27] : memref<9x8x8xbf16, #tpu.memory_space<vmem>>, vector<1x8x8xbf16>
    %42 = vector.shape_cast %41 : vector<1x8x8xbf16> to vector<8x8xbf16>
    %cst_28 = arith.constant dense<0.000000e+00> : vector<8x80xf32>
    %43 = tpu.matmul %42, %40, %cst_28 {dimension_numbers = #tpu.dot_dimension_numbers<[1], [0], [0], [1], [0, 0, 1, 1], [], []>} : vector<8x8xbf16>, vector<8x80xbf16>, vector<8x80xf32> -> vector<8x80xf32>
    %44 = arith.addf %39, %43 : vector<8x80xf32>
    %45 = vector.extract_strided_slice %5 {offsets = [0, 22], sizes = [8, 80], strides = [1, 1]} : vector<8x110xbf16> to vector<8x80xbf16>
    %c8 = arith.constant 8 : index
    %c0_29 = arith.constant 0 : index
    %c0_30 = arith.constant 0 : index
    %46 = vector.load %arg3[%c8, %c0_29, %c0_30] : memref<9x8x8xbf16, #tpu.memory_space<vmem>>, vector<1x8x8xbf16>
    %47 = vector.shape_cast %46 : vector<1x8x8xbf16> to vector<8x8xbf16>
    %cst_31 = arith.constant dense<0.000000e+00> : vector<8x80xf32>
    %48 = tpu.matmul %47, %45, %cst_31 {dimension_numbers = #tpu.dot_dimension_numbers<[1], [0], [0], [1], [0, 0, 1, 1], [], []>} : vector<8x8xbf16>, vector<8x80xbf16>, vector<8x80xf32> -> vector<8x80xf32>
    %49 = arith.addf %44, %48 : vector<8x80xf32>
    %c0_32 = arith.constant 0 : index
    %c0_33 = arith.constant 0 : index
    %50 = vector.load %arg4[%c0_32, %c0_33] : memref<8x1xf32, #tpu.memory_space<vmem>>, vector<8x1xf32>
    %51 = vector.broadcast %50 : vector<8x1xf32> to vector<8x80xf32>
    %52 = arith.addf %49, %51 : vector<8x80xf32>
    %53 = vector.broadcast %2 : vector<1x80xf32> to vector<8x80xf32>
    %54 = arith.mulf %52, %53 : vector<8x80xf32>
    %cst_34 = arith.constant 0.000000e+00 : f32
    %55 = vector.broadcast %cst_34 : f32 to vector<8x11xf32>
    %cst_35 = arith.constant 0.000000e+00 : f32
    %56 = vector.broadcast %cst_35 : f32 to vector<8x19xf32>
    %57 = tpu.concatenate %55, %54, %56 in 1 : vector<8x11xf32>, vector<8x80xf32>, vector<8x19xf32> -> vector<8x110xf32>
    %cst_36 = arith.constant 0.000000e+00 : f32
    %58 = vector.broadcast %cst_36 : f32 to vector<8x110xf32>
    %59 = arith.maximumf %57, %58 : vector<8x110xf32>
    %60 = arith.truncf %59 : vector<8x110xf32> to vector<8x110xbf16>
    %61 = vector.extract_strided_slice %60 {offsets = [0, 0], sizes = [8, 80], strides = [1, 1]} : vector<8x110xbf16> to vector<8x80xbf16>
    %c0_37 = arith.constant 0 : index
    %c0_38 = arith.constant 0 : index
    %c0_39 = arith.constant 0 : index
    %62 = vector.load %arg5[%c0_37, %c0_38, %c0_39] : memref<9x8x8xbf16, #tpu.memory_space<vmem>>, vector<1x8x8xbf16>
    %63 = vector.shape_cast %62 : vector<1x8x8xbf16> to vector<8x8xbf16>
    %cst_40 = arith.constant dense<0.000000e+00> : vector<8x80xf32>
    %64 = tpu.matmul %63, %61, %cst_40 {dimension_numbers = #tpu.dot_dimension_numbers<[1], [0], [0], [1], [0, 0, 1, 1], [], []>} : vector<8x8xbf16>, vector<8x80xbf16>, vector<8x80xf32> -> vector<8x80xf32>
    %65 = vector.extract_strided_slice %60 {offsets = [0, 1], sizes = [8, 80], strides = [1, 1]} : vector<8x110xbf16> to vector<8x80xbf16>
    %c1_41 = arith.constant 1 : index
    %c0_42 = arith.constant 0 : index
    %c0_43 = arith.constant 0 : index
    %66 = vector.load %arg5[%c1_41, %c0_42, %c0_43] : memref<9x8x8xbf16, #tpu.memory_space<vmem>>, vector<1x8x8xbf16>
    %67 = vector.shape_cast %66 : vector<1x8x8xbf16> to vector<8x8xbf16>
    %cst_44 = arith.constant dense<0.000000e+00> : vector<8x80xf32>
    %68 = tpu.matmul %67, %65, %cst_44 {dimension_numbers = #tpu.dot_dimension_numbers<[1], [0], [0], [1], [0, 0, 1, 1], [], []>} : vector<8x8xbf16>, vector<8x80xbf16>, vector<8x80xf32> -> vector<8x80xf32>
    %69 = arith.addf %64, %68 : vector<8x80xf32>
    %70 = vector.extract_strided_slice %60 {offsets = [0, 2], sizes = [8, 80], strides = [1, 1]} : vector<8x110xbf16> to vector<8x80xbf16>
    %c2_45 = arith.constant 2 : index
    %c0_46 = arith.constant 0 : index
    %c0_47 = arith.constant 0 : index
    %71 = vector.load %arg5[%c2_45, %c0_46, %c0_47] : memref<9x8x8xbf16, #tpu.memory_space<vmem>>, vector<1x8x8xbf16>
    %72 = vector.shape_cast %71 : vector<1x8x8xbf16> to vector<8x8xbf16>
    %cst_48 = arith.constant dense<0.000000e+00> : vector<8x80xf32>
    %73 = tpu.matmul %72, %70, %cst_48 {dimension_numbers = #tpu.dot_dimension_numbers<[1], [0], [0], [1], [0, 0, 1, 1], [], []>} : vector<8x8xbf16>, vector<8x80xbf16>, vector<8x80xf32> -> vector<8x80xf32>
    %74 = arith.addf %69, %73 : vector<8x80xf32>
    %75 = vector.extract_strided_slice %60 {offsets = [0, 10], sizes = [8, 80], strides = [1, 1]} : vector<8x110xbf16> to vector<8x80xbf16>
    %c3_49 = arith.constant 3 : index
    %c0_50 = arith.constant 0 : index
    %c0_51 = arith.constant 0 : index
    %76 = vector.load %arg5[%c3_49, %c0_50, %c0_51] : memref<9x8x8xbf16, #tpu.memory_space<vmem>>, vector<1x8x8xbf16>
    %77 = vector.shape_cast %76 : vector<1x8x8xbf16> to vector<8x8xbf16>
    %cst_52 = arith.constant dense<0.000000e+00> : vector<8x80xf32>
    %78 = tpu.matmul %77, %75, %cst_52 {dimension_numbers = #tpu.dot_dimension_numbers<[1], [0], [0], [1], [0, 0, 1, 1], [], []>} : vector<8x8xbf16>, vector<8x80xbf16>, vector<8x80xf32> -> vector<8x80xf32>
    %79 = arith.addf %74, %78 : vector<8x80xf32>
    %80 = vector.extract_strided_slice %60 {offsets = [0, 11], sizes = [8, 80], strides = [1, 1]} : vector<8x110xbf16> to vector<8x80xbf16>
    %c4_53 = arith.constant 4 : index
    %c0_54 = arith.constant 0 : index
    %c0_55 = arith.constant 0 : index
    %81 = vector.load %arg5[%c4_53, %c0_54, %c0_55] : memref<9x8x8xbf16, #tpu.memory_space<vmem>>, vector<1x8x8xbf16>
    %82 = vector.shape_cast %81 : vector<1x8x8xbf16> to vector<8x8xbf16>
    %cst_56 = arith.constant dense<0.000000e+00> : vector<8x80xf32>
    %83 = tpu.matmul %82, %80, %cst_56 {dimension_numbers = #tpu.dot_dimension_numbers<[1], [0], [0], [1], [0, 0, 1, 1], [], []>} : vector<8x8xbf16>, vector<8x80xbf16>, vector<8x80xf32> -> vector<8x80xf32>
    %84 = arith.addf %79, %83 : vector<8x80xf32>
    %85 = vector.extract_strided_slice %60 {offsets = [0, 12], sizes = [8, 80], strides = [1, 1]} : vector<8x110xbf16> to vector<8x80xbf16>
    %c5_57 = arith.constant 5 : index
    %c0_58 = arith.constant 0 : index
    %c0_59 = arith.constant 0 : index
    %86 = vector.load %arg5[%c5_57, %c0_58, %c0_59] : memref<9x8x8xbf16, #tpu.memory_space<vmem>>, vector<1x8x8xbf16>
    %87 = vector.shape_cast %86 : vector<1x8x8xbf16> to vector<8x8xbf16>
    %cst_60 = arith.constant dense<0.000000e+00> : vector<8x80xf32>
    %88 = tpu.matmul %87, %85, %cst_60 {dimension_numbers = #tpu.dot_dimension_numbers<[1], [0], [0], [1], [0, 0, 1, 1], [], []>} : vector<8x8xbf16>, vector<8x80xbf16>, vector<8x80xf32> -> vector<8x80xf32>
    %89 = arith.addf %84, %88 : vector<8x80xf32>
    %90 = vector.extract_strided_slice %60 {offsets = [0, 20], sizes = [8, 80], strides = [1, 1]} : vector<8x110xbf16> to vector<8x80xbf16>
    %c6_61 = arith.constant 6 : index
    %c0_62 = arith.constant 0 : index
    %c0_63 = arith.constant 0 : index
    %91 = vector.load %arg5[%c6_61, %c0_62, %c0_63] : memref<9x8x8xbf16, #tpu.memory_space<vmem>>, vector<1x8x8xbf16>
    %92 = vector.shape_cast %91 : vector<1x8x8xbf16> to vector<8x8xbf16>
    %cst_64 = arith.constant dense<0.000000e+00> : vector<8x80xf32>
    %93 = tpu.matmul %92, %90, %cst_64 {dimension_numbers = #tpu.dot_dimension_numbers<[1], [0], [0], [1], [0, 0, 1, 1], [], []>} : vector<8x8xbf16>, vector<8x80xbf16>, vector<8x80xf32> -> vector<8x80xf32>
    %94 = arith.addf %89, %93 : vector<8x80xf32>
    %95 = vector.extract_strided_slice %60 {offsets = [0, 21], sizes = [8, 80], strides = [1, 1]} : vector<8x110xbf16> to vector<8x80xbf16>
    %c7_65 = arith.constant 7 : index
    %c0_66 = arith.constant 0 : index
    %c0_67 = arith.constant 0 : index
    %96 = vector.load %arg5[%c7_65, %c0_66, %c0_67] : memref<9x8x8xbf16, #tpu.memory_space<vmem>>, vector<1x8x8xbf16>
    %97 = vector.shape_cast %96 : vector<1x8x8xbf16> to vector<8x8xbf16>
    %cst_68 = arith.constant dense<0.000000e+00> : vector<8x80xf32>
    %98 = tpu.matmul %97, %95, %cst_68 {dimension_numbers = #tpu.dot_dimension_numbers<[1], [0], [0], [1], [0, 0, 1, 1], [], []>} : vector<8x8xbf16>, vector<8x80xbf16>, vector<8x80xf32> -> vector<8x80xf32>
    %99 = arith.addf %94, %98 : vector<8x80xf32>
    %100 = vector.extract_strided_slice %60 {offsets = [0, 22], sizes = [8, 80], strides = [1, 1]} : vector<8x110xbf16> to vector<8x80xbf16>
    %c8_69 = arith.constant 8 : index
    %c0_70 = arith.constant 0 : index
    %c0_71 = arith.constant 0 : index
    %101 = vector.load %arg5[%c8_69, %c0_70, %c0_71] : memref<9x8x8xbf16, #tpu.memory_space<vmem>>, vector<1x8x8xbf16>
    %102 = vector.shape_cast %101 : vector<1x8x8xbf16> to vector<8x8xbf16>
    %cst_72 = arith.constant dense<0.000000e+00> : vector<8x80xf32>
    %103 = tpu.matmul %102, %100, %cst_72 {dimension_numbers = #tpu.dot_dimension_numbers<[1], [0], [0], [1], [0, 0, 1, 1], [], []>} : vector<8x8xbf16>, vector<8x80xbf16>, vector<8x80xf32> -> vector<8x80xf32>
    %104 = arith.addf %99, %103 : vector<8x80xf32>
    %c0_73 = arith.constant 0 : index
    %c0_74 = arith.constant 0 : index
    %105 = vector.load %arg6[%c0_73, %c0_74] : memref<8x1xf32, #tpu.memory_space<vmem>>, vector<8x1xf32>
    %106 = vector.broadcast %105 : vector<8x1xf32> to vector<8x80xf32>
    %107 = arith.addf %104, %106 : vector<8x80xf32>
    %108 = vector.extract_strided_slice %1 {offsets = [0, 11], sizes = [8, 80], strides = [1, 1]} : vector<8x110xf32> to vector<8x80xf32>
    %109 = arith.addf %107, %108 : vector<8x80xf32>
    %110 = vector.broadcast %2 : vector<1x80xf32> to vector<8x80xf32>
    %111 = arith.mulf %109, %110 : vector<8x80xf32>
    %cst_75 = arith.constant 0.000000e+00 : f32
    %112 = vector.broadcast %cst_75 : f32 to vector<8x11xf32>
    %cst_76 = arith.constant 0.000000e+00 : f32
    %113 = vector.broadcast %cst_76 : f32 to vector<8x19xf32>
    %114 = tpu.concatenate %112, %111, %113 in 1 : vector<8x11xf32>, vector<8x80xf32>, vector<8x19xf32> -> vector<8x110xf32>
    %c0_77 = arith.constant 0 : index
    %c0_78 = arith.constant 0 : index
    %c0_79 = arith.constant 0 : index
    %115 = vector.load %arg7[%c0_77, %c0_78, %c0_79] : memref<1x8x110xf32, #tpu.memory_space<vmem>>, vector<1x8x110xf32>
    %116 = vector.shape_cast %115 : vector<1x8x110xf32> to vector<8x110xf32>
    %117 = vector.shape_cast %114 : vector<8x110xf32> to vector<1x8x110xf32>
    tpu.vector_store %arg7[%c0_77, %c0_78, %c0_79], %117 {strides = array<i32>} : memref<1x8x110xf32, #tpu.memory_space<vmem>>, vector<1x8x110xf32>,
    return
  }
  func.func @transform_0(%arg0: i32) -> (i32, i32) {
    %c0_i32 = arith.constant 0 : i32
    %c0_i32_0 = arith.constant 0 : i32
    %c0_i32_1 = arith.constant 0 : i32
    return %c0_i32, %c0_i32_0 : i32, i32
  }
  func.func @transform_1(%arg0: i32) -> (i32, i32, i32) {
    %c0_i32 = arith.constant 0 : i32
    %c0_i32_0 = arith.constant 0 : i32
    %c0_i32_1 = arith.constant 0 : i32
    return %arg0, %c0_i32, %c0_i32_0 : i32, i32, i32
  }
  func.func @transform_2(%arg0: i32) -> (i32, i32, i32) {
    %c0_i32 = arith.constant 0 : i32
    %c0_i32_0 = arith.constant 0 : i32
    %c0_i32_1 = arith.constant 0 : i32
    %c0_i32_2 = arith.constant 0 : i32
    return %c0_i32, %c0_i32_0, %c0_i32_1 : i32, i32, i32
  }
  func.func @transform_3(%arg0: i32) -> (i32, i32) {
    %c0_i32 = arith.constant 0 : i32
    %c0_i32_0 = arith.constant 0 : i32
    %c0_i32_1 = arith.constant 0 : i32
    return %c0_i32, %c0_i32_0 : i32, i32
  }
  func.func @transform_4(%arg0: i32) -> (i32, i32, i32) {
    %c0_i32 = arith.constant 0 : i32
    %c0_i32_0 = arith.constant 0 : i32
    %c0_i32_1 = arith.constant 0 : i32
    %c0_i32_2 = arith.constant 0 : i32
    return %c0_i32, %c0_i32_0, %c0_i32_1 : i32, i32, i32
  }
  func.func @transform_5(%arg0: i32) -> (i32, i32) {
    %c0_i32 = arith.constant 0 : i32
    %c0_i32_0 = arith.constant 0 : i32
    %c0_i32_1 = arith.constant 0 : i32
    return %c0_i32, %c0_i32_0 : i32, i32
  }
  func.func @transform_6(%arg0: i32) -> (i32, i32, i32) {
    %c0_i32 = arith.constant 0 : i32
    %c0_i32_0 = arith.constant 0 : i32
    %c0_i32_1 = arith.constant 0 : i32
    return %arg0, %c0_i32, %c0_i32_0 : i32, i32, i32
  }
}

</mosaic_0001>

<llo_original>
// kernel: conv_sequence_forward.3
$region0: #{conv_sequence_forward.3}
  #allocation0 [shape = 'u32[]', space=smem, size = 0x4, offset = 0x4, fixed_abs, tag = 'smem constant byte address 0x4 - core index']
  #allocation1 [shape = 'u32[144,128]{1,0:T(1,128)}', space=vmem, size = 0x12000, scoped, tag = 'internal scratch']
  %s0 = inlined_call_operand.vmem [shape: f32[1,288], index: 0, kind: input, shape index: {}]
  %s1 = inlined_call_operand.vmem [shape: f32[2,4,342], index: 1, kind: input, shape index: {}]
  %s2 = inlined_call_operand.vmem [shape: bf16[9,8,4], index: 2, kind: input, shape index: {}]
  %s3 = inlined_call_operand.vmem [shape: f32[8,1], index: 3, kind: input, shape index: {}]
  %s4 = inlined_call_operand.vmem [shape: f32[2,8,288], index: 4, kind: output, shape index: {}]
  %s5 = sld [smem:[#allocation0]]
  $region49: #{conv_sequence_forward.3} parent=0
    _
  %s7 = ssub.s32 1, %s5
  %s8 = scalar_select 0, %s7, %s5
  loop: start=0, step=1, limit=4
  $region2: #{conv_sequence_forward.3} parent=0 // loop_pre_header
    _
  $region3: #{conv_sequence_forward.3} parent=0 // loop_header
    %s10 = sphi 0, %s14
    %p11 = scmp.ge.s32.totalorder %s10, 4
    %s18 = sphi 0, %s18
    %s20 = sphi 0, %s18
    %s21 = sphi 0, %s20
    %s35 = sphi 0, %s21
    %s41 = sphi 0, %s43
    %s44 = sphi 0, %s41
    %s45 = sphi 0, %s44
    %s61 = sphi 0, %s45
    %s65 = sphi 0, %s65
    %s67 = sphi 0, %s65
    %s68 = sphi 0, %s67
    %s82 = sphi 0, %s68
    %s86 = sphi 0, %s86
    %s88 = sphi 0, %s86
    %s89 = sphi 0, %s88
    %s103 = sphi 0, %s89
    %s109 = sphi 0, %s111
    %s112 = sphi 0, %s109
    %s113 = sphi 0, %s112
    %s129 = sphi 0, %s113
  $region4: #{conv_sequence_forward.3} parent=0 // loop_header_branch
    %13 = sbr.rel (%p11) target = $region8
  $region5: #{conv_sequence_forward.3} parent=0 // loop_body
    %s15 = ssub.s32 %s10, 1
    %s16 = ssub.s32 %s10, 2
    %s17 = sadd.s32 %s10, 1
    %s19 = sadd.s32 %s18, 1
    %p22 = scmp.eq.s32.totalorder %s10, 1
    %p23 = scmp.ne.s32.totalorder %s18, %s20
    %p24 = scmp.eq.s32.totalorder %s10, 0
    %p25 = por %p23, %p24
    %p26 = scmp.ne.s32.totalorder %s18, %s20
    %p27 = scmp.eq.s32.totalorder %s15, 1
    %p28 = por %p26, %p27
    %p29 = scmp.ne.s32.totalorder %s20, %s21
    %p30 = scmp.eq.s32.totalorder %s15, 0
    %p31 = por %p29, %p30
    %p32 = scmp.ne.s32.totalorder %s20, %s21
    %p33 = scmp.eq.s32.totalorder %s16, 1
    %p34 = por %p32, %p33
    %p36 = scmp.ne.s32.totalorder %s21, %s35
    %p37 = scmp.eq.s32.totalorder %s16, 0
    %p38 = por %p36, %p37
    %s39 = ssub.s32 %s10, %s17
    %p40 = scmp.eq.s32.totalorder %s39, 0
    %s42 = sadd.s32 %s41, 1
    %s43 = scalar_select %p40, %s41, %s42
    %p46 = pneg %p40
    %p47 = scmp.eq.s32.totalorder %s10, 1
    %p48 = por %p46, %p47
    %p49 = scmp.ne.s32.totalorder %s41, %s44
    %p50 = scmp.eq.s32.totalorder %s10, 0
    %p51 = por %p49, %p50
    %p52 = scmp.ne.s32.totalorder %s41, %s44
    %p53 = scmp.eq.s32.totalorder %s15, 1
    %p54 = por %p52, %p53
    %p55 = scmp.ne.s32.totalorder %s44, %s45
    %p56 = scmp.eq.s32.totalorder %s15, 0
    %p57 = por %p55, %p56
    %p58 = scmp.ne.s32.totalorder %s44, %s45
    %p59 = scmp.eq.s32.totalorder %s16, 1
    %p60 = por %p58, %p59
    %p62 = scmp.ne.s32.totalorder %s45, %s61
    %p63 = scmp.eq.s32.totalorder %s16, 0
    %p64 = por %p62, %p63
    %s66 = sadd.s32 %s65, 1
    %p69 = scmp.eq.s32.totalorder %s10, 1
    %p70 = scmp.ne.s32.totalorder %s65, %s67
    %p71 = scmp.eq.s32.totalorder %s10, 0
    %p72 = por %p70, %p71
    %p73 = scmp.ne.s32.totalorder %s65, %s67
    %p74 = scmp.eq.s32.totalorder %s15, 1
    %p75 = por %p73, %p74
    %p76 = scmp.ne.s32.totalorder %s67, %s68
    %p77 = scmp.eq.s32.totalorder %s15, 0
    %p78 = por %p76, %p77
    %p79 = scmp.ne.s32.totalorder %s67, %s68
    %p80 = scmp.eq.s32.totalorder %s16, 1
    %p81 = por %p79, %p80
    %p83 = scmp.ne.s32.totalorder %s68, %s82
    %p84 = scmp.eq.s32.totalorder %s16, 0
    %p85 = por %p83, %p84
    %s87 = sadd.s32 %s86, 1
    %p90 = scmp.eq.s32.totalorder %s10, 1
    %p91 = scmp.ne.s32.totalorder %s86, %s88
    %p92 = scmp.eq.s32.totalorder %s10, 0
    %p93 = por %p91, %p92
    %p94 = scmp.ne.s32.totalorder %s86, %s88
    %p95 = scmp.eq.s32.totalorder %s15, 1
    %p96 = por %p94, %p95
    %p97 = scmp.ne.s32.totalorder %s88, %s89
    %p98 = scmp.eq.s32.totalorder %s15, 0
    %p99 = por %p97, %p98
    %p100 = scmp.ne.s32.totalorder %s88, %s89
    %p101 = scmp.eq.s32.totalorder %s16, 1
    %p102 = por %p100, %p101
    %p104 = scmp.ne.s32.totalorder %s89, %s103
    %p105 = scmp.eq.s32.totalorder %s16, 0
    %p106 = por %p104, %p105
    %s107 = ssub.s32 %s10, %s17
    %p108 = scmp.eq.s32.totalorder %s107, 0
    %s110 = sadd.s32 %s109, 1
    %s111 = scalar_select %p108, %s109, %s110
    %p114 = pneg %p108
    %p115 = scmp.eq.s32.totalorder %s10, 1
    %p116 = por %p114, %p115
    %p117 = scmp.ne.s32.totalorder %s109, %s112
    %p118 = scmp.eq.s32.totalorder %s10, 0
    %p119 = por %p117, %p118
    %p120 = scmp.ne.s32.totalorder %s109, %s112
    %p121 = scmp.eq.s32.totalorder %s15, 1
    %p122 = por %p120, %p121
    %p123 = scmp.ne.s32.totalorder %s112, %s113
    %p124 = scmp.eq.s32.totalorder %s15, 0
    %p125 = por %p123, %p124
    %p126 = scmp.ne.s32.totalorder %s112, %s113
    %p127 = scmp.eq.s32.totalorder %s16, 1
    %p128 = por %p126, %p127
    %p130 = scmp.ne.s32.totalorder %s113, %s129
    %p131 = scmp.eq.s32.totalorder %s16, 0
    %p132 = por %p130, %p131
    %p133 = scmp.le.s32.totalorder 1, %s10
    %p134 = scmp.lt.s32.totalorder %s10, 3
    %p135 = pnand %p133, %p134
    %p136 = pneg %p135
    // Predicated region
    $region9: #{conv_sequence_forward.3} parent=5 // pred_check
      _
    $region10: #{conv_sequence_forward.3} parent=5 // pred_check_branch
      %138 = sbr.rel (%p135) target = $region12
    $region11: #{conv_sequence_forward.3} parent=5 // pred_region
      %s139 = ssub.s32 %s10, 1
      // Predicated region
      $region13: #{conv_sequence_forward.3} parent=11 // pred_check
        %p140 = pneg %p31
      $region14: #{conv_sequence_forward.3} parent=11 // pred_check_branch
        %142 = sbr.rel (%p140) target = $region16
      $region15: #{conv_sequence_forward.3} parent=11 // pred_region
        _
      $region16: #{conv_sequence_forward.3} parent=11 // pred_fallthru
        _
      // Predicated region
      $region17: #{conv_sequence_forward.3} parent=11 // pred_check
        %p143 = pneg %p78
      $region18: #{conv_sequence_forward.3} parent=11 // pred_check_branch
        %145 = sbr.rel (%p143) target = $region20
      $region19: #{conv_sequence_forward.3} parent=11 // pred_region
        _
      $region20: #{conv_sequence_forward.3} parent=11 // pred_fallthru
        _
      // Predicated region
      $region21: #{conv_sequence_forward.3} parent=11 // pred_check
        %p146 = pneg %p99
      $region22: #{conv_sequence_forward.3} parent=11 // pred_check_branch
        %148 = sbr.rel (%p146) target = $region24
      $region23: #{conv_sequence_forward.3} parent=11 // pred_region
        _
      $region24: #{conv_sequence_forward.3} parent=11 // pred_fallthru
        _
    $region12: #{conv_sequence_forward.3} parent=5 // pred_fallthru
      _
    %p149 = scmp.lt.s32.totalorder %s10, 2
    // Predicated region
    $region25: #{conv_sequence_forward.3} parent=5 // pred_check
      %p150 = pneg %p149
    $region26: #{conv_sequence_forward.3} parent=5 // pred_check_branch
      %152 = sbr.rel (%p150) target = $region28
    $region27: #{conv_sequence_forward.3} parent=5 // pred_region
      // Predicated region
      $region29: #{conv_sequence_forward.3} parent=27 // pred_check
        %p153 = pneg %p51
      $region30: #{conv_sequence_forward.3} parent=27 // pred_check_branch
        %155 = sbr.rel (%p153) target = $region32
      $region31: #{conv_sequence_forward.3} parent=27 // pred_region
        %p156 = scmp.lt.s32.totalorder %s10, 1
        %s157 = scalar_select %p156, %s10, 1
        %s158 = smul.addr %s157, 3
        %s159 = smul.addr %s158, 4
        %s160 = scalar_lea.vmem %s1, %s159
      $region32: #{conv_sequence_forward.3} parent=27 // pred_fallthru
        _
    $region28: #{conv_sequence_forward.3} parent=5 // pred_fallthru
      _
    %p161 = scmp.le.s32.totalorder 1, %s10
    %p162 = scmp.lt.s32.totalorder %s10, 3
    %p163 = pnand %p161, %p162
    %p164 = pneg %p163
    // Predicated region
    $region33: #{conv_sequence_forward.3} parent=5 // pred_check
      _
    $region34: #{conv_sequence_forward.3} parent=5 // pred_check_branch
      %166 = sbr.rel (%p163) target = $region36
    $region35: #{conv_sequence_forward.3} parent=5 // pred_region
      %s167 = ssub.s32 %s10, 1
      %p168 = pneg %p31
      %p169 = pneg %p28
      %p170 = scmp.lt.s32.totalorder %s15, 1
      %s171 = scalar_select %p170, %s15, 1
      %s172 = smul.addr %s171, 3
      %s173 = smul.addr %s172, 4
      %s174 = scalar_lea.vmem %s1, %s173
      %p175 = pneg %p57
      %p176 = pneg %p54
      %p177 = pneg %p78
      %p178 = pneg %p75
      %p179 = pneg %p99
      %p180 = pneg %p96
      %p181 = pneg %p125
      %p182 = pneg %p122
      %p183 = scmp.lt.s32.totalorder %s15, 1
      %s184 = scalar_select %p183, %s15, 1
      %s185 = smul.addr %s184, 3
      %s186 = smul.addr %s185, 8
      %s187 = scalar_lea.vmem %s4, %s186
      %p188 = scmp.lt.s32.totalorder %s15, 1
      %s189 = scalar_select %p188, %s15, 1
      %s190 = smul.addr %s189, 3
      %s191 = smul.addr %s190, 4
      %s192 = scalar_lea.vmem %s1, %s191
      %p193 = scmp.lt.s32.totalorder %s15, 1
      %s194 = scalar_select %p193, %s15, 1
      %s195 = smul.addr %s194, 3
      %s196 = smul.addr %s195, 8
      %s197 = scalar_lea.vmem %s4, %s196
      %v199 = vld [vmem:[%s192] sm:$0xff]
      %v200 = vld [vmem:[%s192 + $0x8] sm:$0xf]
      %v202 = vcombine.high %v199, %v199
      %v204 = vpack.c.bf16 %v199, %v199
      %v205 = vpack.c.bf16 %v202, %v202
      %v206 = vpack.c.bf16 %v200, %v200
      %v207 = vld [vmem:[%s2] sm:$0xf]
      %s208 = scalar_lea.vmem %s2, 4
      %v209 = vld [vmem:[%s208] sm:$0xf]
      %213 = vrot.lane.b32.xlu0 %v204, 127
      %v214 = vpop.permute.xlu0 %213
      %215 = vrot.lane.b32.xlu0 %v205, 127
      %v216 = vpop.permute.xlu0 %215
      %217 = vrot.lane.b32.xlu0 %v206, 127
      %v218 = vpop.permute.xlu0 %217
      %vm219 = vcmask 1039360
      %v220 = vsel %vm219, %v214, %v216
      %v221 = vsel %vm219, %v216, %v218
      %vm222 = vcmask 31744
      %v224 = vsel %vm222, %v209, 0
      %vm226 = vcmask 1041408
      %v228 = vsel %vm226, %v220, 0
      %v231 = vsel %vm226, %v221, 0
      %v234 = vsel %vm226, %v218, 0
      %236 = vmatprep.subr.bf16.mxu0 0
      %237 = vmatpush1.bf16.msra.mxu0 0
      %238 = vmatprep.subr.bf16.mxu0 0
      %239 = vmatpush1.bf16.msra.mxu0 0
      %240 = vmatprep.subr.bf16.mxu0 0
      %241 = vmatpush1.bf16.msra.mxu0 0
      %242 = vmatprep.subr.bf16.mxu0 0
      %243 = vmatpush1.bf16.msra.mxu0 0
      %244 = vmatprep.subr.bf16.mxu0 0
      %245 = vmatpush1.bf16.msra.mxu0 0
      %246 = vmatprep.subr.bf16.mxu0 0
      %247 = vmatpush1.bf16.msra.mxu0 0
      %248 = vmatprep.subr.bf16.mxu0 0
      %249 = vmatpush1.bf16.msra.mxu0 0
      %250 = vmatprep.subr.bf16.mxu0 %v231
      %251 = vmatpush1.bf16.msra.mxu0 %v228
      %252 = vmatprep.subr.bf16.mxu0 0
      %253 = vmatpush2.bf16.msra.mxu0 0
      %254 = vmatprep.subr.bf16.mxu0 0
      %255 = vmatpush2.bf16.msra.mxu0 0
      %256 = vmatprep.subr.bf16.mxu0 0
      %257 = vmatpush2.bf16.msra.mxu0 0
      %258 = vmatprep.subr.bf16.mxu0 0
      %259 = vmatpush2.bf16.msra.mxu0 0
      %260 = vmatprep.subr.bf16.mxu0 0
      %261 = vmatpush2.bf16.msra.mxu0 0
      %262 = vmatprep.subr.bf16.mxu0 0
      %263 = vmatpush2.bf16.msra.mxu0 0
      %264 = vmatprep.subr.bf16.mxu0 0
      %265 = vmatpush2.bf16.msra.mxu0 0
      %266 = vmatprep.subr.bf16.mxu0 0
      %267 = vmatpush2.bf16.msra.mxu0 0
      %268 = vmatprep.mubr.bf16.mxu0 0
      %269 = vmatmul.mubr.bf16.gmra.mxu0 %v224
      %v270 = vpop.f32.mrf.mxu0
      %v271 = vadd.f32 0.0, %v270
      %v272 = vpop.f32.mrf.mxu0
      %v273 = vadd.f32 0.0, %v272
      %v274 = vpop.f32.mrf.mxu0
      %v275 = vpop.f32.mrf.mxu0
      %276 = vdwg.mxu0
      %277 = vmatprep.subr.bf16.mxu0 0
      %278 = vmatpush1.bf16.msra.mxu0 0
      %279 = vmatprep.subr.bf16.mxu0 0
      %280 = vmatpush1.bf16.msra.mxu0 0
      %281 = vmatprep.subr.bf16.mxu0 0
      %282 = vmatpush1.bf16.msra.mxu0 0
      %283 = vmatprep.subr.bf16.mxu0 0
      %284 = vmatpush1.bf16.msra.mxu0 0
      %285 = vmatprep.subr.bf16.mxu0 0
      %286 = vmatpush1.bf16.msra.mxu0 0
      %287 = vmatprep.subr.bf16.mxu0 0
      %288 = vmatpush1.bf16.msra.mxu0 0
      %289 = vmatprep.subr.bf16.mxu0 0
      %290 = vmatpush1.bf16.msra.mxu0 0
      %291 = vmatprep.subr.bf16.mxu0 0
      %292 = vmatpush1.bf16.msra.mxu0 %v234
      %293 = vmatprep.subr.bf16.mxu0 0
      %294 = vmatpush2.bf16.msra.mxu0 0
      %295 = vmatprep.subr.bf16.mxu0 0
      %296 = vmatpush2.bf16.msra.mxu0 0
      %297 = vmatprep.subr.bf16.mxu0 0
      %298 = vmatpush2.bf16.msra.mxu0 0
      %299 = vmatprep.subr.bf16.mxu0 0
      %300 = vmatpush2.bf16.msra.mxu0 0
      %301 = vmatprep.subr.bf16.mxu0 0
      %302 = vmatpush2.bf16.msra.mxu0 0
      %303 = vmatprep.subr.bf16.mxu0 0
      %304 = vmatpush2.bf16.msra.mxu0 0
      %305 = vmatprep.subr.bf16.mxu0 0
      %306 = vmatpush2.bf16.msra.mxu0 0
      %307 = vmatprep.subr.bf16.mxu0 0
      %308 = vmatpush2.bf16.msra.mxu0 0
      %309 = vmatprep.mubr.bf16.mxu0 0
      %310 = vmatmul.mubr.bf16.gmra.mxu0 %v224
      %v311 = vpop.f32.mrf.mxu0
      %v312 = vadd.f32 0.0, %v311
      %v313 = vpop.f32.mrf.mxu0
      %v314 = vpop.f32.mrf.mxu0
      %v315 = vpop.f32.mrf.mxu0
      %316 = vdwg.mxu0
      %v318 = vsel %vm222, %v207, 0
      %v321 = vsel %vm226, %v204, 0
      %v324 = vsel %vm226, %v205, 0
      %v327 = vsel %vm226, %v206, 0
      %329 = vmatprep.subr.bf16.mxu0 0
      %330 = vmatpush1.bf16.msra.mxu0 0
      %331 = vmatprep.subr.bf16.mxu0 0
      %332 = vmatpush1.bf16.msra.mxu0 0
      %333 = vmatprep.subr.bf16.mxu0 0
      %334 = vmatpush1.bf16.msra.mxu0 0
      %335 = vmatprep.subr.bf16.mxu0 0
      %336 = vmatpush1.bf16.msra.mxu0 0
      %337 = vmatprep.subr.bf16.mxu0 0
      %338 = vmatpush1.bf16.msra.mxu0 0
      %339 = vmatprep.subr.bf16.mxu0 0
      %340 = vmatpush1.bf16.msra.mxu0 0
      %341 = vmatprep.subr.bf16.mxu0 0
      %342 = vmatpush1.bf16.msra.mxu0 0
      %343 = vmatprep.subr.bf16.mxu0 %v324
      %344 = vmatpush1.bf16.msra.mxu0 %v321
      %345 = vmatprep.subr.bf16.mxu0 0
      %346 = vmatpush2.bf16.msra.mxu0 0
      %347 = vmatprep.subr.bf16.mxu0 0
      %348 = vmatpush2.bf16.msra.mxu0 0
      %349 = vmatprep.subr.bf16.mxu0 0
      %350 = vmatpush2.bf16.msra.mxu0 0
      %351 = vmatprep.subr.bf16.mxu0 0
      %352 = vmatpush2.bf16.msra.mxu0 0
      %353 = vmatprep.subr.bf16.mxu0 0
      %354 = vmatpush2.bf16.msra.mxu0 0
      %355 = vmatprep.subr.bf16.mxu0 0
      %356 = vmatpush2.bf16.msra.mxu0 0
      %357 = vmatprep.subr.bf16.mxu0 0
      %358 = vmatpush2.bf16.msra.mxu0 0
      %359 = vmatprep.subr.bf16.mxu0 0
      %360 = vmatpush2.bf16.msra.mxu0 0
      %361 = vmatprep.mubr.bf16.mxu0 0
      %362 = vmatmul.mubr.bf16.gmra.mxu0 %v318
      %v363 = vpop.f32.mrf.mxu0
      %v364 = vadd.f32 %v271, %v363
      %v365 = vpop.f32.mrf.mxu0
      %v366 = vadd.f32 %v273, %v365
      %v367 = vpop.f32.mrf.mxu0
      %v368 = vpop.f32.mrf.mxu0
      %369 = vdwg.mxu0
      %370 = vmatprep.subr.bf16.mxu0 0
      %371 = vmatpush1.bf16.msra.mxu0 0
      %372 = vmatprep.subr.bf16.mxu0 0
      %373 = vmatpush1.bf16.msra.mxu0 0
      %374 = vmatprep.subr.bf16.mxu0 0
      %375 = vmatpush1.bf16.msra.mxu0 0
      %376 = vmatprep.subr.bf16.mxu0 0
      %377 = vmatpush1.bf16.msra.mxu0 0
      %378 = vmatprep.subr.bf16.mxu0 0
      %379 = vmatpush1.bf16.msra.mxu0 0
      %380 = vmatprep.subr.bf16.mxu0 0
      %381 = vmatpush1.bf16.msra.mxu0 0
      %382 = vmatprep.subr.bf16.mxu0 0
      %383 = vmatpush1.bf16.msra.mxu0 0
      %384 = vmatprep.subr.bf16.mxu0 0
      %385 = vmatpush1.bf16.msra.mxu0 %v327
      %386 = vmatprep.subr.bf16.mxu0 0
      %387 = vmatpush2.bf16.msra.mxu0 0
      %388 = vmatprep.subr.bf16.mxu0 0
      %389 = vmatpush2.bf16.msra.mxu0 0
      %390 = vmatprep.subr.bf16.mxu0 0
      %391 = vmatpush2.bf16.msra.mxu0 0
      %392 = vmatprep.subr.bf16.mxu0 0
      %393 = vmatpush2.bf16.msra.mxu0 0
      %394 = vmatprep.subr.bf16.mxu0 0
      %395 = vmatpush2.bf16.msra.mxu0 0
      %396 = vmatprep.subr.bf16.mxu0 0
      %397 = vmatpush2.bf16.msra.mxu0 0
      %398 = vmatprep.subr.bf16.mxu0 0
      %399 = vmatpush2.bf16.msra.mxu0 0
      %400 = vmatprep.subr.bf16.mxu0 0
      %401 = vmatpush2.bf16.msra.mxu0 0
      %402 = vmatprep.mubr.bf16.mxu0 0
      %403 = vmatmul.mubr.bf16.gmra.mxu0 %v318
      %v404 = vpop.f32.mrf.mxu0
      %v405 = vadd.f32 %v312, %v404
      %v406 = vpop.f32.mrf.mxu0
      %v407 = vpop.f32.mrf.mxu0
      %v408 = vpop.f32.mrf.mxu0
      %409 = vdwg.mxu0
      %s410 = scalar_lea.vmem %s2, 8
      %v411 = vld [vmem:[%s410] sm:$0xf]
      %412 = vrot.lane.b32.xlu0 %v204, 126
      %v413 = vpop.permute.xlu0 %412
      %414 = vrot.lane.b32.xlu0 %v205, 126
      %v415 = vpop.permute.xlu0 %414
      %416 = vrot.lane.b32.xlu0 %v206, 126
      %v417 = vpop.permute.xlu0 %416
      %vm418 = vcmask 1031168
      %v419 = vsel %vm418, %v413, %v415
      %v420 = vsel %vm418, %v415, %v417
      %v422 = vsel %vm222, %v411, 0
      %v425 = vsel %vm226, %v419, 0
      %v428 = vsel %vm226, %v420, 0
      %v431 = vsel %vm226, %v417, 0
      %433 = vmatprep.subr.bf16.mxu0 0
      %434 = vmatpush1.bf16.msra.mxu0 0
      %435 = vmatprep.subr.bf16.mxu0 0
      %436 = vmatpush1.bf16.msra.mxu0 0
      %437 = vmatprep.subr.bf16.mxu0 0
      %438 = vmatpush1.bf16.msra.mxu0 0
      %439 = vmatprep.subr.bf16.mxu0 0
      %440 = vmatpush1.bf16.msra.mxu0 0
      %441 = vmatprep.subr.bf16.mxu0 0
      %442 = vmatpush1.bf16.msra.mxu0 0
      %443 = vmatprep.subr.bf16.mxu0 0
      %444 = vmatpush1.bf16.msra.mxu0 0
      %445 = vmatprep.subr.bf16.mxu0 0
      %446 = vmatpush1.bf16.msra.mxu0 0
      %447 = vmatprep.subr.bf16.mxu0 %v428
      %448 = vmatpush1.bf16.msra.mxu0 %v425
      %449 = vmatprep.subr.bf16.mxu0 0
      %450 = vmatpush2.bf16.msra.mxu0 0
      %451 = vmatprep.subr.bf16.mxu0 0
      %452 = vmatpush2.bf16.msra.mxu0 0
      %453 = vmatprep.subr.bf16.mxu0 0
      %454 = vmatpush2.bf16.msra.mxu0 0
      %455 = vmatprep.subr.bf16.mxu0 0
      %456 = vmatpush2.bf16.msra.mxu0 0
      %457 = vmatprep.subr.bf16.mxu0 0
      %458 = vmatpush2.bf16.msra.mxu0 0
      %459 = vmatprep.subr.bf16.mxu0 0
      %460 = vmatpush2.bf16.msra.mxu0 0
      %461 = vmatprep.subr.bf16.mxu0 0
      %462 = vmatpush2.bf16.msra.mxu0 0
      %463 = vmatprep.subr.bf16.mxu0 0
      %464 = vmatpush2.bf16.msra.mxu0 0
      %465 = vmatprep.mubr.bf16.mxu0 0
      %466 = vmatmul.mubr.bf16.gmra.mxu0 %v422
      %v467 = vpop.f32.mrf.mxu0
      %v468 = vadd.f32 0.0, %v467
      %v469 = vpop.f32.mrf.mxu0
      %v470 = vadd.f32 0.0, %v469
      %v471 = vpop.f32.mrf.mxu0
      %v472 = vpop.f32.mrf.mxu0
      %473 = vdwg.mxu0
      %474 = vmatprep.subr.bf16.mxu0 0
      %475 = vmatpush1.bf16.msra.mxu0 0
      %476 = vmatprep.subr.bf16.mxu0 0
      %477 = vmatpush1.bf16.msra.mxu0 0
      %478 = vmatprep.subr.bf16.mxu0 0
      %479 = vmatpush1.bf16.msra.mxu0 0
      %480 = vmatprep.subr.bf16.mxu0 0
      %481 = vmatpush1.bf16.msra.mxu0 0
      %482 = vmatprep.subr.bf16.mxu0 0
      %483 = vmatpush1.bf16.msra.mxu0 0
      %484 = vmatprep.subr.bf16.mxu0 0
      %485 = vmatpush1.bf16.msra.mxu0 0
      %486 = vmatprep.subr.bf16.mxu0 0
      %487 = vmatpush1.bf16.msra.mxu0 0
      %488 = vmatprep.subr.bf16.mxu0 0
      %489 = vmatpush1.bf16.msra.mxu0 %v431
      %490 = vmatprep.subr.bf16.mxu0 0
      %491 = vmatpush2.bf16.msra.mxu0 0
      %492 = vmatprep.subr.bf16.mxu0 0
      %493 = vmatpush2.bf16.msra.mxu0 0
      %494 = vmatprep.subr.bf16.mxu0 0
      %495 = vmatpush2.bf16.msra.mxu0 0
      %496 = vmatprep.subr.bf16.mxu0 0
      %497 = vmatpush2.bf16.msra.mxu0 0
      %498 = vmatprep.subr.bf16.mxu0 0
      %499 = vmatpush2.bf16.msra.mxu0 0
      %500 = vmatprep.subr.bf16.mxu0 0
      %501 = vmatpush2.bf16.msra.mxu0 0
      %502 = vmatprep.subr.bf16.mxu0 0
      %503 = vmatpush2.bf16.msra.mxu0 0
      %504 = vmatprep.subr.bf16.mxu0 0
      %505 = vmatpush2.bf16.msra.mxu0 0
      %506 = vmatprep.mubr.bf16.mxu0 0
      %507 = vmatmul.mubr.bf16.gmra.mxu0 %v422
      %v508 = vpop.f32.mrf.mxu0
      %v509 = vadd.f32 0.0, %v508
      %v510 = vpop.f32.mrf.mxu0
      %v511 = vpop.f32.mrf.mxu0
      %v512 = vpop.f32.mrf.mxu0
      %513 = vdwg.mxu0
      %v514 = vadd.f32 %v364, %v468
      %v515 = vadd.f32 %v366, %v470
      %v516 = vadd.f32 %v405, %v509
      %s517 = scalar_lea.vmem %s2, 12
      %v518 = vld [vmem:[%s517] sm:$0xf]
      %519 = vrot.lane.b32.xlu0 %v204, 110
      %v520 = vpop.permute.xlu0 %519
      %521 = vrot.lane.b32.xlu0 %v205, 110
      %v522 = vpop.permute.xlu0 %521
      %523 = vrot.lane.b32.xlu0 %v206, 110
      %v524 = vpop.permute.xlu0 %523
      %vm525 = vcmask 900096
      %v526 = vsel %vm525, %v520, %v522
      %v527 = vsel %vm525, %v522, %v524
      %v529 = vsel %vm222, %v518, 0
      %v532 = vsel %vm226, %v526, 0
      %v535 = vsel %vm226, %v527, 0
      %v538 = vsel %vm226, %v524, 0
      %540 = vmatprep.subr.bf16.mxu0 0
      %541 = vmatpush1.bf16.msra.mxu0 0
      %542 = vmatprep.subr.bf16.mxu0 0
      %543 = vmatpush1.bf16.msra.mxu0 0
      %544 = vmatprep.subr.bf16.mxu0 0
      %545 = vmatpush1.bf16.msra.mxu0 0
      %546 = vmatprep.subr.bf16.mxu0 0
      %547 = vmatpush1.bf16.msra.mxu0 0
      %548 = vmatprep.subr.bf16.mxu0 0
      %549 = vmatpush1.bf16.msra.mxu0 0
      %550 = vmatprep.subr.bf16.mxu0 0
      %551 = vmatpush1.bf16.msra.mxu0 0
      %552 = vmatprep.subr.bf16.mxu0 0
      %553 = vmatpush1.bf16.msra.mxu0 0
      %554 = vmatprep.subr.bf16.mxu0 %v535
      %555 = vmatpush1.bf16.msra.mxu0 %v532
      %556 = vmatprep.subr.bf16.mxu0 0
      %557 = vmatpush2.bf16.msra.mxu0 0
      %558 = vmatprep.subr.bf16.mxu0 0
      %559 = vmatpush2.bf16.msra.mxu0 0
      %560 = vmatprep.subr.bf16.mxu0 0
      %561 = vmatpush2.bf16.msra.mxu0 0
      %562 = vmatprep.subr.bf16.mxu0 0
      %563 = vmatpush2.bf16.msra.mxu0 0
      %564 = vmatprep.subr.bf16.mxu0 0
      %565 = vmatpush2.bf16.msra.mxu0 0
      %566 = vmatprep.subr.bf16.mxu0 0
      %567 = vmatpush2.bf16.msra.mxu0 0
      %568 = vmatprep.subr.bf16.mxu0 0
      %569 = vmatpush2.bf16.msra.mxu0 0
      %570 = vmatprep.subr.bf16.mxu0 0
      %571 = vmatpush2.bf16.msra.mxu0 0
      %572 = vmatprep.mubr.bf16.mxu0 0
      %573 = vmatmul.mubr.bf16.gmra.mxu0 %v529
      %v574 = vpop.f32.mrf.mxu0
      %v575 = vadd.f32 0.0, %v574
      %v576 = vpop.f32.mrf.mxu0
      %v577 = vadd.f32 0.0, %v576
      %v578 = vpop.f32.mrf.mxu0
      %v579 = vpop.f32.mrf.mxu0
      %580 = vdwg.mxu0
      %581 = vmatprep.subr.bf16.mxu0 0
      %582 = vmatpush1.bf16.msra.mxu0 0
      %583 = vmatprep.subr.bf16.mxu0 0
      %584 = vmatpush1.bf16.msra.mxu0 0
      %585 = vmatprep.subr.bf16.mxu0 0
      %586 = vmatpush1.bf16.msra.mxu0 0
      %587 = vmatprep.subr.bf16.mxu0 0
      %588 = vmatpush1.bf16.msra.mxu0 0
      %589 = vmatprep.subr.bf16.mxu0 0
      %590 = vmatpush1.bf16.msra.mxu0 0
      %591 = vmatprep.subr.bf16.mxu0 0
      %592 = vmatpush1.bf16.msra.mxu0 0
      %593 = vmatprep.subr.bf16.mxu0 0
      %594 = vmatpush1.bf16.msra.mxu0 0
      %595 = vmatprep.subr.bf16.mxu0 0
      %596 = vmatpush1.bf16.msra.mxu0 %v538
      %597 = vmatprep.subr.bf16.mxu0 0
      %598 = vmatpush2.bf16.msra.mxu0 0
      %599 = vmatprep.subr.bf16.mxu0 0
      %600 = vmatpush2.bf16.msra.mxu0 0
      %601 = vmatprep.subr.bf16.mxu0 0
      %602 = vmatpush2.bf16.msra.mxu0 0
      %603 = vmatprep.subr.bf16.mxu0 0
      %604 = vmatpush2.bf16.msra.mxu0 0
      %605 = vmatprep.subr.bf16.mxu0 0
      %606 = vmatpush2.bf16.msra.mxu0 0
      %607 = vmatprep.subr.bf16.mxu0 0
      %608 = vmatpush2.bf16.msra.mxu0 0
      %609 = vmatprep.subr.bf16.mxu0 0
      %610 = vmatpush2.bf16.msra.mxu0 0
      %611 = vmatprep.subr.bf16.mxu0 0
      %612 = vmatpush2.bf16.msra.mxu0 0
      %613 = vmatprep.mubr.bf16.mxu0 0
      %614 = vmatmul.mubr.bf16.gmra.mxu0 %v529
      %v615 = vpop.f32.mrf.mxu0
      %v616 = vadd.f32 0.0, %v615
      %v617 = vpop.f32.mrf.mxu0
      %v618 = vpop.f32.mrf.mxu0
      %v619 = vpop.f32.mrf.mxu0
      %620 = vdwg.mxu0
      %v621 = vadd.f32 %v514, %v575
      %v622 = vadd.f32 %v515, %v577
      %v623 = vadd.f32 %v516, %v616
      %s624 = scalar_lea.vmem %s2, 16
      %v625 = vld [vmem:[%s624] sm:$0xf]
      %626 = vrot.lane.b32.xlu0 %v204, 109
      %v627 = vpop.permute.xlu0 %626
      %628 = vrot.lane.b32.xlu0 %v205, 109
      %v629 = vpop.permute.xlu0 %628
      %630 = vrot.lane.b32.xlu0 %v206, 109
      %v631 = vpop.permute.xlu0 %630
      %vm632 = vcmask 891904
      %v633 = vsel %vm632, %v627, %v629
      %v634 = vsel %vm632, %v629, %v631
      %v636 = vsel %vm222, %v625, 0
      %v639 = vsel %vm226, %v633, 0
      %v642 = vsel %vm226, %v634, 0
      %v645 = vsel %vm226, %v631, 0
      %647 = vmatprep.subr.bf16.mxu0 0
      %648 = vmatpush1.bf16.msra.mxu0 0
      %649 = vmatprep.subr.bf16.mxu0 0
      %650 = vmatpush1.bf16.msra.mxu0 0
      %651 = vmatprep.subr.bf16.mxu0 0
      %652 = vmatpush1.bf16.msra.mxu0 0
      %653 = vmatprep.subr.bf16.mxu0 0
      %654 = vmatpush1.bf16.msra.mxu0 0
      %655 = vmatprep.subr.bf16.mxu0 0
      %656 = vmatpush1.bf16.msra.mxu0 0
      %657 = vmatprep.subr.bf16.mxu0 0
      %658 = vmatpush1.bf16.msra.mxu0 0
      %659 = vmatprep.subr.bf16.mxu0 0
      %660 = vmatpush1.bf16.msra.mxu0 0
      %661 = vmatprep.subr.bf16.mxu0 %v642
      %662 = vmatpush1.bf16.msra.mxu0 %v639
      %663 = vmatprep.subr.bf16.mxu0 0
      %664 = vmatpush2.bf16.msra.mxu0 0
      %665 = vmatprep.subr.bf16.mxu0 0
      %666 = vmatpush2.bf16.msra.mxu0 0
      %667 = vmatprep.subr.bf16.mxu0 0
      %668 = vmatpush2.bf16.msra.mxu0 0
      %669 = vmatprep.subr.bf16.mxu0 0
      %670 = vmatpush2.bf16.msra.mxu0 0
      %671 = vmatprep.subr.bf16.mxu0 0
      %672 = vmatpush2.bf16.msra.mxu0 0
      %673 = vmatprep.subr.bf16.mxu0 0
      %674 = vmatpush2.bf16.msra.mxu0 0
      %675 = vmatprep.subr.bf16.mxu0 0
      %676 = vmatpush2.bf16.msra.mxu0 0
      %677 = vmatprep.subr.bf16.mxu0 0
      %678 = vmatpush2.bf16.msra.mxu0 0
      %679 = vmatprep.mubr.bf16.mxu0 0
      %680 = vmatmul.mubr.bf16.gmra.mxu0 %v636
      %v681 = vpop.f32.mrf.mxu0
      %v682 = vadd.f32 0.0, %v681
      %v683 = vpop.f32.mrf.mxu0
      %v684 = vadd.f32 0.0, %v683
      %v685 = vpop.f32.mrf.mxu0
      %v686 = vpop.f32.mrf.mxu0
      %687 = vdwg.mxu0
      %688 = vmatprep.subr.bf16.mxu0 0
      %689 = vmatpush1.bf16.msra.mxu0 0
      %690 = vmatprep.subr.bf16.mxu0 0
      %691 = vmatpush1.bf16.msra.mxu0 0
      %692 = vmatprep.subr.bf16.mxu0 0
      %693 = vmatpush1.bf16.msra.mxu0 0
      %694 = vmatprep.subr.bf16.mxu0 0
      %695 = vmatpush1.bf16.msra.mxu0 0
      %696 = vmatprep.subr.bf16.mxu0 0
      %697 = vmatpush1.bf16.msra.mxu0 0
      %698 = vmatprep.subr.bf16.mxu0 0
      %699 = vmatpush1.bf16.msra.mxu0 0
      %700 = vmatprep.subr.bf16.mxu0 0
      %701 = vmatpush1.bf16.msra.mxu0 0
      %702 = vmatprep.subr.bf16.mxu0 0
      %703 = vmatpush1.bf16.msra.mxu0 %v645
      %704 = vmatprep.subr.bf16.mxu0 0
      %705 = vmatpush2.bf16.msra.mxu0 0
      %706 = vmatprep.subr.bf16.mxu0 0
      %707 = vmatpush2.bf16.msra.mxu0 0
      %708 = vmatprep.subr.bf16.mxu0 0
      %709 = vmatpush2.bf16.msra.mxu0 0
      %710 = vmatprep.subr.bf16.mxu0 0
      %711 = vmatpush2.bf16.msra.mxu0 0
      %712 = vmatprep.subr.bf16.mxu0 0
      %713 = vmatpush2.bf16.msra.mxu0 0
      %714 = vmatprep.subr.bf16.mxu0 0
      %715 = vmatpush2.bf16.msra.mxu0 0
      %716 = vmatprep.subr.bf16.mxu0 0
      %717 = vmatpush2.bf16.msra.mxu0 0
      %718 = vmatprep.subr.bf16.mxu0 0
      %719 = vmatpush2.bf16.msra.mxu0 0
      %720 = vmatprep.mubr.bf16.mxu0 0
      %721 = vmatmul.mubr.bf16.gmra.mxu0 %v636
      %v722 = vpop.f32.mrf.mxu0
      %v723 = vadd.f32 0.0, %v722
      %v724 = vpop.f32.mrf.mxu0
      %v725 = vpop.f32.mrf.mxu0
      %v726 = vpop.f32.mrf.mxu0
      %727 = vdwg.mxu0
      %v728 = vadd.f32 %v621, %v682
      %v729 = vadd.f32 %v622, %v684
      %v730 = vadd.f32 %v623, %v723
      %s731 = scalar_lea.vmem %s2, 20
      %v732 = vld [vmem:[%s731] sm:$0xf]
      %733 = vrot.lane.b32.xlu0 %v204, 108
      %v734 = vpop.permute.xlu0 %733
      %735 = vrot.lane.b32.xlu0 %v205, 108
      %v736 = vpop.permute.xlu0 %735
      %737 = vrot.lane.b32.xlu0 %v206, 108
      %v738 = vpop.permute.xlu0 %737
      %vm739 = vcmask 883712
      %v740 = vsel %vm739, %v734, %v736
      %v741 = vsel %vm739, %v736, %v738
      %v743 = vsel %vm222, %v732, 0
      %v746 = vsel %vm226, %v740, 0
      %v749 = vsel %vm226, %v741, 0
      %v752 = vsel %vm226, %v738, 0
      %754 = vmatprep.subr.bf16.mxu0 0
      %755 = vmatpush1.bf16.msra.mxu0 0
      %756 = vmatprep.subr.bf16.mxu0 0
      %757 = vmatpush1.bf16.msra.mxu0 0
      %758 = vmatprep.subr.bf16.mxu0 0
      %759 = vmatpush1.bf16.msra.mxu0 0
      %760 = vmatprep.subr.bf16.mxu0 0
      %761 = vmatpush1.bf16.msra.mxu0 0
      %762 = vmatprep.subr.bf16.mxu0 0
      %763 = vmatpush1.bf16.msra.mxu0 0
      %764 = vmatprep.subr.bf16.mxu0 0
      %765 = vmatpush1.bf16.msra.mxu0 0
      %766 = vmatprep.subr.bf16.mxu0 0
      %767 = vmatpush1.bf16.msra.mxu0 0
      %768 = vmatprep.subr.bf16.mxu0 %v749
      %769 = vmatpush1.bf16.msra.mxu0 %v746
      %770 = vmatprep.subr.bf16.mxu0 0
      %771 = vmatpush2.bf16.msra.mxu0 0
      %772 = vmatprep.subr.bf16.mxu0 0
      %773 = vmatpush2.bf16.msra.mxu0 0
      %774 = vmatprep.subr.bf16.mxu0 0
      %775 = vmatpush2.bf16.msra.mxu0 0
      %776 = vmatprep.subr.bf16.mxu0 0
      %777 = vmatpush2.bf16.msra.mxu0 0
      %778 = vmatprep.subr.bf16.mxu0 0
      %779 = vmatpush2.bf16.msra.mxu0 0
      %780 = vmatprep.subr.bf16.mxu0 0
      %781 = vmatpush2.bf16.msra.mxu0 0
      %782 = vmatprep.subr.bf16.mxu0 0
      %783 = vmatpush2.bf16.msra.mxu0 0
      %784 = vmatprep.subr.bf16.mxu0 0
      %785 = vmatpush2.bf16.msra.mxu0 0
      %786 = vmatprep.mubr.bf16.mxu0 0
      %787 = vmatmul.mubr.bf16.gmra.mxu0 %v743
      %v788 = vpop.f32.mrf.mxu0
      %v789 = vadd.f32 0.0, %v788
      %v790 = vpop.f32.mrf.mxu0
      %v791 = vadd.f32 0.0, %v790
      %v792 = vpop.f32.mrf.mxu0
      %v793 = vpop.f32.mrf.mxu0
      %794 = vdwg.mxu0
      %795 = vmatprep.subr.bf16.mxu0 0
      %796 = vmatpush1.bf16.msra.mxu0 0
      %797 = vmatprep.subr.bf16.mxu0 0
      %798 = vmatpush1.bf16.msra.mxu0 0
      %799 = vmatprep.subr.bf16.mxu0 0
      %800 = vmatpush1.bf16.msra.mxu0 0
      %801 = vmatprep.subr.bf16.mxu0 0
      %802 = vmatpush1.bf16.msra.mxu0 0
      %803 = vmatprep.subr.bf16.mxu0 0
      %804 = vmatpush1.bf16.msra.mxu0 0
      %805 = vmatprep.subr.bf16.mxu0 0
      %806 = vmatpush1.bf16.msra.mxu0 0
      %807 = vmatprep.subr.bf16.mxu0 0
      %808 = vmatpush1.bf16.msra.mxu0 0
      %809 = vmatprep.subr.bf16.mxu0 0
      %810 = vmatpush1.bf16.msra.mxu0 %v752
      %811 = vmatprep.subr.bf16.mxu0 0
      %812 = vmatpush2.bf16.msra.mxu0 0
      %813 = vmatprep.subr.bf16.mxu0 0
      %814 = vmatpush2.bf16.msra.mxu0 0
      %815 = vmatprep.subr.bf16.mxu0 0
      %816 = vmatpush2.bf16.msra.mxu0 0
      %817 = vmatprep.subr.bf16.mxu0 0
      %818 = vmatpush2.bf16.msra.mxu0 0
      %819 = vmatprep.subr.bf16.mxu0 0
      %820 = vmatpush2.bf16.msra.mxu0 0
      %821 = vmatprep.subr.bf16.mxu0 0
      %822 = vmatpush2.bf16.msra.mxu0 0
      %823 = vmatprep.subr.bf16.mxu0 0
      %824 = vmatpush2.bf16.msra.mxu0 0
      %825 = vmatprep.subr.bf16.mxu0 0
      %826 = vmatpush2.bf16.msra.mxu0 0
      %827 = vmatprep.mubr.bf16.mxu0 0
      %828 = vmatmul.mubr.bf16.gmra.mxu0 %v743
      %v829 = vpop.f32.mrf.mxu0
      %v830 = vadd.f32 0.0, %v829
      %v831 = vpop.f32.mrf.mxu0
      %v832 = vpop.f32.mrf.mxu0
      %v833 = vpop.f32.mrf.mxu0
      %834 = vdwg.mxu0
      %v835 = vadd.f32 %v728, %v789
      %v836 = vadd.f32 %v729, %v791
      %v837 = vadd.f32 %v730, %v830
      %s838 = scalar_lea.vmem %s2, 24
      %v839 = vld [vmem:[%s838] sm:$0xf]
      %840 = vrot.lane.b32.xlu0 %v204, 92
      %v841 = vpop.permute.xlu0 %840
      %842 = vrot.lane.b32.xlu0 %v205, 92
      %v843 = vpop.permute.xlu0 %842
      %844 = vrot.lane.b32.xlu0 %v206, 92
      %v845 = vpop.permute.xlu0 %844
      %vm846 = vcmask 752640
      %v847 = vsel %vm846, %v841, %v843
      %v848 = vsel %vm846, %v843, %v845
      %v850 = vsel %vm222, %v839, 0
      %v853 = vsel %vm226, %v847, 0
      %v856 = vsel %vm226, %v848, 0
      %v859 = vsel %vm226, %v845, 0
      %861 = vmatprep.subr.bf16.mxu0 0
      %862 = vmatpush1.bf16.msra.mxu0 0
      %863 = vmatprep.subr.bf16.mxu0 0
      %864 = vmatpush1.bf16.msra.mxu0 0
      %865 = vmatprep.subr.bf16.mxu0 0
      %866 = vmatpush1.bf16.msra.mxu0 0
      %867 = vmatprep.subr.bf16.mxu0 0
      %868 = vmatpush1.bf16.msra.mxu0 0
      %869 = vmatprep.subr.bf16.mxu0 0
      %870 = vmatpush1.bf16.msra.mxu0 0
      %871 = vmatprep.subr.bf16.mxu0 0
      %872 = vmatpush1.bf16.msra.mxu0 0
      %873 = vmatprep.subr.bf16.mxu0 0
      %874 = vmatpush1.bf16.msra.mxu0 0
      %875 = vmatprep.subr.bf16.mxu0 %v856
      %876 = vmatpush1.bf16.msra.mxu0 %v853
      %877 = vmatprep.subr.bf16.mxu0 0
      %878 = vmatpush2.bf16.msra.mxu0 0
      %879 = vmatprep.subr.bf16.mxu0 0
      %880 = vmatpush2.bf16.msra.mxu0 0
      %881 = vmatprep.subr.bf16.mxu0 0
      %882 = vmatpush2.bf16.msra.mxu0 0
      %883 = vmatprep.subr.bf16.mxu0 0
      %884 = vmatpush2.bf16.msra.mxu0 0
      %885 = vmatprep.subr.bf16.mxu0 0
      %886 = vmatpush2.bf16.msra.mxu0 0
      %887 = vmatprep.subr.bf16.mxu0 0
      %888 = vmatpush2.bf16.msra.mxu0 0
      %889 = vmatprep.subr.bf16.mxu0 0
      %890 = vmatpush2.bf16.msra.mxu0 0
      %891 = vmatprep.subr.bf16.mxu0 0
      %892 = vmatpush2.bf16.msra.mxu0 0
      %893 = vmatprep.mubr.bf16.mxu0 0
      %894 = vmatmul.mubr.bf16.gmra.mxu0 %v850
      %v895 = vpop.f32.mrf.mxu0
      %v896 = vadd.f32 0.0, %v895
      %v897 = vpop.f32.mrf.mxu0
      %v898 = vadd.f32 0.0, %v897
      %v899 = vpop.f32.mrf.mxu0
      %v900 = vpop.f32.mrf.mxu0
      %901 = vdwg.mxu0
      %902 = vmatprep.subr.bf16.mxu0 0
      %903 = vmatpush1.bf16.msra.mxu0 0
      %904 = vmatprep.subr.bf16.mxu0 0
      %905 = vmatpush1.bf16.msra.mxu0 0
      %906 = vmatprep.subr.bf16.mxu0 0
      %907 = vmatpush1.bf16.msra.mxu0 0
      %908 = vmatprep.subr.bf16.mxu0 0
      %909 = vmatpush1.bf16.msra.mxu0 0
      %910 = vmatprep.subr.bf16.mxu0 0
      %911 = vmatpush1.bf16.msra.mxu0 0
      %912 = vmatprep.subr.bf16.mxu0 0
      %913 = vmatpush1.bf16.msra.mxu0 0
      %914 = vmatprep.subr.bf16.mxu0 0
      %915 = vmatpush1.bf16.msra.mxu0 0
      %916 = vmatprep.subr.bf16.mxu0 0
      %917 = vmatpush1.bf16.msra.mxu0 %v859
      %918 = vmatprep.subr.bf16.mxu0 0
      %919 = vmatpush2.bf16.msra.mxu0 0
      %920 = vmatprep.subr.bf16.mxu0 0
      %921 = vmatpush2.bf16.msra.mxu0 0
      %922 = vmatprep.subr.bf16.mxu0 0
      %923 = vmatpush2.bf16.msra.mxu0 0
      %924 = vmatprep.subr.bf16.mxu0 0
      %925 = vmatpush2.bf16.msra.mxu0 0
      %926 = vmatprep.subr.bf16.mxu0 0
      %927 = vmatpush2.bf16.msra.mxu0 0
      %928 = vmatprep.subr.bf16.mxu0 0
      %929 = vmatpush2.bf16.msra.mxu0 0
      %930 = vmatprep.subr.bf16.mxu0 0
      %931 = vmatpush2.bf16.msra.mxu0 0
      %932 = vmatprep.subr.bf16.mxu0 0
      %933 = vmatpush2.bf16.msra.mxu0 0
      %934 = vmatprep.mubr.bf16.mxu0 0
      %935 = vmatmul.mubr.bf16.gmra.mxu0 %v850
      %v936 = vpop.f32.mrf.mxu0
      %v937 = vadd.f32 0.0, %v936
      %v938 = vpop.f32.mrf.mxu0
      %v939 = vpop.f32.mrf.mxu0
      %v940 = vpop.f32.mrf.mxu0
      %941 = vdwg.mxu0
      %v942 = vadd.f32 %v835, %v896
      %v943 = vadd.f32 %v836, %v898
      %v944 = vadd.f32 %v837, %v937
      %s945 = scalar_lea.vmem %s2, 28
      %v946 = vld [vmem:[%s945] sm:$0xf]
      %947 = vrot.lane.b32.xlu0 %v204, 91
      %v948 = vpop.permute.xlu0 %947
      %949 = vrot.lane.b32.xlu0 %v205, 91
      %v950 = vpop.permute.xlu0 %949
      %951 = vrot.lane.b32.xlu0 %v206, 91
      %v952 = vpop.permute.xlu0 %951
      %vm953 = vcmask 744448
      %v954 = vsel %vm953, %v948, %v950
      %v955 = vsel %vm953, %v950, %v952
      %v957 = vsel %vm222, %v946, 0
      %v960 = vsel %vm226, %v954, 0
      %v963 = vsel %vm226, %v955, 0
      %v966 = vsel %vm226, %v952, 0
      %968 = vmatprep.subr.bf16.mxu0 0
      %969 = vmatpush1.bf16.msra.mxu0 0
      %970 = vmatprep.subr.bf16.mxu0 0
      %971 = vmatpush1.bf16.msra.mxu0 0
      %972 = vmatprep.subr.bf16.mxu0 0
      %973 = vmatpush1.bf16.msra.mxu0 0
      %974 = vmatprep.subr.bf16.mxu0 0
      %975 = vmatpush1.bf16.msra.mxu0 0
      %976 = vmatprep.subr.bf16.mxu0 0
      %977 = vmatpush1.bf16.msra.mxu0 0
      %978 = vmatprep.subr.bf16.mxu0 0
      %979 = vmatpush1.bf16.msra.mxu0 0
      %980 = vmatprep.subr.bf16.mxu0 0
      %981 = vmatpush1.bf16.msra.mxu0 0
      %982 = vmatprep.subr.bf16.mxu0 %v963
      %983 = vmatpush1.bf16.msra.mxu0 %v960
      %984 = vmatprep.subr.bf16.mxu0 0
      %985 = vmatpush2.bf16.msra.mxu0 0
      %986 = vmatprep.subr.bf16.mxu0 0
      %987 = vmatpush2.bf16.msra.mxu0 0
      %988 = vmatprep.subr.bf16.mxu0 0
      %989 = vmatpush2.bf16.msra.mxu0 0
      %990 = vmatprep.subr.bf16.mxu0 0
      %991 = vmatpush2.bf16.msra.mxu0 0
      %992 = vmatprep.subr.bf16.mxu0 0
      %993 = vmatpush2.bf16.msra.mxu0 0
      %994 = vmatprep.subr.bf16.mxu0 0
      %995 = vmatpush2.bf16.msra.mxu0 0
      %996 = vmatprep.subr.bf16.mxu0 0
      %997 = vmatpush2.bf16.msra.mxu0 0
      %998 = vmatprep.subr.bf16.mxu0 0
      %999 = vmatpush2.bf16.msra.mxu0 0
      %1000 = vmatprep.mubr.bf16.mxu0 0
      %1001 = vmatmul.mubr.bf16.gmra.mxu0 %v957
      %v1002 = vpop.f32.mrf.mxu0
      %v1003 = vadd.f32 0.0, %v1002
      %v1004 = vpop.f32.mrf.mxu0
      %v1005 = vadd.f32 0.0, %v1004
      %v1006 = vpop.f32.mrf.mxu0
      %v1007 = vpop.f32.mrf.mxu0
      %1008 = vdwg.mxu0
      %1009 = vmatprep.subr.bf16.mxu0 0
      %1010 = vmatpush1.bf16.msra.mxu0 0
      %1011 = vmatprep.subr.bf16.mxu0 0
      %1012 = vmatpush1.bf16.msra.mxu0 0
      %1013 = vmatprep.subr.bf16.mxu0 0
      %1014 = vmatpush1.bf16.msra.mxu0 0
      %1015 = vmatprep.subr.bf16.mxu0 0
      %1016 = vmatpush1.bf16.msra.mxu0 0
      %1017 = vmatprep.subr.bf16.mxu0 0
      %1018 = vmatpush1.bf16.msra.mxu0 0
      %1019 = vmatprep.subr.bf16.mxu0 0
      %1020 = vmatpush1.bf16.msra.mxu0 0
      %1021 = vmatprep.subr.bf16.mxu0 0
      %1022 = vmatpush1.bf16.msra.mxu0 0
      %1023 = vmatprep.subr.bf16.mxu0 0
      %1024 = vmatpush1.bf16.msra.mxu0 %v966
      %1025 = vmatprep.subr.bf16.mxu0 0
      %1026 = vmatpush2.bf16.msra.mxu0 0
      %1027 = vmatprep.subr.bf16.mxu0 0
      %1028 = vmatpush2.bf16.msra.mxu0 0
      %1029 = vmatprep.subr.bf16.mxu0 0
      %1030 = vmatpush2.bf16.msra.mxu0 0
      %1031 = vmatprep.subr.bf16.mxu0 0
      %1032 = vmatpush2.bf16.msra.mxu0 0
      %1033 = vmatprep.subr.bf16.mxu0 0
      %1034 = vmatpush2.bf16.msra.mxu0 0
      %1035 = vmatprep.subr.bf16.mxu0 0
      %1036 = vmatpush2.bf16.msra.mxu0 0
      %1037 = vmatprep.subr.bf16.mxu0 0
      %1038 = vmatpush2.bf16.msra.mxu0 0
      %1039 = vmatprep.subr.bf16.mxu0 0
      %1040 = vmatpush2.bf16.msra.mxu0 0
      %1041 = vmatprep.mubr.bf16.mxu0 0
      %1042 = vmatmul.mubr.bf16.gmra.mxu0 %v957
      %v1043 = vpop.f32.mrf.mxu0
      %v1044 = vadd.f32 0.0, %v1043
      %v1045 = vpop.f32.mrf.mxu0
      %v1046 = vpop.f32.mrf.mxu0
      %v1047 = vpop.f32.mrf.mxu0
      %1048 = vdwg.mxu0
      %v1049 = vadd.f32 %v942, %v1003
      %v1050 = vadd.f32 %v943, %v1005
      %v1051 = vadd.f32 %v944, %v1044
      %s1052 = scalar_lea.vmem %s2, 32
      %v1053 = vld [vmem:[%s1052] sm:$0xf]
      %1054 = vrot.lane.b32.xlu0 %v204, 90
      %v1055 = vpop.permute.xlu0 %1054
      %1056 = vrot.lane.b32.xlu0 %v205, 90
      %v1057 = vpop.permute.xlu0 %1056
      %1058 = vrot.lane.b32.xlu0 %v206, 90
      %v1059 = vpop.permute.xlu0 %1058
      %vm1060 = vcmask 736256
      %v1061 = vsel %vm1060, %v1055, %v1057
      %v1062 = vsel %vm1060, %v1057, %v1059
      %v1064 = vsel %vm222, %v1053, 0
      %v1067 = vsel %vm226, %v1061, 0
      %v1070 = vsel %vm226, %v1062, 0
      %v1073 = vsel %vm226, %v1059, 0
      %1075 = vmatprep.subr.bf16.mxu0 0
      %1076 = vmatpush1.bf16.msra.mxu0 0
      %1077 = vmatprep.subr.bf16.mxu0 0
      %1078 = vmatpush1.bf16.msra.mxu0 0
      %1079 = vmatprep.subr.bf16.mxu0 0
      %1080 = vmatpush1.bf16.msra.mxu0 0
      %1081 = vmatprep.subr.bf16.mxu0 0
      %1082 = vmatpush1.bf16.msra.mxu0 0
      %1083 = vmatprep.subr.bf16.mxu0 0
      %1084 = vmatpush1.bf16.msra.mxu0 0
      %1085 = vmatprep.subr.bf16.mxu0 0
      %1086 = vmatpush1.bf16.msra.mxu0 0
      %1087 = vmatprep.subr.bf16.mxu0 0
      %1088 = vmatpush1.bf16.msra.mxu0 0
      %1089 = vmatprep.subr.bf16.mxu0 %v1070
      %1090 = vmatpush1.bf16.msra.mxu0 %v1067
      %1091 = vmatprep.subr.bf16.mxu0 0
      %1092 = vmatpush2.bf16.msra.mxu0 0
      %1093 = vmatprep.subr.bf16.mxu0 0
      %1094 = vmatpush2.bf16.msra.mxu0 0
      %1095 = vmatprep.subr.bf16.mxu0 0
      %1096 = vmatpush2.bf16.msra.mxu0 0
      %1097 = vmatprep.subr.bf16.mxu0 0
      %1098 = vmatpush2.bf16.msra.mxu0 0
      %1099 = vmatprep.subr.bf16.mxu0 0
      %1100 = vmatpush2.bf16.msra.mxu0 0
      %1101 = vmatprep.subr.bf16.mxu0 0
      %1102 = vmatpush2.bf16.msra.mxu0 0
      %1103 = vmatprep.subr.bf16.mxu0 0
      %1104 = vmatpush2.bf16.msra.mxu0 0
      %1105 = vmatprep.subr.bf16.mxu0 0
      %1106 = vmatpush2.bf16.msra.mxu0 0
      %1107 = vmatprep.mubr.bf16.mxu0 0
      %1108 = vmatmul.mubr.bf16.gmra.mxu0 %v1064
      %v1109 = vpop.f32.mrf.mxu0
      %v1110 = vadd.f32 0.0, %v1109
      %v1111 = vpop.f32.mrf.mxu0
      %v1112 = vadd.f32 0.0, %v1111
      %v1113 = vpop.f32.mrf.mxu0
      %v1114 = vpop.f32.mrf.mxu0
      %1115 = vdwg.mxu0
      %1116 = vmatprep.subr.bf16.mxu0 0
      %1117 = vmatpush1.bf16.msra.mxu0 0
      %1118 = vmatprep.subr.bf16.mxu0 0
      %1119 = vmatpush1.bf16.msra.mxu0 0
      %1120 = vmatprep.subr.bf16.mxu0 0
      %1121 = vmatpush1.bf16.msra.mxu0 0
      %1122 = vmatprep.subr.bf16.mxu0 0
      %1123 = vmatpush1.bf16.msra.mxu0 0
      %1124 = vmatprep.subr.bf16.mxu0 0
      %1125 = vmatpush1.bf16.msra.mxu0 0
      %1126 = vmatprep.subr.bf16.mxu0 0
      %1127 = vmatpush1.bf16.msra.mxu0 0
      %1128 = vmatprep.subr.bf16.mxu0 0
      %1129 = vmatpush1.bf16.msra.mxu0 0
      %1130 = vmatprep.subr.bf16.mxu0 0
      %1131 = vmatpush1.bf16.msra.mxu0 %v1073
      %1132 = vmatprep.subr.bf16.mxu0 0
      %1133 = vmatpush2.bf16.msra.mxu0 0
      %1134 = vmatprep.subr.bf16.mxu0 0
      %1135 = vmatpush2.bf16.msra.mxu0 0
      %1136 = vmatprep.subr.bf16.mxu0 0
      %1137 = vmatpush2.bf16.msra.mxu0 0
      %1138 = vmatprep.subr.bf16.mxu0 0
      %1139 = vmatpush2.bf16.msra.mxu0 0
      %1140 = vmatprep.subr.bf16.mxu0 0
      %1141 = vmatpush2.bf16.msra.mxu0 0
      %1142 = vmatprep.subr.bf16.mxu0 0
      %1143 = vmatpush2.bf16.msra.mxu0 0
      %1144 = vmatprep.subr.bf16.mxu0 0
      %1145 = vmatpush2.bf16.msra.mxu0 0
      %1146 = vmatprep.subr.bf16.mxu0 0
      %1147 = vmatpush2.bf16.msra.mxu0 0
      %1148 = vmatprep.mubr.bf16.mxu0 0
      %1149 = vmatmul.mubr.bf16.gmra.mxu0 %v1064
      %v1150 = vpop.f32.mrf.mxu0
      %v1151 = vadd.f32 0.0, %v1150
      %v1152 = vpop.f32.mrf.mxu0
      %v1153 = vpop.f32.mrf.mxu0
      %v1154 = vpop.f32.mrf.mxu0
      %1155 = vdwg.mxu0
      %v1156 = vadd.f32 %v1049, %v1110
      %v1157 = vadd.f32 %v1050, %v1112
      %v1158 = vadd.f32 %v1051, %v1151
      %v1159 = vld [vmem:[%s3] sm:$0xff]
      %1161 = vset.pattern.permute.xlu0 0
      %1162 = vperm.xlu0 %1161, %v1159
      %v1163 = vpop.permute.xlu0 %1162
      %v1165 = vadd.f32 %v1156, %v1163
      %v1166 = vadd.f32 %v1157, %v1163
      %v1167 = vadd.f32 %v1158, %v1163
      %v1168 = vld [vmem:[%s0] sm:$0x7]
      %v1170 = vlaneseq
      %v1171 = vshrl.u32 %v1170, 7
      %v1172 = vsub.s32 0, %v1171
      %v1173 = vrot.slane %v1168, %v1172
      %v1174 = vlaneseq
      %v1175 = vshrl.u32 %v1174, 7
      %v1176 = vsub.s32 1, %v1175
      %v1177 = vrot.slane %v1168, %v1176
      %v1178 = vlaneseq
      %v1179 = vshrl.u32 %v1178, 7
      %v1180 = vsub.s32 2, %v1179
      %v1181 = vrot.slane %v1168, %v1180
      %v1185 = vmul.f32 %v1165, %v1173
      %v1186 = vmul.f32 %v1166, %v1177
      %v1187 = vmul.f32 %v1167, %v1181
      %v1188 = vsub.f32 1.0, %v1168
      %v1189 = vmul.f32 %v1188, -1e+30
      %v1191 = vlaneseq
      %v1192 = vshrl.u32 %v1191, 7
      %v1193 = vsub.s32 0, %v1192
      %v1194 = vrot.slane %v1189, %v1193
      %v1195 = vlaneseq
      %v1196 = vshrl.u32 %v1195, 7
      %v1197 = vsub.s32 1, %v1196
      %v1198 = vrot.slane %v1189, %v1197
      %v1199 = vlaneseq
      %v1200 = vshrl.u32 %v1199, 7
      %v1201 = vsub.s32 2, %v1200
      %v1202 = vrot.slane %v1189, %v1201
      %v1206 = vadd.f32 %v1185, %v1194
      %v1207 = vadd.f32 %v1186, %v1198
      %v1208 = vadd.f32 %v1187, %v1202
      %1212 = vrot.lane.b32.xlu0 %v1206, 19
      %v1213 = vpop.permute.xlu0 %1212
      %1214 = vrot.lane.b32.xlu0 %v1207, 19
      %v1215 = vpop.permute.xlu0 %1214
      %1216 = vrot.lane.b32.xlu0 %v1208, 19
      %v1217 = vpop.permute.xlu0 %1216
      %vm1218 = vcmask 154624
      %v1219 = vsel %vm1218, %v1213, %v1215
      %v1220 = vsel %vm1218, %v1215, %v1217
      %v1224 = vsel %vm1218, -1e+30, %v1213
      %vm1225 = vcmask 416768
      %v1226 = vsel %vm1225, %v1220, -1e+30
      %1229 = vrot.lane.b32.xlu0 %v1224, 127
      %v1230 = vpop.permute.xlu0 %1229
      %1231 = vrot.lane.b32.xlu0 %v1219, 127
      %v1232 = vpop.permute.xlu0 %1231
      %1233 = vrot.lane.b32.xlu0 %v1226, 127
      %v1234 = vpop.permute.xlu0 %1233
      %vm1235 = vcmask 1039360
      %v1236 = vsel %vm1235, %v1230, %v1232
      %v1237 = vsel %vm1235, %v1232, %v1234
      %v1241 = vmax.f32 %v1224, %v1236
      %v1242 = vmax.f32 %v1219, %v1237
      %v1243 = vmax.f32 %v1226, %v1234
      %1244 = vrot.lane.b32.xlu0 %v1224, 126
      %v1245 = vpop.permute.xlu0 %1244
      %1246 = vrot.lane.b32.xlu0 %v1219, 126
      %v1247 = vpop.permute.xlu0 %1246
      %1248 = vrot.lane.b32.xlu0 %v1226, 126
      %v1249 = vpop.permute.xlu0 %1248
      %vm1250 = vcmask 1031168
      %v1251 = vsel %vm1250, %v1245, %v1247
      %v1252 = vsel %vm1250, %v1247, %v1249
      %v1256 = vmax.f32 %v1241, %v1251
      %v1257 = vmax.f32 %v1242, %v1252
      %v1258 = vmax.f32 %v1243, %v1249
      %1259 = vrot.lane.b32.xlu0 %v1224, 110
      %v1260 = vpop.permute.xlu0 %1259
      %1261 = vrot.lane.b32.xlu0 %v1219, 110
      %v1262 = vpop.permute.xlu0 %1261
      %1263 = vrot.lane.b32.xlu0 %v1226, 110
      %v1264 = vpop.permute.xlu0 %1263
      %vm1265 = vcmask 900096
      %v1266 = vsel %vm1265, %v1260, %v1262
      %v1267 = vsel %vm1265, %v1262, %v1264
      %v1271 = vmax.f32 %v1256, %v1266
      %v1272 = vmax.f32 %v1257, %v1267
      %v1273 = vmax.f32 %v1258, %v1264
      %1274 = vrot.lane.b32.xlu0 %v1224, 109
      %v1275 = vpop.permute.xlu0 %1274
      %1276 = vrot.lane.b32.xlu0 %v1219, 109
      %v1277 = vpop.permute.xlu0 %1276
      %1278 = vrot.lane.b32.xlu0 %v1226, 109
      %v1279 = vpop.permute.xlu0 %1278
      %vm1280 = vcmask 891904
      %v1281 = vsel %vm1280, %v1275, %v1277
      %v1282 = vsel %vm1280, %v1277, %v1279
      %v1286 = vmax.f32 %v1271, %v1281
      %v1287 = vmax.f32 %v1272, %v1282
      %v1288 = vmax.f32 %v1273, %v1279
      %1289 = vrot.lane.b32.xlu0 %v1224, 108
      %v1290 = vpop.permute.xlu0 %1289
      %1291 = vrot.lane.b32.xlu0 %v1219, 108
      %v1292 = vpop.permute.xlu0 %1291
      %1293 = vrot.lane.b32.xlu0 %v1226, 108
      %v1294 = vpop.permute.xlu0 %1293
      %vm1295 = vcmask 883712
      %v1296 = vsel %vm1295, %v1290, %v1292
      %v1297 = vsel %vm1295, %v1292, %v1294
      %v1301 = vmax.f32 %v1286, %v1296
      %v1302 = vmax.f32 %v1287, %v1297
      %v1303 = vmax.f32 %v1288, %v1294
      %1304 = vrot.lane.b32.xlu0 %v1224, 92
      %v1305 = vpop.permute.xlu0 %1304
      %1306 = vrot.lane.b32.xlu0 %v1219, 92
      %v1307 = vpop.permute.xlu0 %1306
      %1308 = vrot.lane.b32.xlu0 %v1226, 92
      %v1309 = vpop.permute.xlu0 %1308
      %vm1310 = vcmask 752640
      %v1311 = vsel %vm1310, %v1305, %v1307
      %v1312 = vsel %vm1310, %v1307, %v1309
      %v1316 = vmax.f32 %v1301, %v1311
      %v1317 = vmax.f32 %v1302, %v1312
      %v1318 = vmax.f32 %v1303, %v1309
      %1319 = vrot.lane.b32.xlu0 %v1224, 91
      %v1320 = vpop.permute.xlu0 %1319
      %1321 = vrot.lane.b32.xlu0 %v1219, 91
      %v1322 = vpop.permute.xlu0 %1321
      %1323 = vrot.lane.b32.xlu0 %v1226, 91
      %v1324 = vpop.permute.xlu0 %1323
      %vm1325 = vcmask 744448
      %v1326 = vsel %vm1325, %v1320, %v1322
      %v1327 = vsel %vm1325, %v1322, %v1324
      %v1331 = vmax.f32 %v1316, %v1326
      %v1332 = vmax.f32 %v1317, %v1327
      %v1333 = vmax.f32 %v1318, %v1324
      %1334 = vrot.lane.b32.xlu0 %v1224, 90
      %v1335 = vpop.permute.xlu0 %1334
      %1336 = vrot.lane.b32.xlu0 %v1219, 90
      %v1337 = vpop.permute.xlu0 %1336
      %1338 = vrot.lane.b32.xlu0 %v1226, 90
      %v1339 = vpop.permute.xlu0 %1338
      %vm1340 = vcmask 736256
      %v1341 = vsel %vm1340, %v1335, %v1337
      %v1342 = vsel %vm1340, %v1337, %v1339
      %v1346 = vmax.f32 %v1331, %v1341
      %v1347 = vmax.f32 %v1332, %v1342
      %v1348 = vmax.f32 %v1333, %v1339
      %1349 = vst [vmem:[%s197] sm:$0xff] %v1346
      %1350 = vst [vmem:[%s197 + $0x8] sm:$0xff] %v1347
      %vm1351 = vcmask 261120
      %1352 = vst.msk [vmem:[%s197 + $0x10] sm:$0xff] %vm1351, %v1348
      %p1353 = scmp.lt.s32.totalorder %s15, 1
      %s1354 = scalar_select %p1353, %s15, 1
      %s1355 = smul.addr %s1354, 3
      %s1356 = smul.addr %s1355, 8
      %s1357 = scalar_lea.vmem %s4, %s1356
      // Predicated region
      $region37: #{conv_sequence_forward.3} parent=35 // pred_check
        %p1358 = pneg %p122
      $region38: #{conv_sequence_forward.3} parent=35 // pred_check_branch
        %1360 = sbr.rel (%p1358) target = $region40
      $region39: #{conv_sequence_forward.3} parent=35 // pred_region
        _
      $region40: #{conv_sequence_forward.3} parent=35 // pred_fallthru
        _
    $region36: #{conv_sequence_forward.3} parent=5 // pred_fallthru
      _
    %p1361 = scmp.le.s32.totalorder 2, %s10
    // Predicated region
    $region41: #{conv_sequence_forward.3} parent=5 // pred_check
      %p1362 = pneg %p1361
    $region42: #{conv_sequence_forward.3} parent=5 // pred_check_branch
      %1364 = sbr.rel (%p1362) target = $region44
    $region43: #{conv_sequence_forward.3} parent=5 // pred_region
      %s1365 = ssub.s32 %s10, 2
      // Predicated region
      $region45: #{conv_sequence_forward.3} parent=43 // pred_check
        %p1366 = pneg %p128
      $region46: #{conv_sequence_forward.3} parent=43 // pred_check_branch
        %1368 = sbr.rel (%p1366) target = $region48
      $region47: #{conv_sequence_forward.3} parent=43 // pred_region
        %p1369 = scmp.lt.s32.totalorder %s16, 1
        %s1370 = scalar_select %p1369, %s16, 1
        %s1371 = smul.addr %s1370, 3
        %s1372 = smul.addr %s1371, 8
        %s1373 = scalar_lea.vmem %s4, %s1372
      $region48: #{conv_sequence_forward.3} parent=43 // pred_fallthru
        _
    $region44: #{conv_sequence_forward.3} parent=5 // pred_fallthru
      _
  $region6: #{conv_sequence_forward.3} parent=0 // loop_footer
    %s14 = sadd.s32 1, %s10
  $region7: #{conv_sequence_forward.3} parent=0 // loop_footer_branch
    %9 = sbr.rel target = $region3
  $region8: #{conv_sequence_forward.3} parent=0 // loop_exit
    _

// kernel: conv_sequence_forward.4
$region0: #{conv_sequence_forward.4}
  #allocation0 [shape = 'u32[]', space=smem, size = 0x4, offset = 0x4, fixed_abs, tag = 'smem constant byte address 0x4 - core index']
  #allocation1 [shape = 'u32[144,128]{1,0:T(1,128)}', space=vmem, size = 0x12000, scoped, tag = 'internal scratch']
  %s0 = inlined_call_operand.vmem [shape: f32[1,80], index: 0, kind: input, shape index: {}]
  %s1 = inlined_call_operand.vmem [shape: f32[2,8,110], index: 1, kind: input, shape index: {}]
  %s2 = inlined_call_operand.vmem [shape: bf16[9,8,8], index: 2, kind: input, shape index: {}]
  %s3 = inlined_call_operand.vmem [shape: f32[8,1], index: 3, kind: input, shape index: {}]
  %s4 = inlined_call_operand.vmem [shape: bf16[9,8,8], index: 4, kind: input, shape index: {}]
  %s5 = inlined_call_operand.vmem [shape: f32[8,1], index: 5, kind: input, shape index: {}]
  %s6 = inlined_call_operand.vmem [shape: f32[2,8,110], index: 6, kind: output, shape index: {}]
  %s7 = sld [smem:[#allocation0]]
  $region57: #{conv_sequence_forward.4} parent=0
    _
  %s9 = ssub.s32 1, %s7
  %s10 = scalar_select 0, %s9, %s7
  loop: start=0, step=1, limit=4
  $region2: #{conv_sequence_forward.4} parent=0 // loop_pre_header
    _
  $region3: #{conv_sequence_forward.4} parent=0 // loop_header
    %s12 = sphi 0, %s16
    %p13 = scmp.ge.s32.totalorder %s12, 4
    %s20 = sphi 0, %s20
    %s22 = sphi 0, %s20
    %s23 = sphi 0, %s22
    %s37 = sphi 0, %s23
    %s43 = sphi 0, %s45
    %s46 = sphi 0, %s43
    %s47 = sphi 0, %s46
    %s63 = sphi 0, %s47
    %s67 = sphi 0, %s67
    %s69 = sphi 0, %s67
    %s70 = sphi 0, %s69
    %s84 = sphi 0, %s70
    %s88 = sphi 0, %s88
    %s90 = sphi 0, %s88
    %s91 = sphi 0, %s90
    %s105 = sphi 0, %s91
    %s109 = sphi 0, %s109
    %s111 = sphi 0, %s109
    %s112 = sphi 0, %s111
    %s126 = sphi 0, %s112
    %s130 = sphi 0, %s130
    %s132 = sphi 0, %s130
    %s133 = sphi 0, %s132
    %s147 = sphi 0, %s133
    %s153 = sphi 0, %s155
    %s156 = sphi 0, %s153
    %s157 = sphi 0, %s156
    %s173 = sphi 0, %s157
  $region4: #{conv_sequence_forward.4} parent=0 // loop_header_branch
    %15 = sbr.rel (%p13) target = $region8
  $region5: #{conv_sequence_forward.4} parent=0 // loop_body
    %s17 = ssub.s32 %s12, 1
    %s18 = ssub.s32 %s12, 2
    %s19 = sadd.s32 %s12, 1
    %s21 = sadd.s32 %s20, 1
    %p24 = scmp.eq.s32.totalorder %s12, 1
    %p25 = scmp.ne.s32.totalorder %s20, %s22
    %p26 = scmp.eq.s32.totalorder %s12, 0
    %p27 = por %p25, %p26
    %p28 = scmp.ne.s32.totalorder %s20, %s22
    %p29 = scmp.eq.s32.totalorder %s17, 1
    %p30 = por %p28, %p29
    %p31 = scmp.ne.s32.totalorder %s22, %s23
    %p32 = scmp.eq.s32.totalorder %s17, 0
    %p33 = por %p31, %p32
    %p34 = scmp.ne.s32.totalorder %s22, %s23
    %p35 = scmp.eq.s32.totalorder %s18, 1
    %p36 = por %p34, %p35
    %p38 = scmp.ne.s32.totalorder %s23, %s37
    %p39 = scmp.eq.s32.totalorder %s18, 0
    %p40 = por %p38, %p39
    %s41 = ssub.s32 %s12, %s19
    %p42 = scmp.eq.s32.totalorder %s41, 0
    %s44 = sadd.s32 %s43, 1
    %s45 = scalar_select %p42, %s43, %s44
    %p48 = pneg %p42
    %p49 = scmp.eq.s32.totalorder %s12, 1
    %p50 = por %p48, %p49
    %p51 = scmp.ne.s32.totalorder %s43, %s46
    %p52 = scmp.eq.s32.totalorder %s12, 0
    %p53 = por %p51, %p52
    %p54 = scmp.ne.s32.totalorder %s43, %s46
    %p55 = scmp.eq.s32.totalorder %s17, 1
    %p56 = por %p54, %p55
    %p57 = scmp.ne.s32.totalorder %s46, %s47
    %p58 = scmp.eq.s32.totalorder %s17, 0
    %p59 = por %p57, %p58
    %p60 = scmp.ne.s32.totalorder %s46, %s47
    %p61 = scmp.eq.s32.totalorder %s18, 1
    %p62 = por %p60, %p61
    %p64 = scmp.ne.s32.totalorder %s47, %s63
    %p65 = scmp.eq.s32.totalorder %s18, 0
    %p66 = por %p64, %p65
    %s68 = sadd.s32 %s67, 1
    %p71 = scmp.eq.s32.totalorder %s12, 1
    %p72 = scmp.ne.s32.totalorder %s67, %s69
    %p73 = scmp.eq.s32.totalorder %s12, 0
    %p74 = por %p72, %p73
    %p75 = scmp.ne.s32.totalorder %s67, %s69
    %p76 = scmp.eq.s32.totalorder %s17, 1
    %p77 = por %p75, %p76
    %p78 = scmp.ne.s32.totalorder %s69, %s70
    %p79 = scmp.eq.s32.totalorder %s17, 0
    %p80 = por %p78, %p79
    %p81 = scmp.ne.s32.totalorder %s69, %s70
    %p82 = scmp.eq.s32.totalorder %s18, 1
    %p83 = por %p81, %p82
    %p85 = scmp.ne.s32.totalorder %s70, %s84
    %p86 = scmp.eq.s32.totalorder %s18, 0
    %p87 = por %p85, %p86
    %s89 = sadd.s32 %s88, 1
    %p92 = scmp.eq.s32.totalorder %s12, 1
    %p93 = scmp.ne.s32.totalorder %s88, %s90
    %p94 = scmp.eq.s32.totalorder %s12, 0
    %p95 = por %p93, %p94
    %p96 = scmp.ne.s32.totalorder %s88, %s90
    %p97 = scmp.eq.s32.totalorder %s17, 1
    %p98 = por %p96, %p97
    %p99 = scmp.ne.s32.totalorder %s90, %s91
    %p100 = scmp.eq.s32.totalorder %s17, 0
    %p101 = por %p99, %p100
    %p102 = scmp.ne.s32.totalorder %s90, %s91
    %p103 = scmp.eq.s32.totalorder %s18, 1
    %p104 = por %p102, %p103
    %p106 = scmp.ne.s32.totalorder %s91, %s105
    %p107 = scmp.eq.s32.totalorder %s18, 0
    %p108 = por %p106, %p107
    %s110 = sadd.s32 %s109, 1
    %p113 = scmp.eq.s32.totalorder %s12, 1
    %p114 = scmp.ne.s32.totalorder %s109, %s111
    %p115 = scmp.eq.s32.totalorder %s12, 0
    %p116 = por %p114, %p115
    %p117 = scmp.ne.s32.totalorder %s109, %s111
    %p118 = scmp.eq.s32.totalorder %s17, 1
    %p119 = por %p117, %p118
    %p120 = scmp.ne.s32.totalorder %s111, %s112
    %p121 = scmp.eq.s32.totalorder %s17, 0
    %p122 = por %p120, %p121
    %p123 = scmp.ne.s32.totalorder %s111, %s112
    %p124 = scmp.eq.s32.totalorder %s18, 1
    %p125 = por %p123, %p124
    %p127 = scmp.ne.s32.totalorder %s112, %s126
    %p128 = scmp.eq.s32.totalorder %s18, 0
    %p129 = por %p127, %p128
    %s131 = sadd.s32 %s130, 1
    %p134 = scmp.eq.s32.totalorder %s12, 1
    %p135 = scmp.ne.s32.totalorder %s130, %s132
    %p136 = scmp.eq.s32.totalorder %s12, 0
    %p137 = por %p135, %p136
    %p138 = scmp.ne.s32.totalorder %s130, %s132
    %p139 = scmp.eq.s32.totalorder %s17, 1
    %p140 = por %p138, %p139
    %p141 = scmp.ne.s32.totalorder %s132, %s133
    %p142 = scmp.eq.s32.totalorder %s17, 0
    %p143 = por %p141, %p142
    %p144 = scmp.ne.s32.totalorder %s132, %s133
    %p145 = scmp.eq.s32.totalorder %s18, 1
    %p146 = por %p144, %p145
    %p148 = scmp.ne.s32.totalorder %s133, %s147
    %p149 = scmp.eq.s32.totalorder %s18, 0
    %p150 = por %p148, %p149
    %s151 = ssub.s32 %s12, %s19
    %p152 = scmp.eq.s32.totalorder %s151, 0
    %s154 = sadd.s32 %s153, 1
    %s155 = scalar_select %p152, %s153, %s154
    %p158 = pneg %p152
    %p159 = scmp.eq.s32.totalorder %s12, 1
    %p160 = por %p158, %p159
    %p161 = scmp.ne.s32.totalorder %s153, %s156
    %p162 = scmp.eq.s32.totalorder %s12, 0
    %p163 = por %p161, %p162
    %p164 = scmp.ne.s32.totalorder %s153, %s156
    %p165 = scmp.eq.s32.totalorder %s17, 1
    %p166 = por %p164, %p165
    %p167 = scmp.ne.s32.totalorder %s156, %s157
    %p168 = scmp.eq.s32.totalorder %s17, 0
    %p169 = por %p167, %p168
    %p170 = scmp.ne.s32.totalorder %s156, %s157
    %p171 = scmp.eq.s32.totalorder %s18, 1
    %p172 = por %p170, %p171
    %p174 = scmp.ne.s32.totalorder %s157, %s173
    %p175 = scmp.eq.s32.totalorder %s18, 0
    %p176 = por %p174, %p175
    %p177 = scmp.le.s32.totalorder 1, %s12
    %p178 = scmp.lt.s32.totalorder %s12, 3
    %p179 = pnand %p177, %p178
    %p180 = pneg %p179
    // Predicated region
    $region9: #{conv_sequence_forward.4} parent=5 // pred_check
      _
    $region10: #{conv_sequence_forward.4} parent=5 // pred_check_branch
      %182 = sbr.rel (%p179) target = $region12
    $region11: #{conv_sequence_forward.4} parent=5 // pred_region
      %s183 = ssub.s32 %s12, 1
      // Predicated region
      $region13: #{conv_sequence_forward.4} parent=11 // pred_check
        %p184 = pneg %p33
      $region14: #{conv_sequence_forward.4} parent=11 // pred_check_branch
        %186 = sbr.rel (%p184) target = $region16
      $region15: #{conv_sequence_forward.4} parent=11 // pred_region
        _
      $region16: #{conv_sequence_forward.4} parent=11 // pred_fallthru
        _
      // Predicated region
      $region17: #{conv_sequence_forward.4} parent=11 // pred_check
        %p187 = pneg %p80
      $region18: #{conv_sequence_forward.4} parent=11 // pred_check_branch
        %189 = sbr.rel (%p187) target = $region20
      $region19: #{conv_sequence_forward.4} parent=11 // pred_region
        _
      $region20: #{conv_sequence_forward.4} parent=11 // pred_fallthru
        _
      // Predicated region
      $region21: #{conv_sequence_forward.4} parent=11 // pred_check
        %p190 = pneg %p101
      $region22: #{conv_sequence_forward.4} parent=11 // pred_check_branch
        %192 = sbr.rel (%p190) target = $region24
      $region23: #{conv_sequence_forward.4} parent=11 // pred_region
        _
      $region24: #{conv_sequence_forward.4} parent=11 // pred_fallthru
        _
      // Predicated region
      $region25: #{conv_sequence_forward.4} parent=11 // pred_check
        %p193 = pneg %p122
      $region26: #{conv_sequence_forward.4} parent=11 // pred_check_branch
        %195 = sbr.rel (%p193) target = $region28
      $region27: #{conv_sequence_forward.4} parent=11 // pred_region
        _
      $region28: #{conv_sequence_forward.4} parent=11 // pred_fallthru
        _
      // Predicated region
      $region29: #{conv_sequence_forward.4} parent=11 // pred_check
        %p196 = pneg %p143
      $region30: #{conv_sequence_forward.4} parent=11 // pred_check_branch
        %198 = sbr.rel (%p196) target = $region32
      $region31: #{conv_sequence_forward.4} parent=11 // pred_region
        _
      $region32: #{conv_sequence_forward.4} parent=11 // pred_fallthru
        _
    $region12: #{conv_sequence_forward.4} parent=5 // pred_fallthru
      _
    %p199 = scmp.lt.s32.totalorder %s12, 2
    // Predicated region
    $region33: #{conv_sequence_forward.4} parent=5 // pred_check
      %p200 = pneg %p199
    $region34: #{conv_sequence_forward.4} parent=5 // pred_check_branch
      %202 = sbr.rel (%p200) target = $region36
    $region35: #{conv_sequence_forward.4} parent=5 // pred_region
      // Predicated region
      $region37: #{conv_sequence_forward.4} parent=35 // pred_check
        %p203 = pneg %p53
      $region38: #{conv_sequence_forward.4} parent=35 // pred_check_branch
        %205 = sbr.rel (%p203) target = $region40
      $region39: #{conv_sequence_forward.4} parent=35 // pred_region
        %p206 = scmp.lt.s32.totalorder %s12, 1
        %s207 = scalar_select %p206, %s12, 1
        %s208 = smul.addr %s207, 8
        %s209 = scalar_lea.vmem %s1, %s208
      $region40: #{conv_sequence_forward.4} parent=35 // pred_fallthru
        _
    $region36: #{conv_sequence_forward.4} parent=5 // pred_fallthru
      _
    %p210 = scmp.le.s32.totalorder 1, %s12
    %p211 = scmp.lt.s32.totalorder %s12, 3
    %p212 = pnand %p210, %p211
    %p213 = pneg %p212
    // Predicated region
    $region41: #{conv_sequence_forward.4} parent=5 // pred_check
      _
    $region42: #{conv_sequence_forward.4} parent=5 // pred_check_branch
      %215 = sbr.rel (%p212) target = $region44
    $region43: #{conv_sequence_forward.4} parent=5 // pred_region
      %s216 = ssub.s32 %s12, 1
      %p217 = pneg %p33
      %p218 = pneg %p30
      %p219 = scmp.lt.s32.totalorder %s17, 1
      %s220 = scalar_select %p219, %s17, 1
      %s221 = smul.addr %s220, 8
      %s222 = scalar_lea.vmem %s1, %s221
      %p223 = pneg %p59
      %p224 = pneg %p56
      %p225 = pneg %p80
      %p226 = pneg %p77
      %p227 = pneg %p101
      %p228 = pneg %p98
      %p229 = pneg %p122
      %p230 = pneg %p119
      %p231 = pneg %p143
      %p232 = pneg %p140
      %p233 = pneg %p169
      %p234 = pneg %p166
      %p235 = scmp.lt.s32.totalorder %s17, 1
      %s236 = scalar_select %p235, %s17, 1
      %s237 = smul.addr %s236, 8
      %s238 = scalar_lea.vmem %s6, %s237
      %p239 = scmp.lt.s32.totalorder %s17, 1
      %s240 = scalar_select %p239, %s17, 1
      %s241 = smul.addr %s240, 8
      %s242 = scalar_lea.vmem %s1, %s241
      %p243 = scmp.lt.s32.totalorder %s17, 1
      %s244 = scalar_select %p243, %s17, 1
      %s245 = smul.addr %s244, 8
      %s246 = scalar_lea.vmem %s6, %s245
      %v248 = vld [vmem:[%s242] sm:$0xff]
      %v249 = vld [vmem:[%s0] sm:$0x1]
      %v250 = vmax.f32 %v248, 0.0
      %v251 = vpack.c.bf16 %v250, %v250
      %v252 = vld [vmem:[%s2] sm:$0xf]
      %s253 = scalar_lea.vmem %s2, 4
      %v254 = vld [vmem:[%s253] sm:$0xf]
      %256 = vrot.lane.b32.xlu0 %v251, 127
      %v257 = vpop.permute.xlu0 %256
      %vm258 = vcmask 64512
      %v260 = vsel %vm258, %v254, 0
      %vm262 = vcmask 1043456
      %v264 = vsel %vm262, %v257, 0
      %266 = vmatprep.subr.bf16.mxu0 0
      %267 = vmatpush1.bf16.msra.mxu0 0
      %268 = vmatprep.subr.bf16.mxu0 0
      %269 = vmatpush1.bf16.msra.mxu0 0
      %270 = vmatprep.subr.bf16.mxu0 0
      %271 = vmatpush1.bf16.msra.mxu0 0
      %272 = vmatprep.subr.bf16.mxu0 0
      %273 = vmatpush1.bf16.msra.mxu0 0
      %274 = vmatprep.subr.bf16.mxu0 0
      %275 = vmatpush1.bf16.msra.mxu0 0
      %276 = vmatprep.subr.bf16.mxu0 0
      %277 = vmatpush1.bf16.msra.mxu0 0
      %278 = vmatprep.subr.bf16.mxu0 0
      %279 = vmatpush1.bf16.msra.mxu0 0
      %280 = vmatprep.subr.bf16.mxu0 0
      %281 = vmatpush1.bf16.msra.mxu0 %v264
      %282 = vmatprep.subr.bf16.mxu0 0
      %283 = vmatpush2.bf16.msra.mxu0 0
      %284 = vmatprep.subr.bf16.mxu0 0
      %285 = vmatpush2.bf16.msra.mxu0 0
      %286 = vmatprep.subr.bf16.mxu0 0
      %287 = vmatpush2.bf16.msra.mxu0 0
      %288 = vmatprep.subr.bf16.mxu0 0
      %289 = vmatpush2.bf16.msra.mxu0 0
      %290 = vmatprep.subr.bf16.mxu0 0
      %291 = vmatpush2.bf16.msra.mxu0 0
      %292 = vmatprep.subr.bf16.mxu0 0
      %293 = vmatpush2.bf16.msra.mxu0 0
      %294 = vmatprep.subr.bf16.mxu0 0
      %295 = vmatpush2.bf16.msra.mxu0 0
      %296 = vmatprep.subr.bf16.mxu0 0
      %297 = vmatpush2.bf16.msra.mxu0 0
      %298 = vmatprep.mubr.bf16.mxu0 0
      %299 = vmatmul.mubr.bf16.gmra.mxu0 %v260
      %v300 = vpop.f32.mrf.mxu0
      %v301 = vadd.f32 0.0, %v300
      %v302 = vpop.f32.mrf.mxu0
      %v303 = vpop.f32.mrf.mxu0
      %v304 = vpop.f32.mrf.mxu0
      %305 = vdwg.mxu0
      %v307 = vsel %vm258, %v252, 0
      %v310 = vsel %vm262, %v251, 0
      %312 = vmatprep.subr.bf16.mxu0 0
      %313 = vmatpush1.bf16.msra.mxu0 0
      %314 = vmatprep.subr.bf16.mxu0 0
      %315 = vmatpush1.bf16.msra.mxu0 0
      %316 = vmatprep.subr.bf16.mxu0 0
      %317 = vmatpush1.bf16.msra.mxu0 0
      %318 = vmatprep.subr.bf16.mxu0 0
      %319 = vmatpush1.bf16.msra.mxu0 0
      %320 = vmatprep.subr.bf16.mxu0 0
      %321 = vmatpush1.bf16.msra.mxu0 0
      %322 = vmatprep.subr.bf16.mxu0 0
      %323 = vmatpush1.bf16.msra.mxu0 0
      %324 = vmatprep.subr.bf16.mxu0 0
      %325 = vmatpush1.bf16.msra.mxu0 0
      %326 = vmatprep.subr.bf16.mxu0 0
      %327 = vmatpush1.bf16.msra.mxu0 %v310
      %328 = vmatprep.subr.bf16.mxu0 0
      %329 = vmatpush2.bf16.msra.mxu0 0
      %330 = vmatprep.subr.bf16.mxu0 0
      %331 = vmatpush2.bf16.msra.mxu0 0
      %332 = vmatprep.subr.bf16.mxu0 0
      %333 = vmatpush2.bf16.msra.mxu0 0
      %334 = vmatprep.subr.bf16.mxu0 0
      %335 = vmatpush2.bf16.msra.mxu0 0
      %336 = vmatprep.subr.bf16.mxu0 0
      %337 = vmatpush2.bf16.msra.mxu0 0
      %338 = vmatprep.subr.bf16.mxu0 0
      %339 = vmatpush2.bf16.msra.mxu0 0
      %340 = vmatprep.subr.bf16.mxu0 0
      %341 = vmatpush2.bf16.msra.mxu0 0
      %342 = vmatprep.subr.bf16.mxu0 0
      %343 = vmatpush2.bf16.msra.mxu0 0
      %344 = vmatprep.mubr.bf16.mxu0 0
      %345 = vmatmul.mubr.bf16.gmra.mxu0 %v307
      %v346 = vpop.f32.mrf.mxu0
      %v347 = vadd.f32 %v301, %v346
      %v348 = vpop.f32.mrf.mxu0
      %v349 = vpop.f32.mrf.mxu0
      %v350 = vpop.f32.mrf.mxu0
      %351 = vdwg.mxu0
      %s352 = scalar_lea.vmem %s2, 8
      %v353 = vld [vmem:[%s352] sm:$0xf]
      %354 = vrot.lane.b32.xlu0 %v251, 126
      %v355 = vpop.permute.xlu0 %354
      %v357 = vsel %vm258, %v353, 0
      %v360 = vsel %vm262, %v355, 0
      %362 = vmatprep.subr.bf16.mxu0 0
      %363 = vmatpush1.bf16.msra.mxu0 0
      %364 = vmatprep.subr.bf16.mxu0 0
      %365 = vmatpush1.bf16.msra.mxu0 0
      %366 = vmatprep.subr.bf16.mxu0 0
      %367 = vmatpush1.bf16.msra.mxu0 0
      %368 = vmatprep.subr.bf16.mxu0 0
      %369 = vmatpush1.bf16.msra.mxu0 0
      %370 = vmatprep.subr.bf16.mxu0 0
      %371 = vmatpush1.bf16.msra.mxu0 0
      %372 = vmatprep.subr.bf16.mxu0 0
      %373 = vmatpush1.bf16.msra.mxu0 0
      %374 = vmatprep.subr.bf16.mxu0 0
      %375 = vmatpush1.bf16.msra.mxu0 0
      %376 = vmatprep.subr.bf16.mxu0 0
      %377 = vmatpush1.bf16.msra.mxu0 %v360
      %378 = vmatprep.subr.bf16.mxu0 0
      %379 = vmatpush2.bf16.msra.mxu0 0
      %380 = vmatprep.subr.bf16.mxu0 0
      %381 = vmatpush2.bf16.msra.mxu0 0
      %382 = vmatprep.subr.bf16.mxu0 0
      %383 = vmatpush2.bf16.msra.mxu0 0
      %384 = vmatprep.subr.bf16.mxu0 0
      %385 = vmatpush2.bf16.msra.mxu0 0
      %386 = vmatprep.subr.bf16.mxu0 0
      %387 = vmatpush2.bf16.msra.mxu0 0
      %388 = vmatprep.subr.bf16.mxu0 0
      %389 = vmatpush2.bf16.msra.mxu0 0
      %390 = vmatprep.subr.bf16.mxu0 0
      %391 = vmatpush2.bf16.msra.mxu0 0
      %392 = vmatprep.subr.bf16.mxu0 0
      %393 = vmatpush2.bf16.msra.mxu0 0
      %394 = vmatprep.mubr.bf16.mxu0 0
      %395 = vmatmul.mubr.bf16.gmra.mxu0 %v357
      %v396 = vpop.f32.mrf.mxu0
      %v397 = vadd.f32 0.0, %v396
      %v398 = vpop.f32.mrf.mxu0
      %v399 = vpop.f32.mrf.mxu0
      %v400 = vpop.f32.mrf.mxu0
      %401 = vdwg.mxu0
      %v402 = vadd.f32 %v347, %v397
      %s403 = scalar_lea.vmem %s2, 12
      %v404 = vld [vmem:[%s403] sm:$0xf]
      %405 = vrot.lane.b32.xlu0 %v251, 118
      %v406 = vpop.permute.xlu0 %405
      %v408 = vsel %vm258, %v404, 0
      %v411 = vsel %vm262, %v406, 0
      %413 = vmatprep.subr.bf16.mxu0 0
      %414 = vmatpush1.bf16.msra.mxu0 0
      %415 = vmatprep.subr.bf16.mxu0 0
      %416 = vmatpush1.bf16.msra.mxu0 0
      %417 = vmatprep.subr.bf16.mxu0 0
      %418 = vmatpush1.bf16.msra.mxu0 0
      %419 = vmatprep.subr.bf16.mxu0 0
      %420 = vmatpush1.bf16.msra.mxu0 0
      %421 = vmatprep.subr.bf16.mxu0 0
      %422 = vmatpush1.bf16.msra.mxu0 0
      %423 = vmatprep.subr.bf16.mxu0 0
      %424 = vmatpush1.bf16.msra.mxu0 0
      %425 = vmatprep.subr.bf16.mxu0 0
      %426 = vmatpush1.bf16.msra.mxu0 0
      %427 = vmatprep.subr.bf16.mxu0 0
      %428 = vmatpush1.bf16.msra.mxu0 %v411
      %429 = vmatprep.subr.bf16.mxu0 0
      %430 = vmatpush2.bf16.msra.mxu0 0
      %431 = vmatprep.subr.bf16.mxu0 0
      %432 = vmatpush2.bf16.msra.mxu0 0
      %433 = vmatprep.subr.bf16.mxu0 0
      %434 = vmatpush2.bf16.msra.mxu0 0
      %435 = vmatprep.subr.bf16.mxu0 0
      %436 = vmatpush2.bf16.msra.mxu0 0
      %437 = vmatprep.subr.bf16.mxu0 0
      %438 = vmatpush2.bf16.msra.mxu0 0
      %439 = vmatprep.subr.bf16.mxu0 0
      %440 = vmatpush2.bf16.msra.mxu0 0
      %441 = vmatprep.subr.bf16.mxu0 0
      %442 = vmatpush2.bf16.msra.mxu0 0
      %443 = vmatprep.subr.bf16.mxu0 0
      %444 = vmatpush2.bf16.msra.mxu0 0
      %445 = vmatprep.mubr.bf16.mxu0 0
      %446 = vmatmul.mubr.bf16.gmra.mxu0 %v408
      %v447 = vpop.f32.mrf.mxu0
      %v448 = vadd.f32 0.0, %v447
      %v449 = vpop.f32.mrf.mxu0
      %v450 = vpop.f32.mrf.mxu0
      %v451 = vpop.f32.mrf.mxu0
      %452 = vdwg.mxu0
      %v453 = vadd.f32 %v402, %v448
      %s454 = scalar_lea.vmem %s2, 16
      %v455 = vld [vmem:[%s454] sm:$0xf]
      %456 = vrot.lane.b32.xlu0 %v251, 117
      %v457 = vpop.permute.xlu0 %456
      %v459 = vsel %vm258, %v455, 0
      %v462 = vsel %vm262, %v457, 0
      %464 = vmatprep.subr.bf16.mxu0 0
      %465 = vmatpush1.bf16.msra.mxu0 0
      %466 = vmatprep.subr.bf16.mxu0 0
      %467 = vmatpush1.bf16.msra.mxu0 0
      %468 = vmatprep.subr.bf16.mxu0 0
      %469 = vmatpush1.bf16.msra.mxu0 0
      %470 = vmatprep.subr.bf16.mxu0 0
      %471 = vmatpush1.bf16.msra.mxu0 0
      %472 = vmatprep.subr.bf16.mxu0 0
      %473 = vmatpush1.bf16.msra.mxu0 0
      %474 = vmatprep.subr.bf16.mxu0 0
      %475 = vmatpush1.bf16.msra.mxu0 0
      %476 = vmatprep.subr.bf16.mxu0 0
      %477 = vmatpush1.bf16.msra.mxu0 0
      %478 = vmatprep.subr.bf16.mxu0 0
      %479 = vmatpush1.bf16.msra.mxu0 %v462
      %480 = vmatprep.subr.bf16.mxu0 0
      %481 = vmatpush2.bf16.msra.mxu0 0
      %482 = vmatprep.subr.bf16.mxu0 0
      %483 = vmatpush2.bf16.msra.mxu0 0
      %484 = vmatprep.subr.bf16.mxu0 0
      %485 = vmatpush2.bf16.msra.mxu0 0
      %486 = vmatprep.subr.bf16.mxu0 0
      %487 = vmatpush2.bf16.msra.mxu0 0
      %488 = vmatprep.subr.bf16.mxu0 0
      %489 = vmatpush2.bf16.msra.mxu0 0
      %490 = vmatprep.subr.bf16.mxu0 0
      %491 = vmatpush2.bf16.msra.mxu0 0
      %492 = vmatprep.subr.bf16.mxu0 0
      %493 = vmatpush2.bf16.msra.mxu0 0
      %494 = vmatprep.subr.bf16.mxu0 0
      %495 = vmatpush2.bf16.msra.mxu0 0
      %496 = vmatprep.mubr.bf16.mxu0 0
      %497 = vmatmul.mubr.bf16.gmra.mxu0 %v459
      %v498 = vpop.f32.mrf.mxu0
      %v499 = vadd.f32 0.0, %v498
      %v500 = vpop.f32.mrf.mxu0
      %v501 = vpop.f32.mrf.mxu0
      %v502 = vpop.f32.mrf.mxu0
      %503 = vdwg.mxu0
      %v504 = vadd.f32 %v453, %v499
      %s505 = scalar_lea.vmem %s2, 20
      %v506 = vld [vmem:[%s505] sm:$0xf]
      %507 = vrot.lane.b32.xlu0 %v251, 116
      %v508 = vpop.permute.xlu0 %507
      %v510 = vsel %vm258, %v506, 0
      %v513 = vsel %vm262, %v508, 0
      %515 = vmatprep.subr.bf16.mxu0 0
      %516 = vmatpush1.bf16.msra.mxu0 0
      %517 = vmatprep.subr.bf16.mxu0 0
      %518 = vmatpush1.bf16.msra.mxu0 0
      %519 = vmatprep.subr.bf16.mxu0 0
      %520 = vmatpush1.bf16.msra.mxu0 0
      %521 = vmatprep.subr.bf16.mxu0 0
      %522 = vmatpush1.bf16.msra.mxu0 0
      %523 = vmatprep.subr.bf16.mxu0 0
      %524 = vmatpush1.bf16.msra.mxu0 0
      %525 = vmatprep.subr.bf16.mxu0 0
      %526 = vmatpush1.bf16.msra.mxu0 0
      %527 = vmatprep.subr.bf16.mxu0 0
      %528 = vmatpush1.bf16.msra.mxu0 0
      %529 = vmatprep.subr.bf16.mxu0 0
      %530 = vmatpush1.bf16.msra.mxu0 %v513
      %531 = vmatprep.subr.bf16.mxu0 0
      %532 = vmatpush2.bf16.msra.mxu0 0
      %533 = vmatprep.subr.bf16.mxu0 0
      %534 = vmatpush2.bf16.msra.mxu0 0
      %535 = vmatprep.subr.bf16.mxu0 0
      %536 = vmatpush2.bf16.msra.mxu0 0
      %537 = vmatprep.subr.bf16.mxu0 0
      %538 = vmatpush2.bf16.msra.mxu0 0
      %539 = vmatprep.subr.bf16.mxu0 0
      %540 = vmatpush2.bf16.msra.mxu0 0
      %541 = vmatprep.subr.bf16.mxu0 0
      %542 = vmatpush2.bf16.msra.mxu0 0
      %543 = vmatprep.subr.bf16.mxu0 0
      %544 = vmatpush2.bf16.msra.mxu0 0
      %545 = vmatprep.subr.bf16.mxu0 0
      %546 = vmatpush2.bf16.msra.mxu0 0
      %547 = vmatprep.mubr.bf16.mxu0 0
      %548 = vmatmul.mubr.bf16.gmra.mxu0 %v510
      %v549 = vpop.f32.mrf.mxu0
      %v550 = vadd.f32 0.0, %v549
      %v551 = vpop.f32.mrf.mxu0
      %v552 = vpop.f32.mrf.mxu0
      %v553 = vpop.f32.mrf.mxu0
      %554 = vdwg.mxu0
      %v555 = vadd.f32 %v504, %v550
      %s556 = scalar_lea.vmem %s2, 24
      %v557 = vld [vmem:[%s556] sm:$0xf]
      %558 = vrot.lane.b32.xlu0 %v251, 108
      %v559 = vpop.permute.xlu0 %558
      %v561 = vsel %vm258, %v557, 0
      %v564 = vsel %vm262, %v559, 0
      %566 = vmatprep.subr.bf16.mxu0 0
      %567 = vmatpush1.bf16.msra.mxu0 0
      %568 = vmatprep.subr.bf16.mxu0 0
      %569 = vmatpush1.bf16.msra.mxu0 0
      %570 = vmatprep.subr.bf16.mxu0 0
      %571 = vmatpush1.bf16.msra.mxu0 0
      %572 = vmatprep.subr.bf16.mxu0 0
      %573 = vmatpush1.bf16.msra.mxu0 0
      %574 = vmatprep.subr.bf16.mxu0 0
      %575 = vmatpush1.bf16.msra.mxu0 0
      %576 = vmatprep.subr.bf16.mxu0 0
      %577 = vmatpush1.bf16.msra.mxu0 0
      %578 = vmatprep.subr.bf16.mxu0 0
      %579 = vmatpush1.bf16.msra.mxu0 0
      %580 = vmatprep.subr.bf16.mxu0 0
      %581 = vmatpush1.bf16.msra.mxu0 %v564
      %582 = vmatprep.subr.bf16.mxu0 0
      %583 = vmatpush2.bf16.msra.mxu0 0
      %584 = vmatprep.subr.bf16.mxu0 0
      %585 = vmatpush2.bf16.msra.mxu0 0
      %586 = vmatprep.subr.bf16.mxu0 0
      %587 = vmatpush2.bf16.msra.mxu0 0
      %588 = vmatprep.subr.bf16.mxu0 0
      %589 = vmatpush2.bf16.msra.mxu0 0
      %590 = vmatprep.subr.bf16.mxu0 0
      %591 = vmatpush2.bf16.msra.mxu0 0
      %592 = vmatprep.subr.bf16.mxu0 0
      %593 = vmatpush2.bf16.msra.mxu0 0
      %594 = vmatprep.subr.bf16.mxu0 0
      %595 = vmatpush2.bf16.msra.mxu0 0
      %596 = vmatprep.subr.bf16.mxu0 0
      %597 = vmatpush2.bf16.msra.mxu0 0
      %598 = vmatprep.mubr.bf16.mxu0 0
      %599 = vmatmul.mubr.bf16.gmra.mxu0 %v561
      %v600 = vpop.f32.mrf.mxu0
      %v601 = vadd.f32 0.0, %v600
      %v602 = vpop.f32.mrf.mxu0
      %v603 = vpop.f32.mrf.mxu0
      %v604 = vpop.f32.mrf.mxu0
      %605 = vdwg.mxu0
      %v606 = vadd.f32 %v555, %v601
      %s607 = scalar_lea.vmem %s2, 28
      %v608 = vld [vmem:[%s607] sm:$0xf]
      %609 = vrot.lane.b32.xlu0 %v251, 107
      %v610 = vpop.permute.xlu0 %609
      %v612 = vsel %vm258, %v608, 0
      %v615 = vsel %vm262, %v610, 0
      %617 = vmatprep.subr.bf16.mxu0 0
      %618 = vmatpush1.bf16.msra.mxu0 0
      %619 = vmatprep.subr.bf16.mxu0 0
      %620 = vmatpush1.bf16.msra.mxu0 0
      %621 = vmatprep.subr.bf16.mxu0 0
      %622 = vmatpush1.bf16.msra.mxu0 0
      %623 = vmatprep.subr.bf16.mxu0 0
      %624 = vmatpush1.bf16.msra.mxu0 0
      %625 = vmatprep.subr.bf16.mxu0 0
      %626 = vmatpush1.bf16.msra.mxu0 0
      %627 = vmatprep.subr.bf16.mxu0 0
      %628 = vmatpush1.bf16.msra.mxu0 0
      %629 = vmatprep.subr.bf16.mxu0 0
      %630 = vmatpush1.bf16.msra.mxu0 0
      %631 = vmatprep.subr.bf16.mxu0 0
      %632 = vmatpush1.bf16.msra.mxu0 %v615
      %633 = vmatprep.subr.bf16.mxu0 0
      %634 = vmatpush2.bf16.msra.mxu0 0
      %635 = vmatprep.subr.bf16.mxu0 0
      %636 = vmatpush2.bf16.msra.mxu0 0
      %637 = vmatprep.subr.bf16.mxu0 0
      %638 = vmatpush2.bf16.msra.mxu0 0
      %639 = vmatprep.subr.bf16.mxu0 0
      %640 = vmatpush2.bf16.msra.mxu0 0
      %641 = vmatprep.subr.bf16.mxu0 0
      %642 = vmatpush2.bf16.msra.mxu0 0
      %643 = vmatprep.subr.bf16.mxu0 0
      %644 = vmatpush2.bf16.msra.mxu0 0
      %645 = vmatprep.subr.bf16.mxu0 0
      %646 = vmatpush2.bf16.msra.mxu0 0
      %647 = vmatprep.subr.bf16.mxu0 0
      %648 = vmatpush2.bf16.msra.mxu0 0
      %649 = vmatprep.mubr.bf16.mxu0 0
      %650 = vmatmul.mubr.bf16.gmra.mxu0 %v612
      %v651 = vpop.f32.mrf.mxu0
      %v652 = vadd.f32 0.0, %v651
      %v653 = vpop.f32.mrf.mxu0
      %v654 = vpop.f32.mrf.mxu0
      %v655 = vpop.f32.mrf.mxu0
      %656 = vdwg.mxu0
      %v657 = vadd.f32 %v606, %v652
      %s658 = scalar_lea.vmem %s2, 32
      %v659 = vld [vmem:[%s658] sm:$0xf]
      %660 = vrot.lane.b32.xlu0 %v251, 106
      %v661 = vpop.permute.xlu0 %660
      %v663 = vsel %vm258, %v659, 0
      %v666 = vsel %vm262, %v661, 0
      %668 = vmatprep.subr.bf16.mxu0 0
      %669 = vmatpush1.bf16.msra.mxu0 0
      %670 = vmatprep.subr.bf16.mxu0 0
      %671 = vmatpush1.bf16.msra.mxu0 0
      %672 = vmatprep.subr.bf16.mxu0 0
      %673 = vmatpush1.bf16.msra.mxu0 0
      %674 = vmatprep.subr.bf16.mxu0 0
      %675 = vmatpush1.bf16.msra.mxu0 0
      %676 = vmatprep.subr.bf16.mxu0 0
      %677 = vmatpush1.bf16.msra.mxu0 0
      %678 = vmatprep.subr.bf16.mxu0 0
      %679 = vmatpush1.bf16.msra.mxu0 0
      %680 = vmatprep.subr.bf16.mxu0 0
      %681 = vmatpush1.bf16.msra.mxu0 0
      %682 = vmatprep.subr.bf16.mxu0 0
      %683 = vmatpush1.bf16.msra.mxu0 %v666
      %684 = vmatprep.subr.bf16.mxu0 0
      %685 = vmatpush2.bf16.msra.mxu0 0
      %686 = vmatprep.subr.bf16.mxu0 0
      %687 = vmatpush2.bf16.msra.mxu0 0
      %688 = vmatprep.subr.bf16.mxu0 0
      %689 = vmatpush2.bf16.msra.mxu0 0
      %690 = vmatprep.subr.bf16.mxu0 0
      %691 = vmatpush2.bf16.msra.mxu0 0
      %692 = vmatprep.subr.bf16.mxu0 0
      %693 = vmatpush2.bf16.msra.mxu0 0
      %694 = vmatprep.subr.bf16.mxu0 0
      %695 = vmatpush2.bf16.msra.mxu0 0
      %696 = vmatprep.subr.bf16.mxu0 0
      %697 = vmatpush2.bf16.msra.mxu0 0
      %698 = vmatprep.subr.bf16.mxu0 0
      %699 = vmatpush2.bf16.msra.mxu0 0
      %700 = vmatprep.mubr.bf16.mxu0 0
      %701 = vmatmul.mubr.bf16.gmra.mxu0 %v663
      %v702 = vpop.f32.mrf.mxu0
      %v703 = vadd.f32 0.0, %v702
      %v704 = vpop.f32.mrf.mxu0
      %v705 = vpop.f32.mrf.mxu0
      %v706 = vpop.f32.mrf.mxu0
      %707 = vdwg.mxu0
      %v708 = vadd.f32 %v657, %v703
      %v709 = vld [vmem:[%s3] sm:$0xff]
      %711 = vset.pattern.permute.xlu0 0
      %712 = vperm.xlu0 %711, %v709
      %v713 = vpop.permute.xlu0 %712
      %v715 = vadd.f32 %v708, %v713
      %v717 = vlaneseq
      %v718 = vshrl.u32 %v717, 7
      %v719 = vsub.s32 0, %v718
      %v720 = vrot.slane %v249, %v719
      %v722 = vmul.f32 %v715, %v720
      %724 = vrot.lane.b32.xlu0 %v722, 11
      %v725 = vpop.permute.xlu0 %724
      %vm727 = vcmask 89088
      %v728 = vsel %vm727, 0.0, %v725
      %vm729 = vcmask 744448
      %v730 = vsel %vm729, %v728, 0.0
      %v731 = vmax.f32 %v730, 0.0
      %v732 = vpack.c.bf16 %v731, %v731
      %v733 = vld [vmem:[%s4] sm:$0xf]
      %s734 = scalar_lea.vmem %s4, 4
      %v735 = vld [vmem:[%s734] sm:$0xf]
      %737 = vrot.lane.b32.xlu0 %v732, 127
      %v738 = vpop.permute.xlu0 %737
      %v740 = vsel %vm258, %v735, 0
      %v743 = vsel %vm262, %v738, 0
      %745 = vmatprep.subr.bf16.mxu0 0
      %746 = vmatpush1.bf16.msra.mxu0 0
      %747 = vmatprep.subr.bf16.mxu0 0
      %748 = vmatpush1.bf16.msra.mxu0 0
      %749 = vmatprep.subr.bf16.mxu0 0
      %750 = vmatpush1.bf16.msra.mxu0 0
      %751 = vmatprep.subr.bf16.mxu0 0
      %752 = vmatpush1.bf16.msra.mxu0 0
      %753 = vmatprep.subr.bf16.mxu0 0
      %754 = vmatpush1.bf16.msra.mxu0 0
      %755 = vmatprep.subr.bf16.mxu0 0
      %756 = vmatpush1.bf16.msra.mxu0 0
      %757 = vmatprep.subr.bf16.mxu0 0
      %758 = vmatpush1.bf16.msra.mxu0 0
      %759 = vmatprep.subr.bf16.mxu0 0
      %760 = vmatpush1.bf16.msra.mxu0 %v743
      %761 = vmatprep.subr.bf16.mxu0 0
      %762 = vmatpush2.bf16.msra.mxu0 0
      %763 = vmatprep.subr.bf16.mxu0 0
      %764 = vmatpush2.bf16.msra.mxu0 0
      %765 = vmatprep.subr.bf16.mxu0 0
      %766 = vmatpush2.bf16.msra.mxu0 0
      %767 = vmatprep.subr.bf16.mxu0 0
      %768 = vmatpush2.bf16.msra.mxu0 0
      %769 = vmatprep.subr.bf16.mxu0 0
      %770 = vmatpush2.bf16.msra.mxu0 0
      %771 = vmatprep.subr.bf16.mxu0 0
      %772 = vmatpush2.bf16.msra.mxu0 0
      %773 = vmatprep.subr.bf16.mxu0 0
      %774 = vmatpush2.bf16.msra.mxu0 0
      %775 = vmatprep.subr.bf16.mxu0 0
      %776 = vmatpush2.bf16.msra.mxu0 0
      %777 = vmatprep.mubr.bf16.mxu0 0
      %778 = vmatmul.mubr.bf16.gmra.mxu0 %v740
      %v779 = vpop.f32.mrf.mxu0
      %v780 = vadd.f32 0.0, %v779
      %v781 = vpop.f32.mrf.mxu0
      %v782 = vpop.f32.mrf.mxu0
      %v783 = vpop.f32.mrf.mxu0
      %784 = vdwg.mxu0
      %v786 = vsel %vm258, %v733, 0
      %v789 = vsel %vm262, %v732, 0
      %791 = vmatprep.subr.bf16.mxu0 0
      %792 = vmatpush1.bf16.msra.mxu0 0
      %793 = vmatprep.subr.bf16.mxu0 0
      %794 = vmatpush1.bf16.msra.mxu0 0
      %795 = vmatprep.subr.bf16.mxu0 0
      %796 = vmatpush1.bf16.msra.mxu0 0
      %797 = vmatprep.subr.bf16.mxu0 0
      %798 = vmatpush1.bf16.msra.mxu0 0
      %799 = vmatprep.subr.bf16.mxu0 0
      %800 = vmatpush1.bf16.msra.mxu0 0
      %801 = vmatprep.subr.bf16.mxu0 0
      %802 = vmatpush1.bf16.msra.mxu0 0
      %803 = vmatprep.subr.bf16.mxu0 0
      %804 = vmatpush1.bf16.msra.mxu0 0
      %805 = vmatprep.subr.bf16.mxu0 0
      %806 = vmatpush1.bf16.msra.mxu0 %v789
      %807 = vmatprep.subr.bf16.mxu0 0
      %808 = vmatpush2.bf16.msra.mxu0 0
      %809 = vmatprep.subr.bf16.mxu0 0
      %810 = vmatpush2.bf16.msra.mxu0 0
      %811 = vmatprep.subr.bf16.mxu0 0
      %812 = vmatpush2.bf16.msra.mxu0 0
      %813 = vmatprep.subr.bf16.mxu0 0
      %814 = vmatpush2.bf16.msra.mxu0 0
      %815 = vmatprep.subr.bf16.mxu0 0
      %816 = vmatpush2.bf16.msra.mxu0 0
      %817 = vmatprep.subr.bf16.mxu0 0
      %818 = vmatpush2.bf16.msra.mxu0 0
      %819 = vmatprep.subr.bf16.mxu0 0
      %820 = vmatpush2.bf16.msra.mxu0 0
      %821 = vmatprep.subr.bf16.mxu0 0
      %822 = vmatpush2.bf16.msra.mxu0 0
      %823 = vmatprep.mubr.bf16.mxu0 0
      %824 = vmatmul.mubr.bf16.gmra.mxu0 %v786
      %v825 = vpop.f32.mrf.mxu0
      %v826 = vadd.f32 %v780, %v825
      %v827 = vpop.f32.mrf.mxu0
      %v828 = vpop.f32.mrf.mxu0
      %v829 = vpop.f32.mrf.mxu0
      %830 = vdwg.mxu0
      %s831 = scalar_lea.vmem %s4, 8
      %v832 = vld [vmem:[%s831] sm:$0xf]
      %833 = vrot.lane.b32.xlu0 %v732, 126
      %v834 = vpop.permute.xlu0 %833
      %v836 = vsel %vm258, %v832, 0
      %v839 = vsel %vm262, %v834, 0
      %841 = vmatprep.subr.bf16.mxu0 0
      %842 = vmatpush1.bf16.msra.mxu0 0
      %843 = vmatprep.subr.bf16.mxu0 0
      %844 = vmatpush1.bf16.msra.mxu0 0
      %845 = vmatprep.subr.bf16.mxu0 0
      %846 = vmatpush1.bf16.msra.mxu0 0
      %847 = vmatprep.subr.bf16.mxu0 0
      %848 = vmatpush1.bf16.msra.mxu0 0
      %849 = vmatprep.subr.bf16.mxu0 0
      %850 = vmatpush1.bf16.msra.mxu0 0
      %851 = vmatprep.subr.bf16.mxu0 0
      %852 = vmatpush1.bf16.msra.mxu0 0
      %853 = vmatprep.subr.bf16.mxu0 0
      %854 = vmatpush1.bf16.msra.mxu0 0
      %855 = vmatprep.subr.bf16.mxu0 0
      %856 = vmatpush1.bf16.msra.mxu0 %v839
      %857 = vmatprep.subr.bf16.mxu0 0
      %858 = vmatpush2.bf16.msra.mxu0 0
      %859 = vmatprep.subr.bf16.mxu0 0
      %860 = vmatpush2.bf16.msra.mxu0 0
      %861 = vmatprep.subr.bf16.mxu0 0
      %862 = vmatpush2.bf16.msra.mxu0 0
      %863 = vmatprep.subr.bf16.mxu0 0
      %864 = vmatpush2.bf16.msra.mxu0 0
      %865 = vmatprep.subr.bf16.mxu0 0
      %866 = vmatpush2.bf16.msra.mxu0 0
      %867 = vmatprep.subr.bf16.mxu0 0
      %868 = vmatpush2.bf16.msra.mxu0 0
      %869 = vmatprep.subr.bf16.mxu0 0
      %870 = vmatpush2.bf16.msra.mxu0 0
      %871 = vmatprep.subr.bf16.mxu0 0
      %872 = vmatpush2.bf16.msra.mxu0 0
      %873 = vmatprep.mubr.bf16.mxu0 0
      %874 = vmatmul.mubr.bf16.gmra.mxu0 %v836
      %v875 = vpop.f32.mrf.mxu0
      %v876 = vadd.f32 0.0, %v875
      %v877 = vpop.f32.mrf.mxu0
      %v878 = vpop.f32.mrf.mxu0
      %v879 = vpop.f32.mrf.mxu0
      %880 = vdwg.mxu0
      %v881 = vadd.f32 %v826, %v876
      %s882 = scalar_lea.vmem %s4, 12
      %v883 = vld [vmem:[%s882] sm:$0xf]
      %884 = vrot.lane.b32.xlu0 %v732, 118
      %v885 = vpop.permute.xlu0 %884
      %v887 = vsel %vm258, %v883, 0
      %v890 = vsel %vm262, %v885, 0
      %892 = vmatprep.subr.bf16.mxu0 0
      %893 = vmatpush1.bf16.msra.mxu0 0
      %894 = vmatprep.subr.bf16.mxu0 0
      %895 = vmatpush1.bf16.msra.mxu0 0
      %896 = vmatprep.subr.bf16.mxu0 0
      %897 = vmatpush1.bf16.msra.mxu0 0
      %898 = vmatprep.subr.bf16.mxu0 0
      %899 = vmatpush1.bf16.msra.mxu0 0
      %900 = vmatprep.subr.bf16.mxu0 0
      %901 = vmatpush1.bf16.msra.mxu0 0
      %902 = vmatprep.subr.bf16.mxu0 0
      %903 = vmatpush1.bf16.msra.mxu0 0
      %904 = vmatprep.subr.bf16.mxu0 0
      %905 = vmatpush1.bf16.msra.mxu0 0
      %906 = vmatprep.subr.bf16.mxu0 0
      %907 = vmatpush1.bf16.msra.mxu0 %v890
      %908 = vmatprep.subr.bf16.mxu0 0
      %909 = vmatpush2.bf16.msra.mxu0 0
      %910 = vmatprep.subr.bf16.mxu0 0
      %911 = vmatpush2.bf16.msra.mxu0 0
      %912 = vmatprep.subr.bf16.mxu0 0
      %913 = vmatpush2.bf16.msra.mxu0 0
      %914 = vmatprep.subr.bf16.mxu0 0
      %915 = vmatpush2.bf16.msra.mxu0 0
      %916 = vmatprep.subr.bf16.mxu0 0
      %917 = vmatpush2.bf16.msra.mxu0 0
      %918 = vmatprep.subr.bf16.mxu0 0
      %919 = vmatpush2.bf16.msra.mxu0 0
      %920 = vmatprep.subr.bf16.mxu0 0
      %921 = vmatpush2.bf16.msra.mxu0 0
      %922 = vmatprep.subr.bf16.mxu0 0
      %923 = vmatpush2.bf16.msra.mxu0 0
      %924 = vmatprep.mubr.bf16.mxu0 0
      %925 = vmatmul.mubr.bf16.gmra.mxu0 %v887
      %v926 = vpop.f32.mrf.mxu0
      %v927 = vadd.f32 0.0, %v926
      %v928 = vpop.f32.mrf.mxu0
      %v929 = vpop.f32.mrf.mxu0
      %v930 = vpop.f32.mrf.mxu0
      %931 = vdwg.mxu0
      %v932 = vadd.f32 %v881, %v927
      %s933 = scalar_lea.vmem %s4, 16
      %v934 = vld [vmem:[%s933] sm:$0xf]
      %935 = vrot.lane.b32.xlu0 %v732, 117
      %v936 = vpop.permute.xlu0 %935
      %v938 = vsel %vm258, %v934, 0
      %v941 = vsel %vm262, %v936, 0
      %943 = vmatprep.subr.bf16.mxu0 0
      %944 = vmatpush1.bf16.msra.mxu0 0
      %945 = vmatprep.subr.bf16.mxu0 0
      %946 = vmatpush1.bf16.msra.mxu0 0
      %947 = vmatprep.subr.bf16.mxu0 0
      %948 = vmatpush1.bf16.msra.mxu0 0
      %949 = vmatprep.subr.bf16.mxu0 0
      %950 = vmatpush1.bf16.msra.mxu0 0
      %951 = vmatprep.subr.bf16.mxu0 0
      %952 = vmatpush1.bf16.msra.mxu0 0
      %953 = vmatprep.subr.bf16.mxu0 0
      %954 = vmatpush1.bf16.msra.mxu0 0
      %955 = vmatprep.subr.bf16.mxu0 0
      %956 = vmatpush1.bf16.msra.mxu0 0
      %957 = vmatprep.subr.bf16.mxu0 0
      %958 = vmatpush1.bf16.msra.mxu0 %v941
      %959 = vmatprep.subr.bf16.mxu0 0
      %960 = vmatpush2.bf16.msra.mxu0 0
      %961 = vmatprep.subr.bf16.mxu0 0
      %962 = vmatpush2.bf16.msra.mxu0 0
      %963 = vmatprep.subr.bf16.mxu0 0
      %964 = vmatpush2.bf16.msra.mxu0 0
      %965 = vmatprep.subr.bf16.mxu0 0
      %966 = vmatpush2.bf16.msra.mxu0 0
      %967 = vmatprep.subr.bf16.mxu0 0
      %968 = vmatpush2.bf16.msra.mxu0 0
      %969 = vmatprep.subr.bf16.mxu0 0
      %970 = vmatpush2.bf16.msra.mxu0 0
      %971 = vmatprep.subr.bf16.mxu0 0
      %972 = vmatpush2.bf16.msra.mxu0 0
      %973 = vmatprep.subr.bf16.mxu0 0
      %974 = vmatpush2.bf16.msra.mxu0 0
      %975 = vmatprep.mubr.bf16.mxu0 0
      %976 = vmatmul.mubr.bf16.gmra.mxu0 %v938
      %v977 = vpop.f32.mrf.mxu0
      %v978 = vadd.f32 0.0, %v977
      %v979 = vpop.f32.mrf.mxu0
      %v980 = vpop.f32.mrf.mxu0
      %v981 = vpop.f32.mrf.mxu0
      %982 = vdwg.mxu0
      %v983 = vadd.f32 %v932, %v978
      %s984 = scalar_lea.vmem %s4, 20
      %v985 = vld [vmem:[%s984] sm:$0xf]
      %986 = vrot.lane.b32.xlu0 %v732, 116
      %v987 = vpop.permute.xlu0 %986
      %v989 = vsel %vm258, %v985, 0
      %v992 = vsel %vm262, %v987, 0
      %994 = vmatprep.subr.bf16.mxu0 0
      %995 = vmatpush1.bf16.msra.mxu0 0
      %996 = vmatprep.subr.bf16.mxu0 0
      %997 = vmatpush1.bf16.msra.mxu0 0
      %998 = vmatprep.subr.bf16.mxu0 0
      %999 = vmatpush1.bf16.msra.mxu0 0
      %1000 = vmatprep.subr.bf16.mxu0 0
      %1001 = vmatpush1.bf16.msra.mxu0 0
      %1002 = vmatprep.subr.bf16.mxu0 0
      %1003 = vmatpush1.bf16.msra.mxu0 0
      %1004 = vmatprep.subr.bf16.mxu0 0
      %1005 = vmatpush1.bf16.msra.mxu0 0
      %1006 = vmatprep.subr.bf16.mxu0 0
      %1007 = vmatpush1.bf16.msra.mxu0 0
      %1008 = vmatprep.subr.bf16.mxu0 0
      %1009 = vmatpush1.bf16.msra.mxu0 %v992
      %1010 = vmatprep.subr.bf16.mxu0 0
      %1011 = vmatpush2.bf16.msra.mxu0 0
      %1012 = vmatprep.subr.bf16.mxu0 0
      %1013 = vmatpush2.bf16.msra.mxu0 0
      %1014 = vmatprep.subr.bf16.mxu0 0
      %1015 = vmatpush2.bf16.msra.mxu0 0
      %1016 = vmatprep.subr.bf16.mxu0 0
      %1017 = vmatpush2.bf16.msra.mxu0 0
      %1018 = vmatprep.subr.bf16.mxu0 0
      %1019 = vmatpush2.bf16.msra.mxu0 0
      %1020 = vmatprep.subr.bf16.mxu0 0
      %1021 = vmatpush2.bf16.msra.mxu0 0
      %1022 = vmatprep.subr.bf16.mxu0 0
      %1023 = vmatpush2.bf16.msra.mxu0 0
      %1024 = vmatprep.subr.bf16.mxu0 0
      %1025 = vmatpush2.bf16.msra.mxu0 0
      %1026 = vmatprep.mubr.bf16.mxu0 0
      %1027 = vmatmul.mubr.bf16.gmra.mxu0 %v989
      %v1028 = vpop.f32.mrf.mxu0
      %v1029 = vadd.f32 0.0, %v1028
      %v1030 = vpop.f32.mrf.mxu0
      %v1031 = vpop.f32.mrf.mxu0
      %v1032 = vpop.f32.mrf.mxu0
      %1033 = vdwg.mxu0
      %v1034 = vadd.f32 %v983, %v1029
      %s1035 = scalar_lea.vmem %s4, 24
      %v1036 = vld [vmem:[%s1035] sm:$0xf]
      %1037 = vrot.lane.b32.xlu0 %v732, 108
      %v1038 = vpop.permute.xlu0 %1037
      %v1040 = vsel %vm258, %v1036, 0
      %v1043 = vsel %vm262, %v1038, 0
      %1045 = vmatprep.subr.bf16.mxu0 0
      %1046 = vmatpush1.bf16.msra.mxu0 0
      %1047 = vmatprep.subr.bf16.mxu0 0
      %1048 = vmatpush1.bf16.msra.mxu0 0
      %1049 = vmatprep.subr.bf16.mxu0 0
      %1050 = vmatpush1.bf16.msra.mxu0 0
      %1051 = vmatprep.subr.bf16.mxu0 0
      %1052 = vmatpush1.bf16.msra.mxu0 0
      %1053 = vmatprep.subr.bf16.mxu0 0
      %1054 = vmatpush1.bf16.msra.mxu0 0
      %1055 = vmatprep.subr.bf16.mxu0 0
      %1056 = vmatpush1.bf16.msra.mxu0 0
      %1057 = vmatprep.subr.bf16.mxu0 0
      %1058 = vmatpush1.bf16.msra.mxu0 0
      %1059 = vmatprep.subr.bf16.mxu0 0
      %1060 = vmatpush1.bf16.msra.mxu0 %v1043
      %1061 = vmatprep.subr.bf16.mxu0 0
      %1062 = vmatpush2.bf16.msra.mxu0 0
      %1063 = vmatprep.subr.bf16.mxu0 0
      %1064 = vmatpush2.bf16.msra.mxu0 0
      %1065 = vmatprep.subr.bf16.mxu0 0
      %1066 = vmatpush2.bf16.msra.mxu0 0
      %1067 = vmatprep.subr.bf16.mxu0 0
      %1068 = vmatpush2.bf16.msra.mxu0 0
      %1069 = vmatprep.subr.bf16.mxu0 0
      %1070 = vmatpush2.bf16.msra.mxu0 0
      %1071 = vmatprep.subr.bf16.mxu0 0
      %1072 = vmatpush2.bf16.msra.mxu0 0
      %1073 = vmatprep.subr.bf16.mxu0 0
      %1074 = vmatpush2.bf16.msra.mxu0 0
      %1075 = vmatprep.subr.bf16.mxu0 0
      %1076 = vmatpush2.bf16.msra.mxu0 0
      %1077 = vmatprep.mubr.bf16.mxu0 0
      %1078 = vmatmul.mubr.bf16.gmra.mxu0 %v1040
      %v1079 = vpop.f32.mrf.mxu0
      %v1080 = vadd.f32 0.0, %v1079
      %v1081 = vpop.f32.mrf.mxu0
      %v1082 = vpop.f32.mrf.mxu0
      %v1083 = vpop.f32.mrf.mxu0
      %1084 = vdwg.mxu0
      %v1085 = vadd.f32 %v1034, %v1080
      %s1086 = scalar_lea.vmem %s4, 28
      %v1087 = vld [vmem:[%s1086] sm:$0xf]
      %1088 = vrot.lane.b32.xlu0 %v732, 107
      %v1089 = vpop.permute.xlu0 %1088
      %v1091 = vsel %vm258, %v1087, 0
      %v1094 = vsel %vm262, %v1089, 0
      %1096 = vmatprep.subr.bf16.mxu0 0
      %1097 = vmatpush1.bf16.msra.mxu0 0
      %1098 = vmatprep.subr.bf16.mxu0 0
      %1099 = vmatpush1.bf16.msra.mxu0 0
      %1100 = vmatprep.subr.bf16.mxu0 0
      %1101 = vmatpush1.bf16.msra.mxu0 0
      %1102 = vmatprep.subr.bf16.mxu0 0
      %1103 = vmatpush1.bf16.msra.mxu0 0
      %1104 = vmatprep.subr.bf16.mxu0 0
      %1105 = vmatpush1.bf16.msra.mxu0 0
      %1106 = vmatprep.subr.bf16.mxu0 0
      %1107 = vmatpush1.bf16.msra.mxu0 0
      %1108 = vmatprep.subr.bf16.mxu0 0
      %1109 = vmatpush1.bf16.msra.mxu0 0
      %1110 = vmatprep.subr.bf16.mxu0 0
      %1111 = vmatpush1.bf16.msra.mxu0 %v1094
      %1112 = vmatprep.subr.bf16.mxu0 0
      %1113 = vmatpush2.bf16.msra.mxu0 0
      %1114 = vmatprep.subr.bf16.mxu0 0
      %1115 = vmatpush2.bf16.msra.mxu0 0
      %1116 = vmatprep.subr.bf16.mxu0 0
      %1117 = vmatpush2.bf16.msra.mxu0 0
      %1118 = vmatprep.subr.bf16.mxu0 0
      %1119 = vmatpush2.bf16.msra.mxu0 0
      %1120 = vmatprep.subr.bf16.mxu0 0
      %1121 = vmatpush2.bf16.msra.mxu0 0
      %1122 = vmatprep.subr.bf16.mxu0 0
      %1123 = vmatpush2.bf16.msra.mxu0 0
      %1124 = vmatprep.subr.bf16.mxu0 0
      %1125 = vmatpush2.bf16.msra.mxu0 0
      %1126 = vmatprep.subr.bf16.mxu0 0
      %1127 = vmatpush2.bf16.msra.mxu0 0
      %1128 = vmatprep.mubr.bf16.mxu0 0
      %1129 = vmatmul.mubr.bf16.gmra.mxu0 %v1091
      %v1130 = vpop.f32.mrf.mxu0
      %v1131 = vadd.f32 0.0, %v1130
      %v1132 = vpop.f32.mrf.mxu0
      %v1133 = vpop.f32.mrf.mxu0
      %v1134 = vpop.f32.mrf.mxu0
      %1135 = vdwg.mxu0
      %v1136 = vadd.f32 %v1085, %v1131
      %s1137 = scalar_lea.vmem %s4, 32
      %v1138 = vld [vmem:[%s1137] sm:$0xf]
      %1139 = vrot.lane.b32.xlu0 %v732, 106
      %v1140 = vpop.permute.xlu0 %1139
      %v1142 = vsel %vm258, %v1138, 0
      %v1145 = vsel %vm262, %v1140, 0
      %1147 = vmatprep.subr.bf16.mxu0 0
      %1148 = vmatpush1.bf16.msra.mxu0 0
      %1149 = vmatprep.subr.bf16.mxu0 0
      %1150 = vmatpush1.bf16.msra.mxu0 0
      %1151 = vmatprep.subr.bf16.mxu0 0
      %1152 = vmatpush1.bf16.msra.mxu0 0
      %1153 = vmatprep.subr.bf16.mxu0 0
      %1154 = vmatpush1.bf16.msra.mxu0 0
      %1155 = vmatprep.subr.bf16.mxu0 0
      %1156 = vmatpush1.bf16.msra.mxu0 0
      %1157 = vmatprep.subr.bf16.mxu0 0
      %1158 = vmatpush1.bf16.msra.mxu0 0
      %1159 = vmatprep.subr.bf16.mxu0 0
      %1160 = vmatpush1.bf16.msra.mxu0 0
      %1161 = vmatprep.subr.bf16.mxu0 0
      %1162 = vmatpush1.bf16.msra.mxu0 %v1145
      %1163 = vmatprep.subr.bf16.mxu0 0
      %1164 = vmatpush2.bf16.msra.mxu0 0
      %1165 = vmatprep.subr.bf16.mxu0 0
      %1166 = vmatpush2.bf16.msra.mxu0 0
      %1167 = vmatprep.subr.bf16.mxu0 0
      %1168 = vmatpush2.bf16.msra.mxu0 0
      %1169 = vmatprep.subr.bf16.mxu0 0
      %1170 = vmatpush2.bf16.msra.mxu0 0
      %1171 = vmatprep.subr.bf16.mxu0 0
      %1172 = vmatpush2.bf16.msra.mxu0 0
      %1173 = vmatprep.subr.bf16.mxu0 0
      %1174 = vmatpush2.bf16.msra.mxu0 0
      %1175 = vmatprep.subr.bf16.mxu0 0
      %1176 = vmatpush2.bf16.msra.mxu0 0
      %1177 = vmatprep.subr.bf16.mxu0 0
      %1178 = vmatpush2.bf16.msra.mxu0 0
      %1179 = vmatprep.mubr.bf16.mxu0 0
      %1180 = vmatmul.mubr.bf16.gmra.mxu0 %v1142
      %v1181 = vpop.f32.mrf.mxu0
      %v1182 = vadd.f32 0.0, %v1181
      %v1183 = vpop.f32.mrf.mxu0
      %v1184 = vpop.f32.mrf.mxu0
      %v1185 = vpop.f32.mrf.mxu0
      %1186 = vdwg.mxu0
      %v1187 = vadd.f32 %v1136, %v1182
      %v1188 = vld [vmem:[%s5] sm:$0xff]
      %1190 = vset.pattern.permute.xlu0 0
      %1191 = vperm.xlu0 %1190, %v1188
      %v1192 = vpop.permute.xlu0 %1191
      %v1194 = vadd.f32 %v1187, %v1192
      %1196 = vrot.lane.b32.xlu0 %v248, 117
      %v1197 = vpop.permute.xlu0 %1196
      %v1199 = vadd.f32 %v1194, %v1197
      %v1200 = vmul.f32 %v1199, %v720
      %1202 = vrot.lane.b32.xlu0 %v1200, 11
      %v1203 = vpop.permute.xlu0 %1202
      %v1205 = vsel %vm727, 0.0, %v1203
      %v1206 = vsel %vm729, %v1205, 0.0
      %vm1207 = vcmask 900096
      %1208 = vst.msk [vmem:[%s246] sm:$0xff] %vm1207, %v1206
      %p1209 = scmp.lt.s32.totalorder %s17, 1
      %s1210 = scalar_select %p1209, %s17, 1
      %s1211 = smul.addr %s1210, 8
      %s1212 = scalar_lea.vmem %s6, %s1211
      // Predicated region
      $region45: #{conv_sequence_forward.4} parent=43 // pred_check
        %p1213 = pneg %p166
      $region46: #{conv_sequence_forward.4} parent=43 // pred_check_branch
        %1215 = sbr.rel (%p1213) target = $region48
      $region47: #{conv_sequence_forward.4} parent=43 // pred_region
        _
      $region48: #{conv_sequence_forward.4} parent=43 // pred_fallthru
        _
    $region44: #{conv_sequence_forward.4} parent=5 // pred_fallthru
      _
    %p1216 = scmp.le.s32.totalorder 2, %s12
    // Predicated region
    $region49: #{conv_sequence_forward.4} parent=5 // pred_check
      %p1217 = pneg %p1216
    $region50: #{conv_sequence_forward.4} parent=5 // pred_check_branch
      %1219 = sbr.rel (%p1217) target = $region52
    $region51: #{conv_sequence_forward.4} parent=5 // pred_region
      %s1220 = ssub.s32 %s12, 2
      // Predicated region
      $region53: #{conv_sequence_forward.4} parent=51 // pred_check
        %p1221 = pneg %p172
      $region54: #{conv_sequence_forward.4} parent=51 // pred_check_branch
        %1223 = sbr.rel (%p1221) target = $region56
      $region55: #{conv_sequence_forward.4} parent=51 // pred_region
        %p1224 = scmp.lt.s32.totalorder %s18, 1
        %s1225 = scalar_select %p1224, %s18, 1
        %s1226 = smul.addr %s1225, 8
        %s1227 = scalar_lea.vmem %s6, %s1226
      $region56: #{conv_sequence_forward.4} parent=51 // pred_fallthru
        _
    $region52: #{conv_sequence_forward.4} parent=5 // pred_fallthru
      _
  $region6: #{conv_sequence_forward.4} parent=0 // loop_footer
    %s16 = sadd.s32 1, %s12
  $region7: #{conv_sequence_forward.4} parent=0 // loop_footer_branch
    %11 = sbr.rel target = $region3
  $region8: #{conv_sequence_forward.4} parent=0 // loop_exit
    _

</llo_original>
